<compile_context>
chip_gen: v7x
topology: tpu7x:2x2x1
jax: 0.10.0
libtpu: 0.0.40
codegen_flags: <defaults>
</compile_context>

<pallas_src>
import numpy as np

import jax
import jax.numpy as jnp
from jax.experimental import pallas as pl
from jax.experimental.pallas import tpu as pltpu


def _make_conv3x3_relu_kernel(H, W, Cin, pad_l, pad_r):
    HW = H * W

    def kernel(x_ref, w_ref, b_ref, ml_ref, mr_ref, o_ref, xpad_ref, p_ref):
        # x_ref    : (1, Cin, H*W)            f32   flat NCHW input (one image)
        # w_ref    : (Cout, 9*Cin)            bf16  matmul-ready weights, K=(kh,kw,ci)
        # b_ref    : (Cout, 1)                f32   bias
        # ml_ref   : (1, H*W)                 f32   1.0 where w > 0   (left border)
        # mr_ref   : (1, H*W)                 f32   1.0 where w < W-1 (right border)
        # o_ref    : (1, Cout, H*W)           f32   flat NCHW output
        # xpad_ref : (Cin, pad_l+HW+pad_r)    bf16  scratch: zero-haloed flat input
        # p_ref    : (9*Cin, H*W)             bf16  scratch: im2col patch slab

        # ---- zero only the two halo strips; center is overwritten below ----
        xpad_ref[:, :pad_l] = jnp.zeros((Cin, pad_l), xpad_ref.dtype)
        xpad_ref[:, pad_l + HW:pad_l + HW + pad_r] = jnp.zeros(
            (Cin, pad_r), xpad_ref.dtype)

        # ---- lane-aligned central copy (pad_l multiple of 128), cast to bf16 ----
        xpad_ref[:, pad_l:pad_l + HW] = x_ref[0].astype(xpad_ref.dtype)

        # ---- width-border masks: compare + broadcast hoisted out of the loop ----
        mask_l = jnp.broadcast_to(ml_ref[...] > 0.5, (Cin, HW))
        mask_r = jnp.broadcast_to(mr_ref[...] > 0.5, (Cin, HW))
        zero = jnp.zeros((), p_ref.dtype)

        # ---- im2col: 9 lane-shifted (+ selected) bf16 copies stacked along K ----
        # tap (kh, kw) reads x[ci, h + kh - 1, w + kw - 1]  ==  flat shift by
        # (kh-1)*W + (kw-1); height border comes from the zero halo, width-border
        # wrap is killed by the boolean selects.
        for kh in range(3):
            for kw in range(3):
                shift = (kh - 1) * W + (kw - 1)
                start = pad_l + shift
                part = xpad_ref[:, start:start + HW]          # (Cin, HW) bf16
                if kw == 0:
                    part = jnp.where(mask_l, part, zero)
                elif kw == 2:
                    part = jnp.where(mask_r, part, zero)
                t = kh * 3 + kw
                p_ref[t * Cin:(t + 1) * Cin, :] = part

        # ---- one K=144 MXU matmul (bf16 x bf16 -> f32), fused bias + ReLU ----
        acc = jnp.dot(w_ref[...], p_ref[...],
                      preferred_element_type=jnp.float32)     # (Cout, HW)
        acc = jnp.maximum(acc + b_ref[...], 0.0)
        o_ref[0] = acc.astype(o_ref.dtype)

    return kernel


@jax.jit
def conv2d_relu(x_nchw, w_oihw, bias):
    """Conv2d(Cin->Cout, 3x3, stride 1, pad 1) + ReLU.  NCHW in / NCHW out."""
    N, Cin, H, W = x_nchw.shape
    Cout = w_oihw.shape[0]
    HW = H * W

    pad_l = 128                           # lane-tile aligned central copy
    pad_r = 128                           # must stay >= W + 1 (max tap overrun)
    assert pad_l >= W + 1 and pad_r >= W + 1

    # ---- free reshapes / tiny parameter prep (no full-tensor layout passes) ----
    x_flat = x_nchw.reshape(N, Cin, HW)                       # metadata-only
    # (Cout, Cin, 3, 3) -> (Cout, kh, kw, Cin) -> (Cout, 144), K = (kh*3+kw)*Cin + ci
    w2 = jnp.transpose(w_oihw, (0, 2, 3, 1)).reshape(Cout, 9 * Cin)
    w2 = w2.astype(jnp.bfloat16)
    b2 = bias.reshape(Cout, 1).astype(jnp.float32)

    # width-border masks (constants, ~12 KB each)
    w_pos = np.arange(HW) % W
    mask_l = jnp.asarray((w_pos > 0).astype(np.float32)).reshape(1, HW)
    mask_r = jnp.asarray((w_pos < W - 1).astype(np.float32)).reshape(1, HW)

    kernel = _make_conv3x3_relu_kernel(H, W, Cin, pad_l, pad_r)

    flops = 2 * N * Cout * HW * (9 * Cin)
    bytes_accessed = (x_flat.size * 4 + w2.size * 2 + b2.size * 4
                      + 2 * HW * 4 + N * Cout * HW * 4)

    out_flat = pl.pallas_call(
        kernel,
        out_shape=jax.ShapeDtypeStruct((N, Cout, HW), x_nchw.dtype),
        grid_spec=pltpu.PrefetchScalarGridSpec(
            num_scalar_prefetch=0,
            grid=(N,),
            in_specs=[
                pl.BlockSpec((1, Cin, HW), lambda n: (n, 0, 0)),
                pl.BlockSpec((Cout, 9 * Cin), lambda n: (0, 0)),
                pl.BlockSpec((Cout, 1), lambda n: (0, 0)),
                pl.BlockSpec((1, HW), lambda n: (0, 0)),
                pl.BlockSpec((1, HW), lambda n: (0, 0)),
            ],
            out_specs=pl.BlockSpec((1, Cout, HW), lambda n: (n, 0, 0)),
            scratch_shapes=[
                pltpu.VMEM((Cin, pad_l + HW + pad_r), jnp.bfloat16),  # haloed input
                pltpu.VMEM((9 * Cin, HW), jnp.bfloat16),              # im2col slab
            ],
        ),
        compiler_params=pltpu.CompilerParams(
            dimension_semantics=("parallel",)),
        cost_estimate=pl.CostEstimate(
            flops=flops, transcendentals=0, bytes_accessed=bytes_accessed),
    )(x_flat, w2, b2, mask_l, mask_r)

    return out_flat.reshape(N, Cout, H, W)                    # metadata-only


if __name__ == "__main__":
    key = jax.random.PRNGKey(0)
    kx, kw_, kb = jax.random.split(key, 3)

    # Shapes implied by the module: Conv2d(16 -> 64, 3x3, pad 1), input (1,16,54,54).
    N, Cin, H, W, Cout = 1, 16, 54, 54, 64

    x = jax.random.normal(kx, (N, Cin, H, W), dtype=jnp.float32)

    # Deterministic parameter init (PyTorch-like uniform with fan_in = Cin*3*3).
    fan_in = Cin * 3 * 3
    bound = 1.0 / jnp.sqrt(jnp.float32(fan_in))
    w = jax.random.uniform(kw_, (Cout, Cin, 3, 3), jnp.float32, -bound, bound)
    b = jax.random.uniform(kb, (Cout,), jnp.float32, -bound, bound)

    out = conv2d_relu(x, w, b)
    out = jax.block_until_ready(out)

    # Reference check against XLA's conv (NCHW, OIHW) + ReLU.
    ref = jax.lax.conv_general_dilated(
        x, w, window_strides=(1, 1), padding=((1, 1), (1, 1)),
        dimension_numbers=("NCHW", "OIHW", "NCHW"))
    ref = jnp.maximum(ref + b.reshape(1, Cout, 1, 1), 0.0)
    assert out.shape == (N, Cout, H, W)
    # bf16 matmul operands (f32 accumulate) -> loosened tolerance vs f32 reference.
    assert jnp.allclose(out, ref, atol=5e-2, rtol=5e-2)

    print("KERNEL_OK")
</pallas_src>

<mosaic_0001>
module attributes {stable_mosaic.version = 11 : i64} {
  func.func @kernel(%arg0: i32, %arg1: memref<1x16x2916xf32, #tpu.memory_space<vmem>>, %arg2: memref<64x144xbf16, #tpu.memory_space<vmem>>, %arg3: memref<64x1xf32, #tpu.memory_space<vmem>>, %arg4: memref<1x2916xf32, #tpu.memory_space<vmem>>, %arg5: memref<1x2916xf32, #tpu.memory_space<vmem>>, %arg6: memref<1x64x2916xf32, #tpu.memory_space<vmem>>, %arg7: memref<16x3172xbf16, #tpu.memory_space<vmem>>, %arg8: memref<144x2916xbf16, #tpu.memory_space<vmem>>) attributes {dimension_semantics = [#tpu.dimension_semantics<parallel>], iteration_bounds = array<i64: 1>, scalar_prefetch = 0 : i64, scratch_operands = 2 : i64, tpu.core_type = #tpu.core_type<tc>, window_params = [{transform_indices = @transform_0, window_bounds = array<i64: 1, 16, 2916>}, {pipeline_mode = #tpu.pipeline_mode<synchronous>, transform_indices = @transform_1, window_bounds = array<i64: 64, 144>}, {pipeline_mode = #tpu.pipeline_mode<synchronous>, transform_indices = @transform_2, window_bounds = array<i64: 64, 1>}, {pipeline_mode = #tpu.pipeline_mode<synchronous>, transform_indices = @transform_3, window_bounds = array<i64: 1, 2916>}, {pipeline_mode = #tpu.pipeline_mode<synchronous>, transform_indices = @transform_4, window_bounds = array<i64: 1, 2916>}, {transform_indices = @transform_5, window_bounds = array<i64: 1, 64, 2916>}]} {
    %cst = arith.constant 0.000000e+00 : bf16
    %0 = vector.broadcast %cst : bf16 to vector<16x128xbf16>
    %c0 = arith.constant 0 : index
    %c0_0 = arith.constant 0 : index
    %1 = vector.load %arg7[%c0, %c0_0] : memref<16x3172xbf16, #tpu.memory_space<vmem>>, vector<16x128xbf16>
    tpu.vector_store %arg7[%c0, %c0_0], %0 {strides = array<i32>} : memref<16x3172xbf16, #tpu.memory_space<vmem>>, vector<16x128xbf16>,
    %cst_1 = arith.constant 0.000000e+00 : bf16
    %2 = vector.broadcast %cst_1 : bf16 to vector<16x128xbf16>
    %c0_2 = arith.constant 0 : index
    %c3044 = arith.constant 3044 : index
    %3 = vector.load %arg7[%c0_2, %c3044] : memref<16x3172xbf16, #tpu.memory_space<vmem>>, vector<16x128xbf16>
    tpu.vector_store %arg7[%c0_2, %c3044], %2 {strides = array<i32>} : memref<16x3172xbf16, #tpu.memory_space<vmem>>, vector<16x128xbf16>,
    %c0_3 = arith.constant 0 : index
    %c0_4 = arith.constant 0 : index
    %c0_5 = arith.constant 0 : index
    %4 = vector.load %arg1[%c0_3, %c0_4, %c0_5] : memref<1x16x2916xf32, #tpu.memory_space<vmem>>, vector<1x16x2916xf32>
    %5 = vector.shape_cast %4 : vector<1x16x2916xf32> to vector<16x2916xf32>
    %6 = arith.truncf %5 : vector<16x2916xf32> to vector<16x2916xbf16>
    %c0_6 = arith.constant 0 : index
    %c128 = arith.constant 128 : index
    %7 = vector.load %arg7[%c0_6, %c128] : memref<16x3172xbf16, #tpu.memory_space<vmem>>, vector<16x2916xbf16>
    tpu.vector_store %arg7[%c0_6, %c128], %6 {strides = array<i32>} : memref<16x3172xbf16, #tpu.memory_space<vmem>>, vector<16x2916xbf16>,
    %c0_7 = arith.constant 0 : index
    %c0_8 = arith.constant 0 : index
    %8 = vector.load %arg4[%c0_7, %c0_8] : memref<1x2916xf32, #tpu.memory_space<vmem>>, vector<1x2916xf32>
    %cst_9 = arith.constant 5.000000e-01 : f32
    %9 = vector.broadcast %cst_9 : f32 to vector<1x2916xf32>
    %10 = arith.cmpf ogt, %8, %9 : vector<1x2916xf32>
    %11 = vector.shape_cast %10 : vector<1x2916xi1> to vector<1x2916xi1>
    %12 = vector.broadcast %11 : vector<1x2916xi1> to vector<16x2916xi1>
    %c0_10 = arith.constant 0 : index
    %c0_11 = arith.constant 0 : index
    %13 = vector.load %arg5[%c0_10, %c0_11] : memref<1x2916xf32, #tpu.memory_space<vmem>>, vector<1x2916xf32>
    %cst_12 = arith.constant 5.000000e-01 : f32
    %14 = vector.broadcast %cst_12 : f32 to vector<1x2916xf32>
    %15 = arith.cmpf ogt, %13, %14 : vector<1x2916xf32>
    %16 = vector.shape_cast %15 : vector<1x2916xi1> to vector<1x2916xi1>
    %17 = vector.broadcast %16 : vector<1x2916xi1> to vector<16x2916xi1>
    %c0_13 = arith.constant 0 : index
    %c73 = arith.constant 73 : index
    %18 = vector.load %arg7[%c0_13, %c73] : memref<16x3172xbf16, #tpu.memory_space<vmem>>, vector<16x2916xbf16>
    %cst_14 = arith.constant 0.000000e+00 : bf16
    %19 = vector.broadcast %cst_14 : bf16 to vector<16x2916xbf16>
    %20 = arith.select %12, %18, %19 : vector<16x2916xi1>, vector<16x2916xbf16>
    %c0_15 = arith.constant 0 : index
    %c0_16 = arith.constant 0 : index
    %21 = vector.load %arg8[%c0_15, %c0_16] : memref<144x2916xbf16, #tpu.memory_space<vmem>>, vector<16x2916xbf16>
    tpu.vector_store %arg8[%c0_15, %c0_16], %20 {strides = array<i32>} : memref<144x2916xbf16, #tpu.memory_space<vmem>>, vector<16x2916xbf16>,
    %c0_17 = arith.constant 0 : index
    %c74 = arith.constant 74 : index
    %22 = vector.load %arg7[%c0_17, %c74] : memref<16x3172xbf16, #tpu.memory_space<vmem>>, vector<16x2916xbf16>
    %c16 = arith.constant 16 : index
    %c0_18 = arith.constant 0 : index
    %23 = vector.load %arg8[%c16, %c0_18] : memref<144x2916xbf16, #tpu.memory_space<vmem>>, vector<16x2916xbf16>
    tpu.vector_store %arg8[%c16, %c0_18], %22 {strides = array<i32>} : memref<144x2916xbf16, #tpu.memory_space<vmem>>, vector<16x2916xbf16>,
    %c0_19 = arith.constant 0 : index
    %c75 = arith.constant 75 : index
    %24 = vector.load %arg7[%c0_19, %c75] : memref<16x3172xbf16, #tpu.memory_space<vmem>>, vector<16x2916xbf16>
    %cst_20 = arith.constant 0.000000e+00 : bf16
    %25 = vector.broadcast %cst_20 : bf16 to vector<16x2916xbf16>
    %26 = arith.select %17, %24, %25 : vector<16x2916xi1>, vector<16x2916xbf16>
    %c32 = arith.constant 32 : index
    %c0_21 = arith.constant 0 : index
    %27 = vector.load %arg8[%c32, %c0_21] : memref<144x2916xbf16, #tpu.memory_space<vmem>>, vector<16x2916xbf16>
    tpu.vector_store %arg8[%c32, %c0_21], %26 {strides = array<i32>} : memref<144x2916xbf16, #tpu.memory_space<vmem>>, vector<16x2916xbf16>,
    %c0_22 = arith.constant 0 : index
    %c127 = arith.constant 127 : index
    %28 = vector.load %arg7[%c0_22, %c127] : memref<16x3172xbf16, #tpu.memory_space<vmem>>, vector<16x2916xbf16>
    %cst_23 = arith.constant 0.000000e+00 : bf16
    %29 = vector.broadcast %cst_23 : bf16 to vector<16x2916xbf16>
    %30 = arith.select %12, %28, %29 : vector<16x2916xi1>, vector<16x2916xbf16>
    %c48 = arith.constant 48 : index
    %c0_24 = arith.constant 0 : index
    %31 = vector.load %arg8[%c48, %c0_24] : memref<144x2916xbf16, #tpu.memory_space<vmem>>, vector<16x2916xbf16>
    tpu.vector_store %arg8[%c48, %c0_24], %30 {strides = array<i32>} : memref<144x2916xbf16, #tpu.memory_space<vmem>>, vector<16x2916xbf16>,
    %c0_25 = arith.constant 0 : index
    %c128_26 = arith.constant 128 : index
    %32 = vector.load %arg7[%c0_25, %c128_26] : memref<16x3172xbf16, #tpu.memory_space<vmem>>, vector<16x2916xbf16>
    %c64 = arith.constant 64 : index
    %c0_27 = arith.constant 0 : index
    %33 = vector.load %arg8[%c64, %c0_27] : memref<144x2916xbf16, #tpu.memory_space<vmem>>, vector<16x2916xbf16>
    tpu.vector_store %arg8[%c64, %c0_27], %32 {strides = array<i32>} : memref<144x2916xbf16, #tpu.memory_space<vmem>>, vector<16x2916xbf16>,
    %c0_28 = arith.constant 0 : index
    %c129 = arith.constant 129 : index
    %34 = vector.load %arg7[%c0_28, %c129] : memref<16x3172xbf16, #tpu.memory_space<vmem>>, vector<16x2916xbf16>
    %cst_29 = arith.constant 0.000000e+00 : bf16
    %35 = vector.broadcast %cst_29 : bf16 to vector<16x2916xbf16>
    %36 = arith.select %17, %34, %35 : vector<16x2916xi1>, vector<16x2916xbf16>
    %c80 = arith.constant 80 : index
    %c0_30 = arith.constant 0 : index
    %37 = vector.load %arg8[%c80, %c0_30] : memref<144x2916xbf16, #tpu.memory_space<vmem>>, vector<16x2916xbf16>
    tpu.vector_store %arg8[%c80, %c0_30], %36 {strides = array<i32>} : memref<144x2916xbf16, #tpu.memory_space<vmem>>, vector<16x2916xbf16>,
    %c0_31 = arith.constant 0 : index
    %c181 = arith.constant 181 : index
    %38 = vector.load %arg7[%c0_31, %c181] : memref<16x3172xbf16, #tpu.memory_space<vmem>>, vector<16x2916xbf16>
    %cst_32 = arith.constant 0.000000e+00 : bf16
    %39 = vector.broadcast %cst_32 : bf16 to vector<16x2916xbf16>
    %40 = arith.select %12, %38, %39 : vector<16x2916xi1>, vector<16x2916xbf16>
    %c96 = arith.constant 96 : index
    %c0_33 = arith.constant 0 : index
    %41 = vector.load %arg8[%c96, %c0_33] : memref<144x2916xbf16, #tpu.memory_space<vmem>>, vector<16x2916xbf16>
    tpu.vector_store %arg8[%c96, %c0_33], %40 {strides = array<i32>} : memref<144x2916xbf16, #tpu.memory_space<vmem>>, vector<16x2916xbf16>,
    %c0_34 = arith.constant 0 : index
    %c182 = arith.constant 182 : index
    %42 = vector.load %arg7[%c0_34, %c182] : memref<16x3172xbf16, #tpu.memory_space<vmem>>, vector<16x2916xbf16>
    %c112 = arith.constant 112 : index
    %c0_35 = arith.constant 0 : index
    %43 = vector.load %arg8[%c112, %c0_35] : memref<144x2916xbf16, #tpu.memory_space<vmem>>, vector<16x2916xbf16>
    tpu.vector_store %arg8[%c112, %c0_35], %42 {strides = array<i32>} : memref<144x2916xbf16, #tpu.memory_space<vmem>>, vector<16x2916xbf16>,
    %c0_36 = arith.constant 0 : index
    %c183 = arith.constant 183 : index
    %44 = vector.load %arg7[%c0_36, %c183] : memref<16x3172xbf16, #tpu.memory_space<vmem>>, vector<16x2916xbf16>
    %cst_37 = arith.constant 0.000000e+00 : bf16
    %45 = vector.broadcast %cst_37 : bf16 to vector<16x2916xbf16>
    %46 = arith.select %17, %44, %45 : vector<16x2916xi1>, vector<16x2916xbf16>
    %c128_38 = arith.constant 128 : index
    %c0_39 = arith.constant 0 : index
    %47 = vector.load %arg8[%c128_38, %c0_39] : memref<144x2916xbf16, #tpu.memory_space<vmem>>, vector<16x2916xbf16>
    tpu.vector_store %arg8[%c128_38, %c0_39], %46 {strides = array<i32>} : memref<144x2916xbf16, #tpu.memory_space<vmem>>, vector<16x2916xbf16>,
    %c0_40 = arith.constant 0 : index
    %c0_41 = arith.constant 0 : index
    %48 = vector.load %arg2[%c0_40, %c0_41] : memref<64x144xbf16, #tpu.memory_space<vmem>>, vector<64x144xbf16>
    %c0_42 = arith.constant 0 : index
    %c0_43 = arith.constant 0 : index
    %49 = vector.load %arg8[%c0_42, %c0_43] : memref<144x2916xbf16, #tpu.memory_space<vmem>>, vector<144x2916xbf16>
    %cst_44 = arith.constant dense<0.000000e+00> : vector<64x2916xf32>
    %50 = tpu.matmul %48, %49, %cst_44 {dimension_numbers = #tpu.dot_dimension_numbers<[1], [0], [0], [1], [0, 0, 1, 1], [], []>} : vector<64x144xbf16>, vector<144x2916xbf16>, vector<64x2916xf32> -> vector<64x2916xf32>
    %c0_45 = arith.constant 0 : index
    %c0_46 = arith.constant 0 : index
    %51 = vector.load %arg3[%c0_45, %c0_46] : memref<64x1xf32, #tpu.memory_space<vmem>>, vector<64x1xf32>
    %52 = vector.broadcast %51 : vector<64x1xf32> to vector<64x2916xf32>
    %53 = arith.addf %50, %52 : vector<64x2916xf32>
    %cst_47 = arith.constant 0.000000e+00 : f32
    %54 = vector.broadcast %cst_47 : f32 to vector<64x2916xf32>
    %55 = arith.maximumf %53, %54 : vector<64x2916xf32>
    %c0_48 = arith.constant 0 : index
    %c0_49 = arith.constant 0 : index
    %c0_50 = arith.constant 0 : index
    %56 = vector.load %arg6[%c0_48, %c0_49, %c0_50] : memref<1x64x2916xf32, #tpu.memory_space<vmem>>, vector<1x64x2916xf32>
    %57 = vector.shape_cast %56 : vector<1x64x2916xf32> to vector<64x2916xf32>
    %58 = vector.shape_cast %55 : vector<64x2916xf32> to vector<1x64x2916xf32>
    tpu.vector_store %arg6[%c0_48, %c0_49, %c0_50], %58 {strides = array<i32>} : memref<1x64x2916xf32, #tpu.memory_space<vmem>>, vector<1x64x2916xf32>,
    return
  }
  func.func @transform_0(%arg0: i32) -> (i32, i32, i32) {
    %c0_i32 = arith.constant 0 : i32
    %c0_i32_0 = arith.constant 0 : i32
    %c0_i32_1 = arith.constant 0 : i32
    return %arg0, %c0_i32, %c0_i32_0 : i32, i32, i32
  }
  func.func @transform_1(%arg0: i32) -> (i32, i32) {
    %c0_i32 = arith.constant 0 : i32
    %c0_i32_0 = arith.constant 0 : i32
    %c0_i32_1 = arith.constant 0 : i32
    return %c0_i32, %c0_i32_0 : i32, i32
  }
  func.func @transform_2(%arg0: i32) -> (i32, i32) {
    %c0_i32 = arith.constant 0 : i32
    %c0_i32_0 = arith.constant 0 : i32
    %c0_i32_1 = arith.constant 0 : i32
    return %c0_i32, %c0_i32_0 : i32, i32
  }
  func.func @transform_3(%arg0: i32) -> (i32, i32) {
    %c0_i32 = arith.constant 0 : i32
    %c0_i32_0 = arith.constant 0 : i32
    %c0_i32_1 = arith.constant 0 : i32
    return %c0_i32, %c0_i32_0 : i32, i32
  }
  func.func @transform_4(%arg0: i32) -> (i32, i32) {
    %c0_i32 = arith.constant 0 : i32
    %c0_i32_0 = arith.constant 0 : i32
    %c0_i32_1 = arith.constant 0 : i32
    return %c0_i32, %c0_i32_0 : i32, i32
  }
  func.func @transform_5(%arg0: i32) -> (i32, i32, i32) {
    %c0_i32 = arith.constant 0 : i32
    %c0_i32_0 = arith.constant 0 : i32
    %c0_i32_1 = arith.constant 0 : i32
    return %arg0, %c0_i32, %c0_i32_0 : i32, i32, i32
  }
}

</mosaic_0001>

<llo_original>
// kernel: conv2d_relu.1
$region0: #{conv2d_relu.1}
  #allocation0 [shape = 'u32[]', space=smem, size = 0x4, offset = 0x4, fixed_abs, tag = 'smem constant byte address 0x4 - core index']
  #allocation1 [shape = 'u32[144,128]{1,0:T(1,128)}', space=vmem, size = 0x12000, scoped, tag = 'internal scratch']
  #allocation2 [shape = 'bf16[16,3172]{1,0:T(16,128)(2,1)}', space=vmem, size = 0x19000, scoped, tag = 'scratch operand']
  #allocation3 [shape = 'bf16[144,2916]{1,0:T(16,128)(2,1)}', space=vmem, size = 0xcf000, scoped, tag = 'scratch operand']
  %s0 = inlined_call_operand.vmem [shape: f32[1,16,2916], index: 0, kind: input, shape index: {}]
  %s1 = inlined_call_operand.vmem [shape: bf16[64,144], index: 1, kind: input, shape index: {}]
  %s2 = inlined_call_operand.vmem [shape: f32[64,1], index: 2, kind: input, shape index: {}]
  %s3 = inlined_call_operand.hbm [shape: f32[1,2916], index: 3, kind: input, shape index: {}]
  %s4 = inlined_call_operand.hbm [shape: f32[1,2916], index: 4, kind: input, shape index: {}]
  %s5 = inlined_call_operand.vmem [shape: f32[1,64,2916], index: 5, kind: output, shape index: {}]
  %s6 = sld [smem:[#allocation0]]
  $region38: #{conv2d_relu.1} parent=0
    _
  %s8 = ssub.s32 1, %s6
  %s9 = scalar_select 0, %s8, %s6
  $region1: #{conv2d_relu.1} parent=0
    #allocation4 [shape = 'u8[11776]{0}', space=vmem, size = 0x3000, scoped, tag = 'input window, operand 3, single buffered']
    #allocation5 [shape = 's32[1]{0}', space=sflag, size = 0x4, scoped, tag = 'scoped memory for conv2d_relu.1']
    #allocation6 [shape = 'u8[11776]{0}', space=vmem, size = 0x3000, scoped, tag = 'input window, operand 4, single buffered']
    #allocation7 [shape = 's32[1]{0}', space=sflag, size = 0x4, scoped, tag = 'scoped memory for conv2d_relu.1']
    %10 = vsyncpa [#allocation5], 0
    %11 = vsyncpa [#allocation7], 0
    // Predicated region
    $region2: #{conv2d_relu.1} parent=1 // pred_check
      _
    $region3: #{conv2d_relu.1} parent=1 // pred_check_branch
      %13 = sbr.rel (0) target = $region5
    $region4: #{conv2d_relu.1} parent=1 // pred_region
      _
    $region5: #{conv2d_relu.1} parent=1 // pred_fallthru
      _
    // Predicated region
    $region6: #{conv2d_relu.1} parent=1 // pred_check
      _
    $region7: #{conv2d_relu.1} parent=1 // pred_check_branch
      %15 = sbr.rel (0) target = $region9
    $region8: #{conv2d_relu.1} parent=1 // pred_region
      _
    $region9: #{conv2d_relu.1} parent=1 // pred_fallthru
      _
    // Predicated region
    $region10: #{conv2d_relu.1} parent=1 // pred_check
      _
    $region11: #{conv2d_relu.1} parent=1 // pred_check_branch
      %17 = sbr.rel (0) target = $region13
    $region12: #{conv2d_relu.1} parent=1 // pred_region
      _
    $region13: #{conv2d_relu.1} parent=1 // pred_fallthru
      _
    // Predicated region
    $region14: #{conv2d_relu.1} parent=1 // pred_check
      _
    $region15: #{conv2d_relu.1} parent=1 // pred_check_branch
      %19 = sbr.rel (0) target = $region17
    $region16: #{conv2d_relu.1} parent=1 // pred_region
      %s21 = ssub.s32 368, 368
      %22 = vsyncadd [#allocation5], %s21
      %s24 = sshll.u32 [#allocation4], 4
      %s25 = int_to_ptr.vmem [resolvable:$true] %s24
      %27 = dma.hbm_to_vmem [thread:$0]  %s3, 368, %s25, [#allocation5]
    $region17: #{conv2d_relu.1} parent=1 // pred_fallthru
      _
    // Predicated region
    $region18: #{conv2d_relu.1} parent=1 // pred_check
      _
    $region19: #{conv2d_relu.1} parent=1 // pred_check_branch
      %29 = sbr.rel (0) target = $region21
    $region20: #{conv2d_relu.1} parent=1 // pred_region
      %s31 = ssub.s32 368, 368
      %32 = vsyncadd [#allocation7], %s31
      %s34 = sshll.u32 [#allocation6], 4
      %s35 = int_to_ptr.vmem [resolvable:$true] %s34
      %37 = dma.hbm_to_vmem [thread:$0]  %s4, 368, %s35, [#allocation7]
    $region21: #{conv2d_relu.1} parent=1 // pred_fallthru
      _
    // Predicated region
    $region22: #{conv2d_relu.1} parent=1 // pred_check
      _
    $region23: #{conv2d_relu.1} parent=1 // pred_check_branch
      %39 = sbr.rel (0) target = $region25
    $region24: #{conv2d_relu.1} parent=1 // pred_region
      %40 = dma.done [#allocation5], 368
    $region25: #{conv2d_relu.1} parent=1 // pred_fallthru
      _
    // Predicated region
    $region26: #{conv2d_relu.1} parent=1 // pred_check
      _
    $region27: #{conv2d_relu.1} parent=1 // pred_check_branch
      %42 = sbr.rel (0) target = $region29
    $region28: #{conv2d_relu.1} parent=1 // pred_region
      %43 = dma.done [#allocation7], 368
    $region29: #{conv2d_relu.1} parent=1 // pred_fallthru
      _
    %47 = vst [vmem:[#allocation2] sm:$0xff] 0
    %vm48 = vcmask 1048352
    %49 = vst.msk [vmem:[#allocation2 + $0xb8] sm:$0xff] %vm48, 0
    %vm50 = vcmask 818176
    %51 = vst.msk [vmem:[#allocation2 + $0xc0] sm:$0xff] %vm50, 0
    %v52 = vld [vmem:[%s0] sm:$0xff]
    %v53 = vld [vmem:[%s0 + $0x8] sm:$0xff]
    %v54 = vld [vmem:[%s0 + $0x10] sm:$0xff]
    %v55 = vld [vmem:[%s0 + $0x18] sm:$0xff]
    %v56 = vld [vmem:[%s0 + $0x20] sm:$0xff]
    %v57 = vld [vmem:[%s0 + $0x28] sm:$0xff]
    %v58 = vld [vmem:[%s0 + $0x30] sm:$0xff]
    %v59 = vld [vmem:[%s0 + $0x38] sm:$0xff]
    %v60 = vld [vmem:[%s0 + $0x40] sm:$0xff]
    %v61 = vld [vmem:[%s0 + $0x48] sm:$0xff]
    %v62 = vld [vmem:[%s0 + $0x50] sm:$0xff]
    %v63 = vld [vmem:[%s0 + $0x58] sm:$0xff]
    %v64 = vld [vmem:[%s0 + $0x60] sm:$0xff]
    %v65 = vld [vmem:[%s0 + $0x68] sm:$0xff]
    %v66 = vld [vmem:[%s0 + $0x70] sm:$0xff]
    %v67 = vld [vmem:[%s0 + $0x78] sm:$0xff]
    %v68 = vld [vmem:[%s0 + $0x80] sm:$0xff]
    %v69 = vld [vmem:[%s0 + $0x88] sm:$0xff]
    %v70 = vld [vmem:[%s0 + $0x90] sm:$0xff]
    %v71 = vld [vmem:[%s0 + $0x98] sm:$0xff]
    %v72 = vld [vmem:[%s0 + $0xa0] sm:$0xff]
    %v73 = vld [vmem:[%s0 + $0xa8] sm:$0xff]
    %v74 = vld [vmem:[%s0 + $0xb0] sm:$0xff]
    %v75 = vld [vmem:[%s0 + $0xb8] sm:$0xff]
    %v76 = vld [vmem:[%s0 + $0xc0] sm:$0xff]
    %v77 = vld [vmem:[%s0 + $0xc8] sm:$0xff]
    %v78 = vld [vmem:[%s0 + $0xd0] sm:$0xff]
    %v79 = vld [vmem:[%s0 + $0xd8] sm:$0xff]
    %v80 = vld [vmem:[%s0 + $0xe0] sm:$0xff]
    %v81 = vld [vmem:[%s0 + $0xe8] sm:$0xff]
    %v82 = vld [vmem:[%s0 + $0xf0] sm:$0xff]
    %v83 = vld [vmem:[%s0 + $0xf8] sm:$0xff]
    %v84 = vld [vmem:[%s0 + $0x100] sm:$0xff]
    %v85 = vld [vmem:[%s0 + $0x108] sm:$0xff]
    %v86 = vld [vmem:[%s0 + $0x110] sm:$0xff]
    %v87 = vld [vmem:[%s0 + $0x118] sm:$0xff]
    %v88 = vld [vmem:[%s0 + $0x120] sm:$0xff]
    %v89 = vld [vmem:[%s0 + $0x128] sm:$0xff]
    %v90 = vld [vmem:[%s0 + $0x130] sm:$0xff]
    %v91 = vld [vmem:[%s0 + $0x138] sm:$0xff]
    %v92 = vld [vmem:[%s0 + $0x140] sm:$0xff]
    %v93 = vld [vmem:[%s0 + $0x148] sm:$0xff]
    %v94 = vld [vmem:[%s0 + $0x150] sm:$0xff]
    %v95 = vld [vmem:[%s0 + $0x158] sm:$0xff]
    %v96 = vld [vmem:[%s0 + $0x160] sm:$0xff]
    %v97 = vld [vmem:[%s0 + $0x168] sm:$0xff]
    %v98 = vpack.c.bf16 %v75, %v52
    %v99 = vpack.c.bf16 %v76, %v53
    %v100 = vpack.c.bf16 %v77, %v54
    %v101 = vpack.c.bf16 %v78, %v55
    %v102 = vpack.c.bf16 %v79, %v56
    %v103 = vpack.c.bf16 %v80, %v57
    %v104 = vpack.c.bf16 %v81, %v58
    %v105 = vpack.c.bf16 %v82, %v59
    %v106 = vpack.c.bf16 %v83, %v60
    %v107 = vpack.c.bf16 %v84, %v61
    %v108 = vpack.c.bf16 %v85, %v62
    %v109 = vpack.c.bf16 %v86, %v63
    %v110 = vpack.c.bf16 %v87, %v64
    %v111 = vpack.c.bf16 %v88, %v65
    %v112 = vpack.c.bf16 %v89, %v66
    %v113 = vpack.c.bf16 %v90, %v67
    %v114 = vpack.c.bf16 %v91, %v68
    %v115 = vpack.c.bf16 %v92, %v69
    %v116 = vpack.c.bf16 %v93, %v70
    %v117 = vpack.c.bf16 %v94, %v71
    %v118 = vpack.c.bf16 %v95, %v72
    %v119 = vpack.c.bf16 %v96, %v73
    %v120 = vpack.c.bf16 %v97, %v74
    %121 = vst [vmem:[#allocation2 + $0x8] sm:$0xff] %v98
    %122 = vst [vmem:[#allocation2 + $0x10] sm:$0xff] %v99
    %123 = vst [vmem:[#allocation2 + $0x18] sm:$0xff] %v100
    %124 = vst [vmem:[#allocation2 + $0x20] sm:$0xff] %v101
    %125 = vst [vmem:[#allocation2 + $0x28] sm:$0xff] %v102
    %126 = vst [vmem:[#allocation2 + $0x30] sm:$0xff] %v103
    %127 = vst [vmem:[#allocation2 + $0x38] sm:$0xff] %v104
    %128 = vst [vmem:[#allocation2 + $0x40] sm:$0xff] %v105
    %129 = vst [vmem:[#allocation2 + $0x48] sm:$0xff] %v106
    %130 = vst [vmem:[#allocation2 + $0x50] sm:$0xff] %v107
    %131 = vst [vmem:[#allocation2 + $0x58] sm:$0xff] %v108
    %132 = vst [vmem:[#allocation2 + $0x60] sm:$0xff] %v109
    %133 = vst [vmem:[#allocation2 + $0x68] sm:$0xff] %v110
    %134 = vst [vmem:[#allocation2 + $0x70] sm:$0xff] %v111
    %135 = vst [vmem:[#allocation2 + $0x78] sm:$0xff] %v112
    %136 = vst [vmem:[#allocation2 + $0x80] sm:$0xff] %v113
    %137 = vst [vmem:[#allocation2 + $0x88] sm:$0xff] %v114
    %138 = vst [vmem:[#allocation2 + $0x90] sm:$0xff] %v115
    %139 = vst [vmem:[#allocation2 + $0x98] sm:$0xff] %v116
    %140 = vst [vmem:[#allocation2 + $0xa0] sm:$0xff] %v117
    %141 = vst [vmem:[#allocation2 + $0xa8] sm:$0xff] %v118
    %142 = vst [vmem:[#allocation2 + $0xb0] sm:$0xff] %v119
    %143 = vst.msk [vmem:[#allocation2 + $0xb8] sm:$0xff] %vm50, %v120
    %v144 = vld [vmem:[#allocation4] sm:$0xff]
    %v145 = vld [vmem:[#allocation4 + $0x8] sm:$0xff]
    %v146 = vld [vmem:[#allocation4 + $0x10] sm:$0x7f]
    %vm147 = vcmp.gt.f32.partialorder %v144, 0.5
    %vm148 = vcmp.gt.f32.partialorder %v145, 0.5
    %vm149 = vcmp.gt.f32.partialorder %v146, 0.5
    %v150 = vsel %vm147, 1, 0
    %v151 = vsel %vm148, 1, 0
    %v152 = vsel %vm149, 1, 0
    %v153 = vlaneseq
    %v154 = vshrl.u32 %v153, 7
    %v155 = vsub.s32 0, %v154
    %v156 = vrot.slane %v150, %v155
    %v157 = vlaneseq
    %v158 = vshrl.u32 %v157, 7
    %v159 = vsub.s32 1, %v158
    %v160 = vrot.slane %v150, %v159
    %v161 = vlaneseq
    %v162 = vshrl.u32 %v161, 7
    %v163 = vsub.s32 2, %v162
    %v164 = vrot.slane %v150, %v163
    %v165 = vlaneseq
    %v166 = vshrl.u32 %v165, 7
    %v167 = vsub.s32 3, %v166
    %v168 = vrot.slane %v150, %v167
    %v169 = vlaneseq
    %v170 = vshrl.u32 %v169, 7
    %v171 = vsub.s32 4, %v170
    %v172 = vrot.slane %v150, %v171
    %v173 = vlaneseq
    %v174 = vshrl.u32 %v173, 7
    %v175 = vsub.s32 5, %v174
    %v176 = vrot.slane %v150, %v175
    %v177 = vlaneseq
    %v178 = vshrl.u32 %v177, 7
    %v179 = vsub.s32 6, %v178
    %v180 = vrot.slane %v150, %v179
    %v181 = vlaneseq
    %v182 = vshrl.u32 %v181, 7
    %v183 = vsub.s32 7, %v182
    %v184 = vrot.slane %v150, %v183
    %v185 = vlaneseq
    %v186 = vshrl.u32 %v185, 7
    %v187 = vsub.s32 0, %v186
    %v188 = vrot.slane %v151, %v187
    %v189 = vlaneseq
    %v190 = vshrl.u32 %v189, 7
    %v191 = vsub.s32 1, %v190
    %v192 = vrot.slane %v151, %v191
    %v193 = vlaneseq
    %v194 = vshrl.u32 %v193, 7
    %v195 = vsub.s32 2, %v194
    %v196 = vrot.slane %v151, %v195
    %v197 = vlaneseq
    %v198 = vshrl.u32 %v197, 7
    %v199 = vsub.s32 3, %v198
    %v200 = vrot.slane %v151, %v199
    %v201 = vlaneseq
    %v202 = vshrl.u32 %v201, 7
    %v203 = vsub.s32 4, %v202
    %v204 = vrot.slane %v151, %v203
    %v205 = vlaneseq
    %v206 = vshrl.u32 %v205, 7
    %v207 = vsub.s32 5, %v206
    %v208 = vrot.slane %v151, %v207
    %v209 = vlaneseq
    %v210 = vshrl.u32 %v209, 7
    %v211 = vsub.s32 6, %v210
    %v212 = vrot.slane %v151, %v211
    %v213 = vlaneseq
    %v214 = vshrl.u32 %v213, 7
    %v215 = vsub.s32 7, %v214
    %v216 = vrot.slane %v151, %v215
    %v217 = vlaneseq
    %v218 = vshrl.u32 %v217, 7
    %v219 = vsub.s32 0, %v218
    %v220 = vrot.slane %v152, %v219
    %v221 = vlaneseq
    %v222 = vshrl.u32 %v221, 7
    %v223 = vsub.s32 1, %v222
    %v224 = vrot.slane %v152, %v223
    %v225 = vlaneseq
    %v226 = vshrl.u32 %v225, 7
    %v227 = vsub.s32 2, %v226
    %v228 = vrot.slane %v152, %v227
    %v229 = vlaneseq
    %v230 = vshrl.u32 %v229, 7
    %v231 = vsub.s32 3, %v230
    %v232 = vrot.slane %v152, %v231
    %v233 = vlaneseq
    %v234 = vshrl.u32 %v233, 7
    %v235 = vsub.s32 4, %v234
    %v236 = vrot.slane %v152, %v235
    %v237 = vlaneseq
    %v238 = vshrl.u32 %v237, 7
    %v239 = vsub.s32 5, %v238
    %v240 = vrot.slane %v152, %v239
    %v241 = vlaneseq
    %v242 = vshrl.u32 %v241, 7
    %v243 = vsub.s32 6, %v242
    %v244 = vrot.slane %v152, %v243
    %vm245 = vcmp.eq.s32.totalorder %v156, 1
    %vm246 = vcmp.eq.s32.totalorder %v160, 1
    %vm247 = vcmp.eq.s32.totalorder %v164, 1
    %vm248 = vcmp.eq.s32.totalorder %v168, 1
    %vm249 = vcmp.eq.s32.totalorder %v172, 1
    %vm250 = vcmp.eq.s32.totalorder %v176, 1
    %vm251 = vcmp.eq.s32.totalorder %v180, 1
    %vm252 = vcmp.eq.s32.totalorder %v184, 1
    %vm253 = vcmp.eq.s32.totalorder %v188, 1
    %vm254 = vcmp.eq.s32.totalorder %v192, 1
    %vm255 = vcmp.eq.s32.totalorder %v196, 1
    %vm256 = vcmp.eq.s32.totalorder %v200, 1
    %vm257 = vcmp.eq.s32.totalorder %v204, 1
    %vm258 = vcmp.eq.s32.totalorder %v208, 1
    %vm259 = vcmp.eq.s32.totalorder %v212, 1
    %vm260 = vcmp.eq.s32.totalorder %v216, 1
    %vm261 = vcmp.eq.s32.totalorder %v220, 1
    %vm262 = vcmp.eq.s32.totalorder %v224, 1
    %vm263 = vcmp.eq.s32.totalorder %v228, 1
    %vm264 = vcmp.eq.s32.totalorder %v232, 1
    %vm265 = vcmp.eq.s32.totalorder %v236, 1
    %vm266 = vcmp.eq.s32.totalorder %v240, 1
    %vm267 = vcmp.eq.s32.totalorder %v244, 1
    %v268 = vld [vmem:[#allocation6] sm:$0xff]
    %v269 = vld [vmem:[#allocation6 + $0x8] sm:$0xff]
    %v270 = vld [vmem:[#allocation6 + $0x10] sm:$0x7f]
    %vm271 = vcmp.gt.f32.partialorder %v268, 0.5
    %vm272 = vcmp.gt.f32.partialorder %v269, 0.5
    %vm273 = vcmp.gt.f32.partialorder %v270, 0.5
    %v274 = vsel %vm271, 1, 0
    %v275 = vsel %vm272, 1, 0
    %v276 = vsel %vm273, 1, 0
    %v277 = vlaneseq
    %v278 = vshrl.u32 %v277, 7
    %v279 = vsub.s32 0, %v278
    %v280 = vrot.slane %v274, %v279
    %v281 = vlaneseq
    %v282 = vshrl.u32 %v281, 7
    %v283 = vsub.s32 1, %v282
    %v284 = vrot.slane %v274, %v283
    %v285 = vlaneseq
    %v286 = vshrl.u32 %v285, 7
    %v287 = vsub.s32 2, %v286
    %v288 = vrot.slane %v274, %v287
    %v289 = vlaneseq
    %v290 = vshrl.u32 %v289, 7
    %v291 = vsub.s32 3, %v290
    %v292 = vrot.slane %v274, %v291
    %v293 = vlaneseq
    %v294 = vshrl.u32 %v293, 7
    %v295 = vsub.s32 4, %v294
    %v296 = vrot.slane %v274, %v295
    %v297 = vlaneseq
    %v298 = vshrl.u32 %v297, 7
    %v299 = vsub.s32 5, %v298
    %v300 = vrot.slane %v274, %v299
    %v301 = vlaneseq
    %v302 = vshrl.u32 %v301, 7
    %v303 = vsub.s32 6, %v302
    %v304 = vrot.slane %v274, %v303
    %v305 = vlaneseq
    %v306 = vshrl.u32 %v305, 7
    %v307 = vsub.s32 7, %v306
    %v308 = vrot.slane %v274, %v307
    %v309 = vlaneseq
    %v310 = vshrl.u32 %v309, 7
    %v311 = vsub.s32 0, %v310
    %v312 = vrot.slane %v275, %v311
    %v313 = vlaneseq
    %v314 = vshrl.u32 %v313, 7
    %v315 = vsub.s32 1, %v314
    %v316 = vrot.slane %v275, %v315
    %v317 = vlaneseq
    %v318 = vshrl.u32 %v317, 7
    %v319 = vsub.s32 2, %v318
    %v320 = vrot.slane %v275, %v319
    %v321 = vlaneseq
    %v322 = vshrl.u32 %v321, 7
    %v323 = vsub.s32 3, %v322
    %v324 = vrot.slane %v275, %v323
    %v325 = vlaneseq
    %v326 = vshrl.u32 %v325, 7
    %v327 = vsub.s32 4, %v326
    %v328 = vrot.slane %v275, %v327
    %v329 = vlaneseq
    %v330 = vshrl.u32 %v329, 7
    %v331 = vsub.s32 5, %v330
    %v332 = vrot.slane %v275, %v331
    %v333 = vlaneseq
    %v334 = vshrl.u32 %v333, 7
    %v335 = vsub.s32 6, %v334
    %v336 = vrot.slane %v275, %v335
    %v337 = vlaneseq
    %v338 = vshrl.u32 %v337, 7
    %v339 = vsub.s32 7, %v338
    %v340 = vrot.slane %v275, %v339
    %v341 = vlaneseq
    %v342 = vshrl.u32 %v341, 7
    %v343 = vsub.s32 0, %v342
    %v344 = vrot.slane %v276, %v343
    %v345 = vlaneseq
    %v346 = vshrl.u32 %v345, 7
    %v347 = vsub.s32 1, %v346
    %v348 = vrot.slane %v276, %v347
    %v349 = vlaneseq
    %v350 = vshrl.u32 %v349, 7
    %v351 = vsub.s32 2, %v350
    %v352 = vrot.slane %v276, %v351
    %v353 = vlaneseq
    %v354 = vshrl.u32 %v353, 7
    %v355 = vsub.s32 3, %v354
    %v356 = vrot.slane %v276, %v355
    %v357 = vlaneseq
    %v358 = vshrl.u32 %v357, 7
    %v359 = vsub.s32 4, %v358
    %v360 = vrot.slane %v276, %v359
    %v361 = vlaneseq
    %v362 = vshrl.u32 %v361, 7
    %v363 = vsub.s32 5, %v362
    %v364 = vrot.slane %v276, %v363
    %v365 = vlaneseq
    %v366 = vshrl.u32 %v365, 7
    %v367 = vsub.s32 6, %v366
    %v368 = vrot.slane %v276, %v367
    %vm369 = vcmp.eq.s32.totalorder %v280, 1
    %vm370 = vcmp.eq.s32.totalorder %v284, 1
    %vm371 = vcmp.eq.s32.totalorder %v288, 1
    %vm372 = vcmp.eq.s32.totalorder %v292, 1
    %vm373 = vcmp.eq.s32.totalorder %v296, 1
    %vm374 = vcmp.eq.s32.totalorder %v300, 1
    %vm375 = vcmp.eq.s32.totalorder %v304, 1
    %vm376 = vcmp.eq.s32.totalorder %v308, 1
    %vm377 = vcmp.eq.s32.totalorder %v312, 1
    %vm378 = vcmp.eq.s32.totalorder %v316, 1
    %vm379 = vcmp.eq.s32.totalorder %v320, 1
    %vm380 = vcmp.eq.s32.totalorder %v324, 1
    %vm381 = vcmp.eq.s32.totalorder %v328, 1
    %vm382 = vcmp.eq.s32.totalorder %v332, 1
    %vm383 = vcmp.eq.s32.totalorder %v336, 1
    %vm384 = vcmp.eq.s32.totalorder %v340, 1
    %vm385 = vcmp.eq.s32.totalorder %v344, 1
    %vm386 = vcmp.eq.s32.totalorder %v348, 1
    %vm387 = vcmp.eq.s32.totalorder %v352, 1
    %vm388 = vcmp.eq.s32.totalorder %v356, 1
    %vm389 = vcmp.eq.s32.totalorder %v360, 1
    %vm390 = vcmp.eq.s32.totalorder %v364, 1
    %vm391 = vcmp.eq.s32.totalorder %v368, 1
    %v392 = vld [vmem:[#allocation2] sm:$0xff]
    %v393 = vld [vmem:[#allocation2 + $0x8] sm:$0xff]
    %v394 = vld [vmem:[#allocation2 + $0x10] sm:$0xff]
    %v395 = vld [vmem:[#allocation2 + $0x18] sm:$0xff]
    %v396 = vld [vmem:[#allocation2 + $0x20] sm:$0xff]
    %v397 = vld [vmem:[#allocation2 + $0x28] sm:$0xff]
    %v398 = vld [vmem:[#allocation2 + $0x30] sm:$0xff]
    %v399 = vld [vmem:[#allocation2 + $0x38] sm:$0xff]
    %v400 = vld [vmem:[#allocation2 + $0x40] sm:$0xff]
    %v401 = vld [vmem:[#allocation2 + $0x48] sm:$0xff]
    %v402 = vld [vmem:[#allocation2 + $0x50] sm:$0xff]
    %v403 = vld [vmem:[#allocation2 + $0x58] sm:$0xff]
    %v404 = vld [vmem:[#allocation2 + $0x60] sm:$0xff]
    %v405 = vld [vmem:[#allocation2 + $0x68] sm:$0xff]
    %v406 = vld [vmem:[#allocation2 + $0x70] sm:$0xff]
    %v407 = vld [vmem:[#allocation2 + $0x78] sm:$0xff]
    %v408 = vld [vmem:[#allocation2 + $0x80] sm:$0xff]
    %v409 = vld [vmem:[#allocation2 + $0x88] sm:$0xff]
    %v410 = vld [vmem:[#allocation2 + $0x90] sm:$0xff]
    %v411 = vld [vmem:[#allocation2 + $0x98] sm:$0xff]
    %v412 = vld [vmem:[#allocation2 + $0xa0] sm:$0xff]
    %v413 = vld [vmem:[#allocation2 + $0xa8] sm:$0xff]
    %v414 = vld [vmem:[#allocation2 + $0xb0] sm:$0xff]
    %v415 = vld [vmem:[#allocation2 + $0xb8] sm:$0xff]
    %vm416 = vmpackc.low %vm246, %vm245
    %vm417 = vmpackc.low %vm248, %vm247
    %vm418 = vmpackc.low %vm250, %vm249
    %vm419 = vmpackc.low %vm252, %vm251
    %vm420 = vmpackc.low %vm254, %vm253
    %vm421 = vmpackc.low %vm256, %vm255
    %vm422 = vmpackc.low %vm258, %vm257
    %vm423 = vmpackc.low %vm260, %vm259
    %vm424 = vmpackc.low %vm262, %vm261
    %vm425 = vmpackc.low %vm264, %vm263
    %vm426 = vmpackc.low %vm266, %vm265
    %vm427 = vmpackc.low %vm267, %vm267
    %v428 = vsel %vm416, 65537, 0
    %v429 = vsel %vm417, 65537, 0
    %v430 = vsel %vm418, 65537, 0
    %v431 = vsel %vm419, 65537, 0
    %v432 = vsel %vm420, 65537, 0
    %v433 = vsel %vm421, 65537, 0
    %v434 = vsel %vm422, 65537, 0
    %v435 = vsel %vm423, 65537, 0
    %v436 = vsel %vm424, 65537, 0
    %v437 = vsel %vm425, 65537, 0
    %v438 = vsel %vm426, 65537, 0
    %v439 = vsel %vm427, 65537, 0
    %v440 = vlaneseq
    %v441 = vshrl.u32 %v440, 7
    %v442 = vsub.s32 0, %v441
    %v443 = vrot.slane %v428, %v442
    %v444 = vlaneseq
    %v445 = vshrl.u32 %v444, 7
    %v446 = vsub.s32 4, %v445
    %v447 = vrot.slane %v428, %v446
    %v448 = vlaneseq
    %v449 = vshrl.u32 %v448, 7
    %v450 = vsub.s32 0, %v449
    %v451 = vrot.slane %v429, %v450
    %v452 = vlaneseq
    %v453 = vshrl.u32 %v452, 7
    %v454 = vsub.s32 4, %v453
    %v455 = vrot.slane %v429, %v454
    %v456 = vlaneseq
    %v457 = vshrl.u32 %v456, 7
    %v458 = vsub.s32 0, %v457
    %v459 = vrot.slane %v430, %v458
    %v460 = vlaneseq
    %v461 = vshrl.u32 %v460, 7
    %v462 = vsub.s32 4, %v461
    %v463 = vrot.slane %v430, %v462
    %v464 = vlaneseq
    %v465 = vshrl.u32 %v464, 7
    %v466 = vsub.s32 0, %v465
    %v467 = vrot.slane %v431, %v466
    %v468 = vlaneseq
    %v469 = vshrl.u32 %v468, 7
    %v470 = vsub.s32 4, %v469
    %v471 = vrot.slane %v431, %v470
    %v472 = vlaneseq
    %v473 = vshrl.u32 %v472, 7
    %v474 = vsub.s32 0, %v473
    %v475 = vrot.slane %v432, %v474
    %v476 = vlaneseq
    %v477 = vshrl.u32 %v476, 7
    %v478 = vsub.s32 4, %v477
    %v479 = vrot.slane %v432, %v478
    %v480 = vlaneseq
    %v481 = vshrl.u32 %v480, 7
    %v482 = vsub.s32 0, %v481
    %v483 = vrot.slane %v433, %v482
    %v484 = vlaneseq
    %v485 = vshrl.u32 %v484, 7
    %v486 = vsub.s32 4, %v485
    %v487 = vrot.slane %v433, %v486
    %v488 = vlaneseq
    %v489 = vshrl.u32 %v488, 7
    %v490 = vsub.s32 0, %v489
    %v491 = vrot.slane %v434, %v490
    %v492 = vlaneseq
    %v493 = vshrl.u32 %v492, 7
    %v494 = vsub.s32 4, %v493
    %v495 = vrot.slane %v434, %v494
    %v496 = vlaneseq
    %v497 = vshrl.u32 %v496, 7
    %v498 = vsub.s32 0, %v497
    %v499 = vrot.slane %v435, %v498
    %v500 = vlaneseq
    %v501 = vshrl.u32 %v500, 7
    %v502 = vsub.s32 4, %v501
    %v503 = vrot.slane %v435, %v502
    %v504 = vlaneseq
    %v505 = vshrl.u32 %v504, 7
    %v506 = vsub.s32 0, %v505
    %v507 = vrot.slane %v436, %v506
    %v508 = vlaneseq
    %v509 = vshrl.u32 %v508, 7
    %v510 = vsub.s32 4, %v509
    %v511 = vrot.slane %v436, %v510
    %v512 = vlaneseq
    %v513 = vshrl.u32 %v512, 7
    %v514 = vsub.s32 0, %v513
    %v515 = vrot.slane %v437, %v514
    %v516 = vlaneseq
    %v517 = vshrl.u32 %v516, 7
    %v518 = vsub.s32 4, %v517
    %v519 = vrot.slane %v437, %v518
    %v520 = vlaneseq
    %v521 = vshrl.u32 %v520, 7
    %v522 = vsub.s32 0, %v521
    %v523 = vrot.slane %v438, %v522
    %v524 = vlaneseq
    %v525 = vshrl.u32 %v524, 7
    %v526 = vsub.s32 4, %v525
    %v527 = vrot.slane %v438, %v526
    %v528 = vlaneseq
    %v529 = vshrl.u32 %v528, 7
    %v530 = vsub.s32 0, %v529
    %v531 = vrot.slane %v439, %v530
    %532 = vrot.lane.b32.xlu0 %v443, 73
    %v533 = vpop.permute.xlu0 %532
    %534 = vrot.lane.b32.xlu0 %v447, 73
    %v535 = vpop.permute.xlu0 %534
    %536 = vrot.lane.b32.xlu0 %v451, 73
    %v537 = vpop.permute.xlu0 %536
    %538 = vrot.lane.b32.xlu0 %v455, 73
    %v539 = vpop.permute.xlu0 %538
    %540 = vrot.lane.b32.xlu0 %v459, 73
    %v541 = vpop.permute.xlu0 %540
    %542 = vrot.lane.b32.xlu0 %v463, 73
    %v543 = vpop.permute.xlu0 %542
    %544 = vrot.lane.b32.xlu0 %v467, 73
    %v545 = vpop.permute.xlu0 %544
    %546 = vrot.lane.b32.xlu0 %v471, 73
    %v547 = vpop.permute.xlu0 %546
    %548 = vrot.lane.b32.xlu0 %v475, 73
    %v549 = vpop.permute.xlu0 %548
    %550 = vrot.lane.b32.xlu0 %v479, 73
    %v551 = vpop.permute.xlu0 %550
    %552 = vrot.lane.b32.xlu0 %v483, 73
    %v553 = vpop.permute.xlu0 %552
    %554 = vrot.lane.b32.xlu0 %v487, 73
    %v555 = vpop.permute.xlu0 %554
    %556 = vrot.lane.b32.xlu0 %v491, 73
    %v557 = vpop.permute.xlu0 %556
    %558 = vrot.lane.b32.xlu0 %v495, 73
    %v559 = vpop.permute.xlu0 %558
    %560 = vrot.lane.b32.xlu0 %v499, 73
    %v561 = vpop.permute.xlu0 %560
    %562 = vrot.lane.b32.xlu0 %v503, 73
    %v563 = vpop.permute.xlu0 %562
    %564 = vrot.lane.b32.xlu0 %v507, 73
    %v565 = vpop.permute.xlu0 %564
    %566 = vrot.lane.b32.xlu0 %v511, 73
    %v567 = vpop.permute.xlu0 %566
    %568 = vrot.lane.b32.xlu0 %v515, 73
    %v569 = vpop.permute.xlu0 %568
    %570 = vrot.lane.b32.xlu0 %v519, 73
    %v571 = vpop.permute.xlu0 %570
    %572 = vrot.lane.b32.xlu0 %v523, 73
    %v573 = vpop.permute.xlu0 %572
    %574 = vrot.lane.b32.xlu0 %v527, 73
    %v575 = vpop.permute.xlu0 %574
    %576 = vrot.lane.b32.xlu0 %v531, 73
    %v577 = vpop.permute.xlu0 %576
    %vm578 = vcmask 596992
    %v579 = vsel %vm578, %v533, %v535
    %v580 = vsel %vm578, %v535, %v537
    %v581 = vsel %vm578, %v537, %v539
    %v582 = vsel %vm578, %v539, %v541
    %v583 = vsel %vm578, %v541, %v543
    %v584 = vsel %vm578, %v543, %v545
    %v585 = vsel %vm578, %v545, %v547
    %v586 = vsel %vm578, %v547, %v549
    %v587 = vsel %vm578, %v549, %v551
    %v588 = vsel %vm578, %v551, %v553
    %v589 = vsel %vm578, %v553, %v555
    %v590 = vsel %vm578, %v555, %v557
    %v591 = vsel %vm578, %v557, %v559
    %v592 = vsel %vm578, %v559, %v561
    %v593 = vsel %vm578, %v561, %v563
    %v594 = vsel %vm578, %v563, %v565
    %v595 = vsel %vm578, %v565, %v567
    %v596 = vsel %vm578, %v567, %v569
    %v597 = vsel %vm578, %v569, %v571
    %v598 = vsel %vm578, %v571, %v573
    %v599 = vsel %vm578, %v573, %v575
    %v600 = vsel %vm578, %v575, %v577
    %vm601 = vcmp.ne.s16.totalorder %v533, 0
    %vm602 = vcmp.ne.s16.totalorder %v579, 0
    %vm603 = vcmp.ne.s16.totalorder %v580, 0
    %vm604 = vcmp.ne.s16.totalorder %v581, 0
    %vm605 = vcmp.ne.s16.totalorder %v582, 0
    %vm606 = vcmp.ne.s16.totalorder %v583, 0
    %vm607 = vcmp.ne.s16.totalorder %v584, 0
    %vm608 = vcmp.ne.s16.totalorder %v585, 0
    %vm609 = vcmp.ne.s16.totalorder %v586, 0
    %vm610 = vcmp.ne.s16.totalorder %v587, 0
    %vm611 = vcmp.ne.s16.totalorder %v588, 0
    %vm612 = vcmp.ne.s16.totalorder %v589, 0
    %vm613 = vcmp.ne.s16.totalorder %v590, 0
    %vm614 = vcmp.ne.s16.totalorder %v591, 0
    %vm615 = vcmp.ne.s16.totalorder %v592, 0
    %vm616 = vcmp.ne.s16.totalorder %v593, 0
    %vm617 = vcmp.ne.s16.totalorder %v594, 0
    %vm618 = vcmp.ne.s16.totalorder %v595, 0
    %vm619 = vcmp.ne.s16.totalorder %v596, 0
    %vm620 = vcmp.ne.s16.totalorder %v597, 0
    %vm621 = vcmp.ne.s16.totalorder %v598, 0
    %vm622 = vcmp.ne.s16.totalorder %v599, 0
    %vm623 = vcmp.ne.s16.totalorder %v600, 0
    %vm624 = vcmp.ne.s16.totalorder %v577, 0
    %v625 = vsel %vm601, %v392, 0
    %v626 = vsel %vm602, %v393, 0
    %v627 = vsel %vm603, %v394, 0
    %v628 = vsel %vm604, %v395, 0
    %v629 = vsel %vm605, %v396, 0
    %v630 = vsel %vm606, %v397, 0
    %v631 = vsel %vm607, %v398, 0
    %v632 = vsel %vm608, %v399, 0
    %v633 = vsel %vm609, %v400, 0
    %v634 = vsel %vm610, %v401, 0
    %v635 = vsel %vm611, %v402, 0
    %v636 = vsel %vm612, %v403, 0
    %v637 = vsel %vm613, %v404, 0
    %v638 = vsel %vm614, %v405, 0
    %v639 = vsel %vm615, %v406, 0
    %v640 = vsel %vm616, %v407, 0
    %v641 = vsel %vm617, %v408, 0
    %v642 = vsel %vm618, %v409, 0
    %v643 = vsel %vm619, %v410, 0
    %v644 = vsel %vm620, %v411, 0
    %v645 = vsel %vm621, %v412, 0
    %v646 = vsel %vm622, %v413, 0
    %v647 = vsel %vm623, %v414, 0
    %v648 = vsel %vm624, %v415, 0
    %673 = vrot.lane.b32.xlu0 %v625, 55
    %v674 = vpop.permute.xlu0 %673
    %675 = vrot.lane.b32.xlu0 %v626, 55
    %v676 = vpop.permute.xlu0 %675
    %677 = vrot.lane.b32.xlu0 %v627, 55
    %v678 = vpop.permute.xlu0 %677
    %679 = vrot.lane.b32.xlu0 %v628, 55
    %v680 = vpop.permute.xlu0 %679
    %681 = vrot.lane.b32.xlu0 %v629, 55
    %v682 = vpop.permute.xlu0 %681
    %683 = vrot.lane.b32.xlu0 %v630, 55
    %v684 = vpop.permute.xlu0 %683
    %685 = vrot.lane.b32.xlu0 %v631, 55
    %v686 = vpop.permute.xlu0 %685
    %687 = vrot.lane.b32.xlu0 %v632, 55
    %v688 = vpop.permute.xlu0 %687
    %689 = vrot.lane.b32.xlu0 %v633, 55
    %v690 = vpop.permute.xlu0 %689
    %691 = vrot.lane.b32.xlu0 %v634, 55
    %v692 = vpop.permute.xlu0 %691
    %693 = vrot.lane.b32.xlu0 %v635, 55
    %v694 = vpop.permute.xlu0 %693
    %695 = vrot.lane.b32.xlu0 %v636, 55
    %v696 = vpop.permute.xlu0 %695
    %697 = vrot.lane.b32.xlu0 %v637, 55
    %v698 = vpop.permute.xlu0 %697
    %699 = vrot.lane.b32.xlu0 %v638, 55
    %v700 = vpop.permute.xlu0 %699
    %701 = vrot.lane.b32.xlu0 %v639, 55
    %v702 = vpop.permute.xlu0 %701
    %703 = vrot.lane.b32.xlu0 %v640, 55
    %v704 = vpop.permute.xlu0 %703
    %705 = vrot.lane.b32.xlu0 %v641, 55
    %v706 = vpop.permute.xlu0 %705
    %707 = vrot.lane.b32.xlu0 %v642, 55
    %v708 = vpop.permute.xlu0 %707
    %709 = vrot.lane.b32.xlu0 %v643, 55
    %v710 = vpop.permute.xlu0 %709
    %711 = vrot.lane.b32.xlu0 %v644, 55
    %v712 = vpop.permute.xlu0 %711
    %713 = vrot.lane.b32.xlu0 %v645, 55
    %v714 = vpop.permute.xlu0 %713
    %715 = vrot.lane.b32.xlu0 %v646, 55
    %v716 = vpop.permute.xlu0 %715
    %717 = vrot.lane.b32.xlu0 %v647, 55
    %v718 = vpop.permute.xlu0 %717
    %719 = vrot.lane.b32.xlu0 %v648, 55
    %v720 = vpop.permute.xlu0 %719
    %vm721 = vcmask 449536
    %v722 = vsel %vm721, %v674, %v676
    %v723 = vsel %vm721, %v676, %v678
    %v724 = vsel %vm721, %v678, %v680
    %v725 = vsel %vm721, %v680, %v682
    %v726 = vsel %vm721, %v682, %v684
    %v727 = vsel %vm721, %v684, %v686
    %v728 = vsel %vm721, %v686, %v688
    %v729 = vsel %vm721, %v688, %v690
    %v730 = vsel %vm721, %v690, %v692
    %v731 = vsel %vm721, %v692, %v694
    %v732 = vsel %vm721, %v694, %v696
    %v733 = vsel %vm721, %v696, %v698
    %v734 = vsel %vm721, %v698, %v700
    %v735 = vsel %vm721, %v700, %v702
    %v736 = vsel %vm721, %v702, %v704
    %v737 = vsel %vm721, %v704, %v706
    %v738 = vsel %vm721, %v706, %v708
    %v739 = vsel %vm721, %v708, %v710
    %v740 = vsel %vm721, %v710, %v712
    %v741 = vsel %vm721, %v712, %v714
    %v742 = vsel %vm721, %v714, %v716
    %v743 = vsel %vm721, %v716, %v718
    %v744 = vsel %vm721, %v718, %v720
    %768 = vst [vmem:[#allocation3] sm:$0xff] %v722
    %769 = vst [vmem:[#allocation3 + $0x8] sm:$0xff] %v723
    %770 = vst [vmem:[#allocation3 + $0x10] sm:$0xff] %v724
    %771 = vst [vmem:[#allocation3 + $0x18] sm:$0xff] %v725
    %772 = vst [vmem:[#allocation3 + $0x20] sm:$0xff] %v726
    %773 = vst [vmem:[#allocation3 + $0x28] sm:$0xff] %v727
    %774 = vst [vmem:[#allocation3 + $0x30] sm:$0xff] %v728
    %775 = vst [vmem:[#allocation3 + $0x38] sm:$0xff] %v729
    %776 = vst [vmem:[#allocation3 + $0x40] sm:$0xff] %v730
    %777 = vst [vmem:[#allocation3 + $0x48] sm:$0xff] %v731
    %778 = vst [vmem:[#allocation3 + $0x50] sm:$0xff] %v732
    %779 = vst [vmem:[#allocation3 + $0x58] sm:$0xff] %v733
    %780 = vst [vmem:[#allocation3 + $0x60] sm:$0xff] %v734
    %781 = vst [vmem:[#allocation3 + $0x68] sm:$0xff] %v735
    %782 = vst [vmem:[#allocation3 + $0x70] sm:$0xff] %v736
    %783 = vst [vmem:[#allocation3 + $0x78] sm:$0xff] %v737
    %784 = vst [vmem:[#allocation3 + $0x80] sm:$0xff] %v738
    %785 = vst [vmem:[#allocation3 + $0x88] sm:$0xff] %v739
    %786 = vst [vmem:[#allocation3 + $0x90] sm:$0xff] %v740
    %787 = vst [vmem:[#allocation3 + $0x98] sm:$0xff] %v741
    %788 = vst [vmem:[#allocation3 + $0xa0] sm:$0xff] %v742
    %789 = vst [vmem:[#allocation3 + $0xa8] sm:$0xff] %v743
    %790 = vst.msk [vmem:[#allocation3 + $0xb0] sm:$0xff] %vm50, %v744
    %v791 = vld [vmem:[#allocation2] sm:$0xff]
    %v792 = vld [vmem:[#allocation2 + $0x8] sm:$0xff]
    %v793 = vld [vmem:[#allocation2 + $0x10] sm:$0xff]
    %v794 = vld [vmem:[#allocation2 + $0x18] sm:$0xff]
    %v795 = vld [vmem:[#allocation2 + $0x20] sm:$0xff]
    %v796 = vld [vmem:[#allocation2 + $0x28] sm:$0xff]
    %v797 = vld [vmem:[#allocation2 + $0x30] sm:$0xff]
    %v798 = vld [vmem:[#allocation2 + $0x38] sm:$0xff]
    %v799 = vld [vmem:[#allocation2 + $0x40] sm:$0xff]
    %v800 = vld [vmem:[#allocation2 + $0x48] sm:$0xff]
    %v801 = vld [vmem:[#allocation2 + $0x50] sm:$0xff]
    %v802 = vld [vmem:[#allocation2 + $0x58] sm:$0xff]
    %v803 = vld [vmem:[#allocation2 + $0x60] sm:$0xff]
    %v804 = vld [vmem:[#allocation2 + $0x68] sm:$0xff]
    %v805 = vld [vmem:[#allocation2 + $0x70] sm:$0xff]
    %v806 = vld [vmem:[#allocation2 + $0x78] sm:$0xff]
    %v807 = vld [vmem:[#allocation2 + $0x80] sm:$0xff]
    %v808 = vld [vmem:[#allocation2 + $0x88] sm:$0xff]
    %v809 = vld [vmem:[#allocation2 + $0x90] sm:$0xff]
    %v810 = vld [vmem:[#allocation2 + $0x98] sm:$0xff]
    %v811 = vld [vmem:[#allocation2 + $0xa0] sm:$0xff]
    %v812 = vld [vmem:[#allocation2 + $0xa8] sm:$0xff]
    %v813 = vld [vmem:[#allocation2 + $0xb0] sm:$0xff]
    %v814 = vld [vmem:[#allocation2 + $0xb8] sm:$0xff]
    %839 = vrot.lane.b32.xlu0 %v791, 54
    %v840 = vpop.permute.xlu0 %839
    %841 = vrot.lane.b32.xlu0 %v792, 54
    %v842 = vpop.permute.xlu0 %841
    %843 = vrot.lane.b32.xlu0 %v793, 54
    %v844 = vpop.permute.xlu0 %843
    %845 = vrot.lane.b32.xlu0 %v794, 54
    %v846 = vpop.permute.xlu0 %845
    %847 = vrot.lane.b32.xlu0 %v795, 54
    %v848 = vpop.permute.xlu0 %847
    %849 = vrot.lane.b32.xlu0 %v796, 54
    %v850 = vpop.permute.xlu0 %849
    %851 = vrot.lane.b32.xlu0 %v797, 54
    %v852 = vpop.permute.xlu0 %851
    %853 = vrot.lane.b32.xlu0 %v798, 54
    %v854 = vpop.permute.xlu0 %853
    %855 = vrot.lane.b32.xlu0 %v799, 54
    %v856 = vpop.permute.xlu0 %855
    %857 = vrot.lane.b32.xlu0 %v800, 54
    %v858 = vpop.permute.xlu0 %857
    %859 = vrot.lane.b32.xlu0 %v801, 54
    %v860 = vpop.permute.xlu0 %859
    %861 = vrot.lane.b32.xlu0 %v802, 54
    %v862 = vpop.permute.xlu0 %861
    %863 = vrot.lane.b32.xlu0 %v803, 54
    %v864 = vpop.permute.xlu0 %863
    %865 = vrot.lane.b32.xlu0 %v804, 54
    %v866 = vpop.permute.xlu0 %865
    %867 = vrot.lane.b32.xlu0 %v805, 54
    %v868 = vpop.permute.xlu0 %867
    %869 = vrot.lane.b32.xlu0 %v806, 54
    %v870 = vpop.permute.xlu0 %869
    %871 = vrot.lane.b32.xlu0 %v807, 54
    %v872 = vpop.permute.xlu0 %871
    %873 = vrot.lane.b32.xlu0 %v808, 54
    %v874 = vpop.permute.xlu0 %873
    %875 = vrot.lane.b32.xlu0 %v809, 54
    %v876 = vpop.permute.xlu0 %875
    %877 = vrot.lane.b32.xlu0 %v810, 54
    %v878 = vpop.permute.xlu0 %877
    %879 = vrot.lane.b32.xlu0 %v811, 54
    %v880 = vpop.permute.xlu0 %879
    %881 = vrot.lane.b32.xlu0 %v812, 54
    %v882 = vpop.permute.xlu0 %881
    %883 = vrot.lane.b32.xlu0 %v813, 54
    %v884 = vpop.permute.xlu0 %883
    %885 = vrot.lane.b32.xlu0 %v814, 54
    %v886 = vpop.permute.xlu0 %885
    %vm887 = vcmask 441344
    %v888 = vsel %vm887, %v840, %v842
    %v889 = vsel %vm887, %v842, %v844
    %v890 = vsel %vm887, %v844, %v846
    %v891 = vsel %vm887, %v846, %v848
    %v892 = vsel %vm887, %v848, %v850
    %v893 = vsel %vm887, %v850, %v852
    %v894 = vsel %vm887, %v852, %v854
    %v895 = vsel %vm887, %v854, %v856
    %v896 = vsel %vm887, %v856, %v858
    %v897 = vsel %vm887, %v858, %v860
    %v898 = vsel %vm887, %v860, %v862
    %v899 = vsel %vm887, %v862, %v864
    %v900 = vsel %vm887, %v864, %v866
    %v901 = vsel %vm887, %v866, %v868
    %v902 = vsel %vm887, %v868, %v870
    %v903 = vsel %vm887, %v870, %v872
    %v904 = vsel %vm887, %v872, %v874
    %v905 = vsel %vm887, %v874, %v876
    %v906 = vsel %vm887, %v876, %v878
    %v907 = vsel %vm887, %v878, %v880
    %v908 = vsel %vm887, %v880, %v882
    %v909 = vsel %vm887, %v882, %v884
    %v910 = vsel %vm887, %v884, %v886
    %934 = vst [vmem:[#allocation3 + $0xb8] sm:$0xff] %v888
    %935 = vst [vmem:[#allocation3 + $0xc0] sm:$0xff] %v889
    %936 = vst [vmem:[#allocation3 + $0xc8] sm:$0xff] %v890
    %937 = vst [vmem:[#allocation3 + $0xd0] sm:$0xff] %v891
    %938 = vst [vmem:[#allocation3 + $0xd8] sm:$0xff] %v892
    %939 = vst [vmem:[#allocation3 + $0xe0] sm:$0xff] %v893
    %940 = vst [vmem:[#allocation3 + $0xe8] sm:$0xff] %v894
    %941 = vst [vmem:[#allocation3 + $0xf0] sm:$0xff] %v895
    %942 = vst [vmem:[#allocation3 + $0xf8] sm:$0xff] %v896
    %943 = vst [vmem:[#allocation3 + $0x100] sm:$0xff] %v897
    %944 = vst [vmem:[#allocation3 + $0x108] sm:$0xff] %v898
    %945 = vst [vmem:[#allocation3 + $0x110] sm:$0xff] %v899
    %946 = vst [vmem:[#allocation3 + $0x118] sm:$0xff] %v900
    %947 = vst [vmem:[#allocation3 + $0x120] sm:$0xff] %v901
    %948 = vst [vmem:[#allocation3 + $0x128] sm:$0xff] %v902
    %949 = vst [vmem:[#allocation3 + $0x130] sm:$0xff] %v903
    %950 = vst [vmem:[#allocation3 + $0x138] sm:$0xff] %v904
    %951 = vst [vmem:[#allocation3 + $0x140] sm:$0xff] %v905
    %952 = vst [vmem:[#allocation3 + $0x148] sm:$0xff] %v906
    %953 = vst [vmem:[#allocation3 + $0x150] sm:$0xff] %v907
    %954 = vst [vmem:[#allocation3 + $0x158] sm:$0xff] %v908
    %955 = vst [vmem:[#allocation3 + $0x160] sm:$0xff] %v909
    %956 = vst.msk [vmem:[#allocation3 + $0x168] sm:$0xff] %vm50, %v910
    %v957 = vld [vmem:[#allocation2] sm:$0xff]
    %v958 = vld [vmem:[#allocation2 + $0x8] sm:$0xff]
    %v959 = vld [vmem:[#allocation2 + $0x10] sm:$0xff]
    %v960 = vld [vmem:[#allocation2 + $0x18] sm:$0xff]
    %v961 = vld [vmem:[#allocation2 + $0x20] sm:$0xff]
    %v962 = vld [vmem:[#allocation2 + $0x28] sm:$0xff]
    %v963 = vld [vmem:[#allocation2 + $0x30] sm:$0xff]
    %v964 = vld [vmem:[#allocation2 + $0x38] sm:$0xff]
    %v965 = vld [vmem:[#allocation2 + $0x40] sm:$0xff]
    %v966 = vld [vmem:[#allocation2 + $0x48] sm:$0xff]
    %v967 = vld [vmem:[#allocation2 + $0x50] sm:$0xff]
    %v968 = vld [vmem:[#allocation2 + $0x58] sm:$0xff]
    %v969 = vld [vmem:[#allocation2 + $0x60] sm:$0xff]
    %v970 = vld [vmem:[#allocation2 + $0x68] sm:$0xff]
    %v971 = vld [vmem:[#allocation2 + $0x70] sm:$0xff]
    %v972 = vld [vmem:[#allocation2 + $0x78] sm:$0xff]
    %v973 = vld [vmem:[#allocation2 + $0x80] sm:$0xff]
    %v974 = vld [vmem:[#allocation2 + $0x88] sm:$0xff]
    %v975 = vld [vmem:[#allocation2 + $0x90] sm:$0xff]
    %v976 = vld [vmem:[#allocation2 + $0x98] sm:$0xff]
    %v977 = vld [vmem:[#allocation2 + $0xa0] sm:$0xff]
    %v978 = vld [vmem:[#allocation2 + $0xa8] sm:$0xff]
    %v979 = vld [vmem:[#allocation2 + $0xb0] sm:$0xff]
    %v980 = vld [vmem:[#allocation2 + $0xb8] sm:$0xff]
    %vm981 = vmpackc.low %vm370, %vm369
    %vm982 = vmpackc.low %vm372, %vm371
    %vm983 = vmpackc.low %vm374, %vm373
    %vm984 = vmpackc.low %vm376, %vm375
    %vm985 = vmpackc.low %vm378, %vm377
    %vm986 = vmpackc.low %vm380, %vm379
    %vm987 = vmpackc.low %vm382, %vm381
    %vm988 = vmpackc.low %vm384, %vm383
    %vm989 = vmpackc.low %vm386, %vm385
    %vm990 = vmpackc.low %vm388, %vm387
    %vm991 = vmpackc.low %vm390, %vm389
    %vm992 = vmpackc.low %vm391, %vm391
    %v993 = vsel %vm981, 65537, 0
    %v994 = vsel %vm982, 65537, 0
    %v995 = vsel %vm983, 65537, 0
    %v996 = vsel %vm984, 65537, 0
    %v997 = vsel %vm985, 65537, 0
    %v998 = vsel %vm986, 65537, 0
    %v999 = vsel %vm987, 65537, 0
    %v1000 = vsel %vm988, 65537, 0
    %v1001 = vsel %vm989, 65537, 0
    %v1002 = vsel %vm990, 65537, 0
    %v1003 = vsel %vm991, 65537, 0
    %v1004 = vsel %vm992, 65537, 0
    %v1005 = vlaneseq
    %v1006 = vshrl.u32 %v1005, 7
    %v1007 = vsub.s32 0, %v1006
    %v1008 = vrot.slane %v993, %v1007
    %v1009 = vlaneseq
    %v1010 = vshrl.u32 %v1009, 7
    %v1011 = vsub.s32 4, %v1010
    %v1012 = vrot.slane %v993, %v1011
    %v1013 = vlaneseq
    %v1014 = vshrl.u32 %v1013, 7
    %v1015 = vsub.s32 0, %v1014
    %v1016 = vrot.slane %v994, %v1015
    %v1017 = vlaneseq
    %v1018 = vshrl.u32 %v1017, 7
    %v1019 = vsub.s32 4, %v1018
    %v1020 = vrot.slane %v994, %v1019
    %v1021 = vlaneseq
    %v1022 = vshrl.u32 %v1021, 7
    %v1023 = vsub.s32 0, %v1022
    %v1024 = vrot.slane %v995, %v1023
    %v1025 = vlaneseq
    %v1026 = vshrl.u32 %v1025, 7
    %v1027 = vsub.s32 4, %v1026
    %v1028 = vrot.slane %v995, %v1027
    %v1029 = vlaneseq
    %v1030 = vshrl.u32 %v1029, 7
    %v1031 = vsub.s32 0, %v1030
    %v1032 = vrot.slane %v996, %v1031
    %v1033 = vlaneseq
    %v1034 = vshrl.u32 %v1033, 7
    %v1035 = vsub.s32 4, %v1034
    %v1036 = vrot.slane %v996, %v1035
    %v1037 = vlaneseq
    %v1038 = vshrl.u32 %v1037, 7
    %v1039 = vsub.s32 0, %v1038
    %v1040 = vrot.slane %v997, %v1039
    %v1041 = vlaneseq
    %v1042 = vshrl.u32 %v1041, 7
    %v1043 = vsub.s32 4, %v1042
    %v1044 = vrot.slane %v997, %v1043
    %v1045 = vlaneseq
    %v1046 = vshrl.u32 %v1045, 7
    %v1047 = vsub.s32 0, %v1046
    %v1048 = vrot.slane %v998, %v1047
    %v1049 = vlaneseq
    %v1050 = vshrl.u32 %v1049, 7
    %v1051 = vsub.s32 4, %v1050
    %v1052 = vrot.slane %v998, %v1051
    %v1053 = vlaneseq
    %v1054 = vshrl.u32 %v1053, 7
    %v1055 = vsub.s32 0, %v1054
    %v1056 = vrot.slane %v999, %v1055
    %v1057 = vlaneseq
    %v1058 = vshrl.u32 %v1057, 7
    %v1059 = vsub.s32 4, %v1058
    %v1060 = vrot.slane %v999, %v1059
    %v1061 = vlaneseq
    %v1062 = vshrl.u32 %v1061, 7
    %v1063 = vsub.s32 0, %v1062
    %v1064 = vrot.slane %v1000, %v1063
    %v1065 = vlaneseq
    %v1066 = vshrl.u32 %v1065, 7
    %v1067 = vsub.s32 4, %v1066
    %v1068 = vrot.slane %v1000, %v1067
    %v1069 = vlaneseq
    %v1070 = vshrl.u32 %v1069, 7
    %v1071 = vsub.s32 0, %v1070
    %v1072 = vrot.slane %v1001, %v1071
    %v1073 = vlaneseq
    %v1074 = vshrl.u32 %v1073, 7
    %v1075 = vsub.s32 4, %v1074
    %v1076 = vrot.slane %v1001, %v1075
    %v1077 = vlaneseq
    %v1078 = vshrl.u32 %v1077, 7
    %v1079 = vsub.s32 0, %v1078
    %v1080 = vrot.slane %v1002, %v1079
    %v1081 = vlaneseq
    %v1082 = vshrl.u32 %v1081, 7
    %v1083 = vsub.s32 4, %v1082
    %v1084 = vrot.slane %v1002, %v1083
    %v1085 = vlaneseq
    %v1086 = vshrl.u32 %v1085, 7
    %v1087 = vsub.s32 0, %v1086
    %v1088 = vrot.slane %v1003, %v1087
    %v1089 = vlaneseq
    %v1090 = vshrl.u32 %v1089, 7
    %v1091 = vsub.s32 4, %v1090
    %v1092 = vrot.slane %v1003, %v1091
    %v1093 = vlaneseq
    %v1094 = vshrl.u32 %v1093, 7
    %v1095 = vsub.s32 0, %v1094
    %v1096 = vrot.slane %v1004, %v1095
    %1097 = vrot.lane.b32.xlu0 %v1008, 75
    %v1098 = vpop.permute.xlu0 %1097
    %1099 = vrot.lane.b32.xlu0 %v1012, 75
    %v1100 = vpop.permute.xlu0 %1099
    %1101 = vrot.lane.b32.xlu0 %v1016, 75
    %v1102 = vpop.permute.xlu0 %1101
    %1103 = vrot.lane.b32.xlu0 %v1020, 75
    %v1104 = vpop.permute.xlu0 %1103
    %1105 = vrot.lane.b32.xlu0 %v1024, 75
    %v1106 = vpop.permute.xlu0 %1105
    %1107 = vrot.lane.b32.xlu0 %v1028, 75
    %v1108 = vpop.permute.xlu0 %1107
    %1109 = vrot.lane.b32.xlu0 %v1032, 75
    %v1110 = vpop.permute.xlu0 %1109
    %1111 = vrot.lane.b32.xlu0 %v1036, 75
    %v1112 = vpop.permute.xlu0 %1111
    %1113 = vrot.lane.b32.xlu0 %v1040, 75
    %v1114 = vpop.permute.xlu0 %1113
    %1115 = vrot.lane.b32.xlu0 %v1044, 75
    %v1116 = vpop.permute.xlu0 %1115
    %1117 = vrot.lane.b32.xlu0 %v1048, 75
    %v1118 = vpop.permute.xlu0 %1117
    %1119 = vrot.lane.b32.xlu0 %v1052, 75
    %v1120 = vpop.permute.xlu0 %1119
    %1121 = vrot.lane.b32.xlu0 %v1056, 75
    %v1122 = vpop.permute.xlu0 %1121
    %1123 = vrot.lane.b32.xlu0 %v1060, 75
    %v1124 = vpop.permute.xlu0 %1123
    %1125 = vrot.lane.b32.xlu0 %v1064, 75
    %v1126 = vpop.permute.xlu0 %1125
    %1127 = vrot.lane.b32.xlu0 %v1068, 75
    %v1128 = vpop.permute.xlu0 %1127
    %1129 = vrot.lane.b32.xlu0 %v1072, 75
    %v1130 = vpop.permute.xlu0 %1129
    %1131 = vrot.lane.b32.xlu0 %v1076, 75
    %v1132 = vpop.permute.xlu0 %1131
    %1133 = vrot.lane.b32.xlu0 %v1080, 75
    %v1134 = vpop.permute.xlu0 %1133
    %1135 = vrot.lane.b32.xlu0 %v1084, 75
    %v1136 = vpop.permute.xlu0 %1135
    %1137 = vrot.lane.b32.xlu0 %v1088, 75
    %v1138 = vpop.permute.xlu0 %1137
    %1139 = vrot.lane.b32.xlu0 %v1092, 75
    %v1140 = vpop.permute.xlu0 %1139
    %1141 = vrot.lane.b32.xlu0 %v1096, 75
    %v1142 = vpop.permute.xlu0 %1141
    %vm1143 = vcmask 613376
    %v1144 = vsel %vm1143, %v1098, %v1100
    %v1145 = vsel %vm1143, %v1100, %v1102
    %v1146 = vsel %vm1143, %v1102, %v1104
    %v1147 = vsel %vm1143, %v1104, %v1106
    %v1148 = vsel %vm1143, %v1106, %v1108
    %v1149 = vsel %vm1143, %v1108, %v1110
    %v1150 = vsel %vm1143, %v1110, %v1112
    %v1151 = vsel %vm1143, %v1112, %v1114
    %v1152 = vsel %vm1143, %v1114, %v1116
    %v1153 = vsel %vm1143, %v1116, %v1118
    %v1154 = vsel %vm1143, %v1118, %v1120
    %v1155 = vsel %vm1143, %v1120, %v1122
    %v1156 = vsel %vm1143, %v1122, %v1124
    %v1157 = vsel %vm1143, %v1124, %v1126
    %v1158 = vsel %vm1143, %v1126, %v1128
    %v1159 = vsel %vm1143, %v1128, %v1130
    %v1160 = vsel %vm1143, %v1130, %v1132
    %v1161 = vsel %vm1143, %v1132, %v1134
    %v1162 = vsel %vm1143, %v1134, %v1136
    %v1163 = vsel %vm1143, %v1136, %v1138
    %v1164 = vsel %vm1143, %v1138, %v1140
    %v1165 = vsel %vm1143, %v1140, %v1142
    %vm1166 = vcmp.ne.s16.totalorder %v1098, 0
    %vm1167 = vcmp.ne.s16.totalorder %v1144, 0
    %vm1168 = vcmp.ne.s16.totalorder %v1145, 0
    %vm1169 = vcmp.ne.s16.totalorder %v1146, 0
    %vm1170 = vcmp.ne.s16.totalorder %v1147, 0
    %vm1171 = vcmp.ne.s16.totalorder %v1148, 0
    %vm1172 = vcmp.ne.s16.totalorder %v1149, 0
    %vm1173 = vcmp.ne.s16.totalorder %v1150, 0
    %vm1174 = vcmp.ne.s16.totalorder %v1151, 0
    %vm1175 = vcmp.ne.s16.totalorder %v1152, 0
    %vm1176 = vcmp.ne.s16.totalorder %v1153, 0
    %vm1177 = vcmp.ne.s16.totalorder %v1154, 0
    %vm1178 = vcmp.ne.s16.totalorder %v1155, 0
    %vm1179 = vcmp.ne.s16.totalorder %v1156, 0
    %vm1180 = vcmp.ne.s16.totalorder %v1157, 0
    %vm1181 = vcmp.ne.s16.totalorder %v1158, 0
    %vm1182 = vcmp.ne.s16.totalorder %v1159, 0
    %vm1183 = vcmp.ne.s16.totalorder %v1160, 0
    %vm1184 = vcmp.ne.s16.totalorder %v1161, 0
    %vm1185 = vcmp.ne.s16.totalorder %v1162, 0
    %vm1186 = vcmp.ne.s16.totalorder %v1163, 0
    %vm1187 = vcmp.ne.s16.totalorder %v1164, 0
    %vm1188 = vcmp.ne.s16.totalorder %v1165, 0
    %vm1189 = vcmp.ne.s16.totalorder %v1142, 0
    %v1190 = vsel %vm1166, %v957, 0
    %v1191 = vsel %vm1167, %v958, 0
    %v1192 = vsel %vm1168, %v959, 0
    %v1193 = vsel %vm1169, %v960, 0
    %v1194 = vsel %vm1170, %v961, 0
    %v1195 = vsel %vm1171, %v962, 0
    %v1196 = vsel %vm1172, %v963, 0
    %v1197 = vsel %vm1173, %v964, 0
    %v1198 = vsel %vm1174, %v965, 0
    %v1199 = vsel %vm1175, %v966, 0
    %v1200 = vsel %vm1176, %v967, 0
    %v1201 = vsel %vm1177, %v968, 0
    %v1202 = vsel %vm1178, %v969, 0
    %v1203 = vsel %vm1179, %v970, 0
    %v1204 = vsel %vm1180, %v971, 0
    %v1205 = vsel %vm1181, %v972, 0
    %v1206 = vsel %vm1182, %v973, 0
    %v1207 = vsel %vm1183, %v974, 0
    %v1208 = vsel %vm1184, %v975, 0
    %v1209 = vsel %vm1185, %v976, 0
    %v1210 = vsel %vm1186, %v977, 0
    %v1211 = vsel %vm1187, %v978, 0
    %v1212 = vsel %vm1188, %v979, 0
    %v1213 = vsel %vm1189, %v980, 0
    %1238 = vrot.lane.b32.xlu0 %v1190, 53
    %v1239 = vpop.permute.xlu0 %1238
    %1240 = vrot.lane.b32.xlu0 %v1191, 53
    %v1241 = vpop.permute.xlu0 %1240
    %1242 = vrot.lane.b32.xlu0 %v1192, 53
    %v1243 = vpop.permute.xlu0 %1242
    %1244 = vrot.lane.b32.xlu0 %v1193, 53
    %v1245 = vpop.permute.xlu0 %1244
    %1246 = vrot.lane.b32.xlu0 %v1194, 53
    %v1247 = vpop.permute.xlu0 %1246
    %1248 = vrot.lane.b32.xlu0 %v1195, 53
    %v1249 = vpop.permute.xlu0 %1248
    %1250 = vrot.lane.b32.xlu0 %v1196, 53
    %v1251 = vpop.permute.xlu0 %1250
    %1252 = vrot.lane.b32.xlu0 %v1197, 53
    %v1253 = vpop.permute.xlu0 %1252
    %1254 = vrot.lane.b32.xlu0 %v1198, 53
    %v1255 = vpop.permute.xlu0 %1254
    %1256 = vrot.lane.b32.xlu0 %v1199, 53
    %v1257 = vpop.permute.xlu0 %1256
    %1258 = vrot.lane.b32.xlu0 %v1200, 53
    %v1259 = vpop.permute.xlu0 %1258
    %1260 = vrot.lane.b32.xlu0 %v1201, 53
    %v1261 = vpop.permute.xlu0 %1260
    %1262 = vrot.lane.b32.xlu0 %v1202, 53
    %v1263 = vpop.permute.xlu0 %1262
    %1264 = vrot.lane.b32.xlu0 %v1203, 53
    %v1265 = vpop.permute.xlu0 %1264
    %1266 = vrot.lane.b32.xlu0 %v1204, 53
    %v1267 = vpop.permute.xlu0 %1266
    %1268 = vrot.lane.b32.xlu0 %v1205, 53
    %v1269 = vpop.permute.xlu0 %1268
    %1270 = vrot.lane.b32.xlu0 %v1206, 53
    %v1271 = vpop.permute.xlu0 %1270
    %1272 = vrot.lane.b32.xlu0 %v1207, 53
    %v1273 = vpop.permute.xlu0 %1272
    %1274 = vrot.lane.b32.xlu0 %v1208, 53
    %v1275 = vpop.permute.xlu0 %1274
    %1276 = vrot.lane.b32.xlu0 %v1209, 53
    %v1277 = vpop.permute.xlu0 %1276
    %1278 = vrot.lane.b32.xlu0 %v1210, 53
    %v1279 = vpop.permute.xlu0 %1278
    %1280 = vrot.lane.b32.xlu0 %v1211, 53
    %v1281 = vpop.permute.xlu0 %1280
    %1282 = vrot.lane.b32.xlu0 %v1212, 53
    %v1283 = vpop.permute.xlu0 %1282
    %1284 = vrot.lane.b32.xlu0 %v1213, 53
    %v1285 = vpop.permute.xlu0 %1284
    %vm1286 = vcmask 433152
    %v1287 = vsel %vm1286, %v1239, %v1241
    %v1288 = vsel %vm1286, %v1241, %v1243
    %v1289 = vsel %vm1286, %v1243, %v1245
    %v1290 = vsel %vm1286, %v1245, %v1247
    %v1291 = vsel %vm1286, %v1247, %v1249
    %v1292 = vsel %vm1286, %v1249, %v1251
    %v1293 = vsel %vm1286, %v1251, %v1253
    %v1294 = vsel %vm1286, %v1253, %v1255
    %v1295 = vsel %vm1286, %v1255, %v1257
    %v1296 = vsel %vm1286, %v1257, %v1259
    %v1297 = vsel %vm1286, %v1259, %v1261
    %v1298 = vsel %vm1286, %v1261, %v1263
    %v1299 = vsel %vm1286, %v1263, %v1265
    %v1300 = vsel %vm1286, %v1265, %v1267
    %v1301 = vsel %vm1286, %v1267, %v1269
    %v1302 = vsel %vm1286, %v1269, %v1271
    %v1303 = vsel %vm1286, %v1271, %v1273
    %v1304 = vsel %vm1286, %v1273, %v1275
    %v1305 = vsel %vm1286, %v1275, %v1277
    %v1306 = vsel %vm1286, %v1277, %v1279
    %v1307 = vsel %vm1286, %v1279, %v1281
    %v1308 = vsel %vm1286, %v1281, %v1283
    %v1309 = vsel %vm1286, %v1283, %v1285
    %1333 = vst [vmem:[#allocation3 + $0x170] sm:$0xff] %v1287
    %1334 = vst [vmem:[#allocation3 + $0x178] sm:$0xff] %v1288
    %1335 = vst [vmem:[#allocation3 + $0x180] sm:$0xff] %v1289
    %1336 = vst [vmem:[#allocation3 + $0x188] sm:$0xff] %v1290
    %1337 = vst [vmem:[#allocation3 + $0x190] sm:$0xff] %v1291
    %1338 = vst [vmem:[#allocation3 + $0x198] sm:$0xff] %v1292
    %1339 = vst [vmem:[#allocation3 + $0x1a0] sm:$0xff] %v1293
    %1340 = vst [vmem:[#allocation3 + $0x1a8] sm:$0xff] %v1294
    %1341 = vst [vmem:[#allocation3 + $0x1b0] sm:$0xff] %v1295
    %1342 = vst [vmem:[#allocation3 + $0x1b8] sm:$0xff] %v1296
    %1343 = vst [vmem:[#allocation3 + $0x1c0] sm:$0xff] %v1297
    %1344 = vst [vmem:[#allocation3 + $0x1c8] sm:$0xff] %v1298
    %1345 = vst [vmem:[#allocation3 + $0x1d0] sm:$0xff] %v1299
    %1346 = vst [vmem:[#allocation3 + $0x1d8] sm:$0xff] %v1300
    %1347 = vst [vmem:[#allocation3 + $0x1e0] sm:$0xff] %v1301
    %1348 = vst [vmem:[#allocation3 + $0x1e8] sm:$0xff] %v1302
    %1349 = vst [vmem:[#allocation3 + $0x1f0] sm:$0xff] %v1303
    %1350 = vst [vmem:[#allocation3 + $0x1f8] sm:$0xff] %v1304
    %1351 = vst [vmem:[#allocation3 + $0x200] sm:$0xff] %v1305
    %1352 = vst [vmem:[#allocation3 + $0x208] sm:$0xff] %v1306
    %1353 = vst [vmem:[#allocation3 + $0x210] sm:$0xff] %v1307
    %1354 = vst [vmem:[#allocation3 + $0x218] sm:$0xff] %v1308
    %1355 = vst.msk [vmem:[#allocation3 + $0x220] sm:$0xff] %vm50, %v1309
    %v1356 = vld [vmem:[#allocation2] sm:$0xff]
    %v1357 = vld [vmem:[#allocation2 + $0x8] sm:$0xff]
    %v1358 = vld [vmem:[#allocation2 + $0x10] sm:$0xff]
    %v1359 = vld [vmem:[#allocation2 + $0x18] sm:$0xff]
    %v1360 = vld [vmem:[#allocation2 + $0x20] sm:$0xff]
    %v1361 = vld [vmem:[#allocation2 + $0x28] sm:$0xff]
    %v1362 = vld [vmem:[#allocation2 + $0x30] sm:$0xff]
    %v1363 = vld [vmem:[#allocation2 + $0x38] sm:$0xff]
    %v1364 = vld [vmem:[#allocation2 + $0x40] sm:$0xff]
    %v1365 = vld [vmem:[#allocation2 + $0x48] sm:$0xff]
    %v1366 = vld [vmem:[#allocation2 + $0x50] sm:$0xff]
    %v1367 = vld [vmem:[#allocation2 + $0x58] sm:$0xff]
    %v1368 = vld [vmem:[#allocation2 + $0x60] sm:$0xff]
    %v1369 = vld [vmem:[#allocation2 + $0x68] sm:$0xff]
    %v1370 = vld [vmem:[#allocation2 + $0x70] sm:$0xff]
    %v1371 = vld [vmem:[#allocation2 + $0x78] sm:$0xff]
    %v1372 = vld [vmem:[#allocation2 + $0x80] sm:$0xff]
    %v1373 = vld [vmem:[#allocation2 + $0x88] sm:$0xff]
    %v1374 = vld [vmem:[#allocation2 + $0x90] sm:$0xff]
    %v1375 = vld [vmem:[#allocation2 + $0x98] sm:$0xff]
    %v1376 = vld [vmem:[#allocation2 + $0xa0] sm:$0xff]
    %v1377 = vld [vmem:[#allocation2 + $0xa8] sm:$0xff]
    %v1378 = vld [vmem:[#allocation2 + $0xb0] sm:$0xff]
    %v1379 = vld [vmem:[#allocation2 + $0xb8] sm:$0xff]
    %1380 = vrot.lane.b32.xlu0 %v443, 127
    %v1381 = vpop.permute.xlu0 %1380
    %1382 = vrot.lane.b32.xlu0 %v447, 127
    %v1383 = vpop.permute.xlu0 %1382
    %1384 = vrot.lane.b32.xlu0 %v451, 127
    %v1385 = vpop.permute.xlu0 %1384
    %1386 = vrot.lane.b32.xlu0 %v455, 127
    %v1387 = vpop.permute.xlu0 %1386
    %1388 = vrot.lane.b32.xlu0 %v459, 127
    %v1389 = vpop.permute.xlu0 %1388
    %1390 = vrot.lane.b32.xlu0 %v463, 127
    %v1391 = vpop.permute.xlu0 %1390
    %1392 = vrot.lane.b32.xlu0 %v467, 127
    %v1393 = vpop.permute.xlu0 %1392
    %1394 = vrot.lane.b32.xlu0 %v471, 127
    %v1395 = vpop.permute.xlu0 %1394
    %1396 = vrot.lane.b32.xlu0 %v475, 127
    %v1397 = vpop.permute.xlu0 %1396
    %1398 = vrot.lane.b32.xlu0 %v479, 127
    %v1399 = vpop.permute.xlu0 %1398
    %1400 = vrot.lane.b32.xlu0 %v483, 127
    %v1401 = vpop.permute.xlu0 %1400
    %1402 = vrot.lane.b32.xlu0 %v487, 127
    %v1403 = vpop.permute.xlu0 %1402
    %1404 = vrot.lane.b32.xlu0 %v491, 127
    %v1405 = vpop.permute.xlu0 %1404
    %1406 = vrot.lane.b32.xlu0 %v495, 127
    %v1407 = vpop.permute.xlu0 %1406
    %1408 = vrot.lane.b32.xlu0 %v499, 127
    %v1409 = vpop.permute.xlu0 %1408
    %1410 = vrot.lane.b32.xlu0 %v503, 127
    %v1411 = vpop.permute.xlu0 %1410
    %1412 = vrot.lane.b32.xlu0 %v507, 127
    %v1413 = vpop.permute.xlu0 %1412
    %1414 = vrot.lane.b32.xlu0 %v511, 127
    %v1415 = vpop.permute.xlu0 %1414
    %1416 = vrot.lane.b32.xlu0 %v515, 127
    %v1417 = vpop.permute.xlu0 %1416
    %1418 = vrot.lane.b32.xlu0 %v519, 127
    %v1419 = vpop.permute.xlu0 %1418
    %1420 = vrot.lane.b32.xlu0 %v523, 127
    %v1421 = vpop.permute.xlu0 %1420
    %1422 = vrot.lane.b32.xlu0 %v527, 127
    %v1423 = vpop.permute.xlu0 %1422
    %1424 = vrot.lane.b32.xlu0 %v531, 127
    %v1425 = vpop.permute.xlu0 %1424
    %vm1426 = vcmask 1039360
    %v1427 = vsel %vm1426, %v1381, %v1383
    %v1428 = vsel %vm1426, %v1383, %v1385
    %v1429 = vsel %vm1426, %v1385, %v1387
    %v1430 = vsel %vm1426, %v1387, %v1389
    %v1431 = vsel %vm1426, %v1389, %v1391
    %v1432 = vsel %vm1426, %v1391, %v1393
    %v1433 = vsel %vm1426, %v1393, %v1395
    %v1434 = vsel %vm1426, %v1395, %v1397
    %v1435 = vsel %vm1426, %v1397, %v1399
    %v1436 = vsel %vm1426, %v1399, %v1401
    %v1437 = vsel %vm1426, %v1401, %v1403
    %v1438 = vsel %vm1426, %v1403, %v1405
    %v1439 = vsel %vm1426, %v1405, %v1407
    %v1440 = vsel %vm1426, %v1407, %v1409
    %v1441 = vsel %vm1426, %v1409, %v1411
    %v1442 = vsel %vm1426, %v1411, %v1413
    %v1443 = vsel %vm1426, %v1413, %v1415
    %v1444 = vsel %vm1426, %v1415, %v1417
    %v1445 = vsel %vm1426, %v1417, %v1419
    %v1446 = vsel %vm1426, %v1419, %v1421
    %v1447 = vsel %vm1426, %v1421, %v1423
    %v1448 = vsel %vm1426, %v1423, %v1425
    %vm1449 = vcmp.ne.s16.totalorder %v1381, 0
    %vm1450 = vcmp.ne.s16.totalorder %v1427, 0
    %vm1451 = vcmp.ne.s16.totalorder %v1428, 0
    %vm1452 = vcmp.ne.s16.totalorder %v1429, 0
    %vm1453 = vcmp.ne.s16.totalorder %v1430, 0
    %vm1454 = vcmp.ne.s16.totalorder %v1431, 0
    %vm1455 = vcmp.ne.s16.totalorder %v1432, 0
    %vm1456 = vcmp.ne.s16.totalorder %v1433, 0
    %vm1457 = vcmp.ne.s16.totalorder %v1434, 0
    %vm1458 = vcmp.ne.s16.totalorder %v1435, 0
    %vm1459 = vcmp.ne.s16.totalorder %v1436, 0
    %vm1460 = vcmp.ne.s16.totalorder %v1437, 0
    %vm1461 = vcmp.ne.s16.totalorder %v1438, 0
    %vm1462 = vcmp.ne.s16.totalorder %v1439, 0
    %vm1463 = vcmp.ne.s16.totalorder %v1440, 0
    %vm1464 = vcmp.ne.s16.totalorder %v1441, 0
    %vm1465 = vcmp.ne.s16.totalorder %v1442, 0
    %vm1466 = vcmp.ne.s16.totalorder %v1443, 0
    %vm1467 = vcmp.ne.s16.totalorder %v1444, 0
    %vm1468 = vcmp.ne.s16.totalorder %v1445, 0
    %vm1469 = vcmp.ne.s16.totalorder %v1446, 0
    %vm1470 = vcmp.ne.s16.totalorder %v1447, 0
    %vm1471 = vcmp.ne.s16.totalorder %v1448, 0
    %vm1472 = vcmp.ne.s16.totalorder %v1425, 0
    %v1473 = vsel %vm1449, %v1356, 0
    %v1474 = vsel %vm1450, %v1357, 0
    %v1475 = vsel %vm1451, %v1358, 0
    %v1476 = vsel %vm1452, %v1359, 0
    %v1477 = vsel %vm1453, %v1360, 0
    %v1478 = vsel %vm1454, %v1361, 0
    %v1479 = vsel %vm1455, %v1362, 0
    %v1480 = vsel %vm1456, %v1363, 0
    %v1481 = vsel %vm1457, %v1364, 0
    %v1482 = vsel %vm1458, %v1365, 0
    %v1483 = vsel %vm1459, %v1366, 0
    %v1484 = vsel %vm1460, %v1367, 0
    %v1485 = vsel %vm1461, %v1368, 0
    %v1486 = vsel %vm1462, %v1369, 0
    %v1487 = vsel %vm1463, %v1370, 0
    %v1488 = vsel %vm1464, %v1371, 0
    %v1489 = vsel %vm1465, %v1372, 0
    %v1490 = vsel %vm1466, %v1373, 0
    %v1491 = vsel %vm1467, %v1374, 0
    %v1492 = vsel %vm1468, %v1375, 0
    %v1493 = vsel %vm1469, %v1376, 0
    %v1494 = vsel %vm1470, %v1377, 0
    %v1495 = vsel %vm1471, %v1378, 0
    %v1496 = vsel %vm1472, %v1379, 0
    %1521 = vrot.lane.b32.xlu0 %v1473, 1
    %v1522 = vpop.permute.xlu0 %1521
    %1523 = vrot.lane.b32.xlu0 %v1474, 1
    %v1524 = vpop.permute.xlu0 %1523
    %1525 = vrot.lane.b32.xlu0 %v1475, 1
    %v1526 = vpop.permute.xlu0 %1525
    %1527 = vrot.lane.b32.xlu0 %v1476, 1
    %v1528 = vpop.permute.xlu0 %1527
    %1529 = vrot.lane.b32.xlu0 %v1477, 1
    %v1530 = vpop.permute.xlu0 %1529
    %1531 = vrot.lane.b32.xlu0 %v1478, 1
    %v1532 = vpop.permute.xlu0 %1531
    %1533 = vrot.lane.b32.xlu0 %v1479, 1
    %v1534 = vpop.permute.xlu0 %1533
    %1535 = vrot.lane.b32.xlu0 %v1480, 1
    %v1536 = vpop.permute.xlu0 %1535
    %1537 = vrot.lane.b32.xlu0 %v1481, 1
    %v1538 = vpop.permute.xlu0 %1537
    %1539 = vrot.lane.b32.xlu0 %v1482, 1
    %v1540 = vpop.permute.xlu0 %1539
    %1541 = vrot.lane.b32.xlu0 %v1483, 1
    %v1542 = vpop.permute.xlu0 %1541
    %1543 = vrot.lane.b32.xlu0 %v1484, 1
    %v1544 = vpop.permute.xlu0 %1543
    %1545 = vrot.lane.b32.xlu0 %v1485, 1
    %v1546 = vpop.permute.xlu0 %1545
    %1547 = vrot.lane.b32.xlu0 %v1486, 1
    %v1548 = vpop.permute.xlu0 %1547
    %1549 = vrot.lane.b32.xlu0 %v1487, 1
    %v1550 = vpop.permute.xlu0 %1549
    %1551 = vrot.lane.b32.xlu0 %v1488, 1
    %v1552 = vpop.permute.xlu0 %1551
    %1553 = vrot.lane.b32.xlu0 %v1489, 1
    %v1554 = vpop.permute.xlu0 %1553
    %1555 = vrot.lane.b32.xlu0 %v1490, 1
    %v1556 = vpop.permute.xlu0 %1555
    %1557 = vrot.lane.b32.xlu0 %v1491, 1
    %v1558 = vpop.permute.xlu0 %1557
    %1559 = vrot.lane.b32.xlu0 %v1492, 1
    %v1560 = vpop.permute.xlu0 %1559
    %1561 = vrot.lane.b32.xlu0 %v1493, 1
    %v1562 = vpop.permute.xlu0 %1561
    %1563 = vrot.lane.b32.xlu0 %v1494, 1
    %v1564 = vpop.permute.xlu0 %1563
    %1565 = vrot.lane.b32.xlu0 %v1495, 1
    %v1566 = vpop.permute.xlu0 %1565
    %1567 = vrot.lane.b32.xlu0 %v1496, 1
    %v1568 = vpop.permute.xlu0 %1567
    %vm1569 = vcmask 7168
    %v1570 = vsel %vm1569, %v1522, %v1524
    %v1571 = vsel %vm1569, %v1524, %v1526
    %v1572 = vsel %vm1569, %v1526, %v1528
    %v1573 = vsel %vm1569, %v1528, %v1530
    %v1574 = vsel %vm1569, %v1530, %v1532
    %v1575 = vsel %vm1569, %v1532, %v1534
    %v1576 = vsel %vm1569, %v1534, %v1536
    %v1577 = vsel %vm1569, %v1536, %v1538
    %v1578 = vsel %vm1569, %v1538, %v1540
    %v1579 = vsel %vm1569, %v1540, %v1542
    %v1580 = vsel %vm1569, %v1542, %v1544
    %v1581 = vsel %vm1569, %v1544, %v1546
    %v1582 = vsel %vm1569, %v1546, %v1548
    %v1583 = vsel %vm1569, %v1548, %v1550
    %v1584 = vsel %vm1569, %v1550, %v1552
    %v1585 = vsel %vm1569, %v1552, %v1554
    %v1586 = vsel %vm1569, %v1554, %v1556
    %v1587 = vsel %vm1569, %v1556, %v1558
    %v1588 = vsel %vm1569, %v1558, %v1560
    %v1589 = vsel %vm1569, %v1560, %v1562
    %v1590 = vsel %vm1569, %v1562, %v1564
    %v1591 = vsel %vm1569, %v1564, %v1566
    %v1592 = vsel %vm1569, %v1566, %v1568
    %1616 = vst [vmem:[#allocation3 + $0x228] sm:$0xff] %v1570
    %1617 = vst [vmem:[#allocation3 + $0x230] sm:$0xff] %v1571
    %1618 = vst [vmem:[#allocation3 + $0x238] sm:$0xff] %v1572
    %1619 = vst [vmem:[#allocation3 + $0x240] sm:$0xff] %v1573
    %1620 = vst [vmem:[#allocation3 + $0x248] sm:$0xff] %v1574
    %1621 = vst [vmem:[#allocation3 + $0x250] sm:$0xff] %v1575
    %1622 = vst [vmem:[#allocation3 + $0x258] sm:$0xff] %v1576
    %1623 = vst [vmem:[#allocation3 + $0x260] sm:$0xff] %v1577
    %1624 = vst [vmem:[#allocation3 + $0x268] sm:$0xff] %v1578
    %1625 = vst [vmem:[#allocation3 + $0x270] sm:$0xff] %v1579
    %1626 = vst [vmem:[#allocation3 + $0x278] sm:$0xff] %v1580
    %1627 = vst [vmem:[#allocation3 + $0x280] sm:$0xff] %v1581
    %1628 = vst [vmem:[#allocation3 + $0x288] sm:$0xff] %v1582
    %1629 = vst [vmem:[#allocation3 + $0x290] sm:$0xff] %v1583
    %1630 = vst [vmem:[#allocation3 + $0x298] sm:$0xff] %v1584
    %1631 = vst [vmem:[#allocation3 + $0x2a0] sm:$0xff] %v1585
    %1632 = vst [vmem:[#allocation3 + $0x2a8] sm:$0xff] %v1586
    %1633 = vst [vmem:[#allocation3 + $0x2b0] sm:$0xff] %v1587
    %1634 = vst [vmem:[#allocation3 + $0x2b8] sm:$0xff] %v1588
    %1635 = vst [vmem:[#allocation3 + $0x2c0] sm:$0xff] %v1589
    %1636 = vst [vmem:[#allocation3 + $0x2c8] sm:$0xff] %v1590
    %1637 = vst [vmem:[#allocation3 + $0x2d0] sm:$0xff] %v1591
    %1638 = vst.msk [vmem:[#allocation3 + $0x2d8] sm:$0xff] %vm50, %v1592
    %v1639 = vld [vmem:[#allocation2 + $0x8] sm:$0xff]
    %v1640 = vld [vmem:[#allocation2 + $0x10] sm:$0xff]
    %v1641 = vld [vmem:[#allocation2 + $0x18] sm:$0xff]
    %v1642 = vld [vmem:[#allocation2 + $0x20] sm:$0xff]
    %v1643 = vld [vmem:[#allocation2 + $0x28] sm:$0xff]
    %v1644 = vld [vmem:[#allocation2 + $0x30] sm:$0xff]
    %v1645 = vld [vmem:[#allocation2 + $0x38] sm:$0xff]
    %v1646 = vld [vmem:[#allocation2 + $0x40] sm:$0xff]
    %v1647 = vld [vmem:[#allocation2 + $0x48] sm:$0xff]
    %v1648 = vld [vmem:[#allocation2 + $0x50] sm:$0xff]
    %v1649 = vld [vmem:[#allocation2 + $0x58] sm:$0xff]
    %v1650 = vld [vmem:[#allocation2 + $0x60] sm:$0xff]
    %v1651 = vld [vmem:[#allocation2 + $0x68] sm:$0xff]
    %v1652 = vld [vmem:[#allocation2 + $0x70] sm:$0xff]
    %v1653 = vld [vmem:[#allocation2 + $0x78] sm:$0xff]
    %v1654 = vld [vmem:[#allocation2 + $0x80] sm:$0xff]
    %v1655 = vld [vmem:[#allocation2 + $0x88] sm:$0xff]
    %v1656 = vld [vmem:[#allocation2 + $0x90] sm:$0xff]
    %v1657 = vld [vmem:[#allocation2 + $0x98] sm:$0xff]
    %v1658 = vld [vmem:[#allocation2 + $0xa0] sm:$0xff]
    %v1659 = vld [vmem:[#allocation2 + $0xa8] sm:$0xff]
    %v1660 = vld [vmem:[#allocation2 + $0xb0] sm:$0xff]
    %v1661 = vld [vmem:[#allocation2 + $0xb8] sm:$0xff]
    %1662 = vst [vmem:[#allocation3 + $0x2e0] sm:$0xff] %v1639
    %1663 = vst [vmem:[#allocation3 + $0x2e8] sm:$0xff] %v1640
    %1664 = vst [vmem:[#allocation3 + $0x2f0] sm:$0xff] %v1641
    %1665 = vst [vmem:[#allocation3 + $0x2f8] sm:$0xff] %v1642
    %1666 = vst [vmem:[#allocation3 + $0x300] sm:$0xff] %v1643
    %1667 = vst [vmem:[#allocation3 + $0x308] sm:$0xff] %v1644
    %1668 = vst [vmem:[#allocation3 + $0x310] sm:$0xff] %v1645
    %1669 = vst [vmem:[#allocation3 + $0x318] sm:$0xff] %v1646
    %1670 = vst [vmem:[#allocation3 + $0x320] sm:$0xff] %v1647
    %1671 = vst [vmem:[#allocation3 + $0x328] sm:$0xff] %v1648
    %1672 = vst [vmem:[#allocation3 + $0x330] sm:$0xff] %v1649
    %1673 = vst [vmem:[#allocation3 + $0x338] sm:$0xff] %v1650
    %1674 = vst [vmem:[#allocation3 + $0x340] sm:$0xff] %v1651
    %1675 = vst [vmem:[#allocation3 + $0x348] sm:$0xff] %v1652
    %1676 = vst [vmem:[#allocation3 + $0x350] sm:$0xff] %v1653
    %1677 = vst [vmem:[#allocation3 + $0x358] sm:$0xff] %v1654
    %1678 = vst [vmem:[#allocation3 + $0x360] sm:$0xff] %v1655
    %1679 = vst [vmem:[#allocation3 + $0x368] sm:$0xff] %v1656
    %1680 = vst [vmem:[#allocation3 + $0x370] sm:$0xff] %v1657
    %1681 = vst [vmem:[#allocation3 + $0x378] sm:$0xff] %v1658
    %1682 = vst [vmem:[#allocation3 + $0x380] sm:$0xff] %v1659
    %1683 = vst [vmem:[#allocation3 + $0x388] sm:$0xff] %v1660
    %1684 = vst.msk [vmem:[#allocation3 + $0x390] sm:$0xff] %vm50, %v1661
    %v1685 = vld [vmem:[#allocation2 + $0x8] sm:$0xff]
    %v1686 = vld [vmem:[#allocation2 + $0x10] sm:$0xff]
    %v1687 = vld [vmem:[#allocation2 + $0x18] sm:$0xff]
    %v1688 = vld [vmem:[#allocation2 + $0x20] sm:$0xff]
    %v1689 = vld [vmem:[#allocation2 + $0x28] sm:$0xff]
    %v1690 = vld [vmem:[#allocation2 + $0x30] sm:$0xff]
    %v1691 = vld [vmem:[#allocation2 + $0x38] sm:$0xff]
    %v1692 = vld [vmem:[#allocation2 + $0x40] sm:$0xff]
    %v1693 = vld [vmem:[#allocation2 + $0x48] sm:$0xff]
    %v1694 = vld [vmem:[#allocation2 + $0x50] sm:$0xff]
    %v1695 = vld [vmem:[#allocation2 + $0x58] sm:$0xff]
    %v1696 = vld [vmem:[#allocation2 + $0x60] sm:$0xff]
    %v1697 = vld [vmem:[#allocation2 + $0x68] sm:$0xff]
    %v1698 = vld [vmem:[#allocation2 + $0x70] sm:$0xff]
    %v1699 = vld [vmem:[#allocation2 + $0x78] sm:$0xff]
    %v1700 = vld [vmem:[#allocation2 + $0x80] sm:$0xff]
    %v1701 = vld [vmem:[#allocation2 + $0x88] sm:$0xff]
    %v1702 = vld [vmem:[#allocation2 + $0x90] sm:$0xff]
    %v1703 = vld [vmem:[#allocation2 + $0x98] sm:$0xff]
    %v1704 = vld [vmem:[#allocation2 + $0xa0] sm:$0xff]
    %v1705 = vld [vmem:[#allocation2 + $0xa8] sm:$0xff]
    %v1706 = vld [vmem:[#allocation2 + $0xb0] sm:$0xff]
    %v1707 = vld [vmem:[#allocation2 + $0xb8] sm:$0xff]
    %1708 = vrot.lane.b32.xlu0 %v1008, 1
    %v1709 = vpop.permute.xlu0 %1708
    %1710 = vrot.lane.b32.xlu0 %v1012, 1
    %v1711 = vpop.permute.xlu0 %1710
    %1712 = vrot.lane.b32.xlu0 %v1016, 1
    %v1713 = vpop.permute.xlu0 %1712
    %1714 = vrot.lane.b32.xlu0 %v1020, 1
    %v1715 = vpop.permute.xlu0 %1714
    %1716 = vrot.lane.b32.xlu0 %v1024, 1
    %v1717 = vpop.permute.xlu0 %1716
    %1718 = vrot.lane.b32.xlu0 %v1028, 1
    %v1719 = vpop.permute.xlu0 %1718
    %1720 = vrot.lane.b32.xlu0 %v1032, 1
    %v1721 = vpop.permute.xlu0 %1720
    %1722 = vrot.lane.b32.xlu0 %v1036, 1
    %v1723 = vpop.permute.xlu0 %1722
    %1724 = vrot.lane.b32.xlu0 %v1040, 1
    %v1725 = vpop.permute.xlu0 %1724
    %1726 = vrot.lane.b32.xlu0 %v1044, 1
    %v1727 = vpop.permute.xlu0 %1726
    %1728 = vrot.lane.b32.xlu0 %v1048, 1
    %v1729 = vpop.permute.xlu0 %1728
    %1730 = vrot.lane.b32.xlu0 %v1052, 1
    %v1731 = vpop.permute.xlu0 %1730
    %1732 = vrot.lane.b32.xlu0 %v1056, 1
    %v1733 = vpop.permute.xlu0 %1732
    %1734 = vrot.lane.b32.xlu0 %v1060, 1
    %v1735 = vpop.permute.xlu0 %1734
    %1736 = vrot.lane.b32.xlu0 %v1064, 1
    %v1737 = vpop.permute.xlu0 %1736
    %1738 = vrot.lane.b32.xlu0 %v1068, 1
    %v1739 = vpop.permute.xlu0 %1738
    %1740 = vrot.lane.b32.xlu0 %v1072, 1
    %v1741 = vpop.permute.xlu0 %1740
    %1742 = vrot.lane.b32.xlu0 %v1076, 1
    %v1743 = vpop.permute.xlu0 %1742
    %1744 = vrot.lane.b32.xlu0 %v1080, 1
    %v1745 = vpop.permute.xlu0 %1744
    %1746 = vrot.lane.b32.xlu0 %v1084, 1
    %v1747 = vpop.permute.xlu0 %1746
    %1748 = vrot.lane.b32.xlu0 %v1088, 1
    %v1749 = vpop.permute.xlu0 %1748
    %1750 = vrot.lane.b32.xlu0 %v1092, 1
    %v1751 = vpop.permute.xlu0 %1750
    %1752 = vrot.lane.b32.xlu0 %v1096, 1
    %v1753 = vpop.permute.xlu0 %1752
    %v1754 = vsel %vm1569, %v1709, %v1711
    %v1755 = vsel %vm1569, %v1711, %v1713
    %v1756 = vsel %vm1569, %v1713, %v1715
    %v1757 = vsel %vm1569, %v1715, %v1717
    %v1758 = vsel %vm1569, %v1717, %v1719
    %v1759 = vsel %vm1569, %v1719, %v1721
    %v1760 = vsel %vm1569, %v1721, %v1723
    %v1761 = vsel %vm1569, %v1723, %v1725
    %v1762 = vsel %vm1569, %v1725, %v1727
    %v1763 = vsel %vm1569, %v1727, %v1729
    %v1764 = vsel %vm1569, %v1729, %v1731
    %v1765 = vsel %vm1569, %v1731, %v1733
    %v1766 = vsel %vm1569, %v1733, %v1735
    %v1767 = vsel %vm1569, %v1735, %v1737
    %v1768 = vsel %vm1569, %v1737, %v1739
    %v1769 = vsel %vm1569, %v1739, %v1741
    %v1770 = vsel %vm1569, %v1741, %v1743
    %v1771 = vsel %vm1569, %v1743, %v1745
    %v1772 = vsel %vm1569, %v1745, %v1747
    %v1773 = vsel %vm1569, %v1747, %v1749
    %v1774 = vsel %vm1569, %v1749, %v1751
    %v1775 = vsel %vm1569, %v1751, %v1753
    %vm1776 = vcmp.ne.s16.totalorder %v1709, 0
    %vm1777 = vcmp.ne.s16.totalorder %v1754, 0
    %vm1778 = vcmp.ne.s16.totalorder %v1755, 0
    %vm1779 = vcmp.ne.s16.totalorder %v1756, 0
    %vm1780 = vcmp.ne.s16.totalorder %v1757, 0
    %vm1781 = vcmp.ne.s16.totalorder %v1758, 0
    %vm1782 = vcmp.ne.s16.totalorder %v1759, 0
    %vm1783 = vcmp.ne.s16.totalorder %v1760, 0
    %vm1784 = vcmp.ne.s16.totalorder %v1761, 0
    %vm1785 = vcmp.ne.s16.totalorder %v1762, 0
    %vm1786 = vcmp.ne.s16.totalorder %v1763, 0
    %vm1787 = vcmp.ne.s16.totalorder %v1764, 0
    %vm1788 = vcmp.ne.s16.totalorder %v1765, 0
    %vm1789 = vcmp.ne.s16.totalorder %v1766, 0
    %vm1790 = vcmp.ne.s16.totalorder %v1767, 0
    %vm1791 = vcmp.ne.s16.totalorder %v1768, 0
    %vm1792 = vcmp.ne.s16.totalorder %v1769, 0
    %vm1793 = vcmp.ne.s16.totalorder %v1770, 0
    %vm1794 = vcmp.ne.s16.totalorder %v1771, 0
    %vm1795 = vcmp.ne.s16.totalorder %v1772, 0
    %vm1796 = vcmp.ne.s16.totalorder %v1773, 0
    %vm1797 = vcmp.ne.s16.totalorder %v1774, 0
    %vm1798 = vcmp.ne.s16.totalorder %v1775, 0
    %v1799 = vsel %vm1776, %v1685, 0
    %v1800 = vsel %vm1777, %v1686, 0
    %v1801 = vsel %vm1778, %v1687, 0
    %v1802 = vsel %vm1779, %v1688, 0
    %v1803 = vsel %vm1780, %v1689, 0
    %v1804 = vsel %vm1781, %v1690, 0
    %v1805 = vsel %vm1782, %v1691, 0
    %v1806 = vsel %vm1783, %v1692, 0
    %v1807 = vsel %vm1784, %v1693, 0
    %v1808 = vsel %vm1785, %v1694, 0
    %v1809 = vsel %vm1786, %v1695, 0
    %v1810 = vsel %vm1787, %v1696, 0
    %v1811 = vsel %vm1788, %v1697, 0
    %v1812 = vsel %vm1789, %v1698, 0
    %v1813 = vsel %vm1790, %v1699, 0
    %v1814 = vsel %vm1791, %v1700, 0
    %v1815 = vsel %vm1792, %v1701, 0
    %v1816 = vsel %vm1793, %v1702, 0
    %v1817 = vsel %vm1794, %v1703, 0
    %v1818 = vsel %vm1795, %v1704, 0
    %v1819 = vsel %vm1796, %v1705, 0
    %v1820 = vsel %vm1797, %v1706, 0
    %v1821 = vsel %vm1798, %v1707, 0
    %1845 = vrot.lane.b32.xlu0 %v1799, 127
    %v1846 = vpop.permute.xlu0 %1845
    %1847 = vrot.lane.b32.xlu0 %v1800, 127
    %v1848 = vpop.permute.xlu0 %1847
    %1849 = vrot.lane.b32.xlu0 %v1801, 127
    %v1850 = vpop.permute.xlu0 %1849
    %1851 = vrot.lane.b32.xlu0 %v1802, 127
    %v1852 = vpop.permute.xlu0 %1851
    %1853 = vrot.lane.b32.xlu0 %v1803, 127
    %v1854 = vpop.permute.xlu0 %1853
    %1855 = vrot.lane.b32.xlu0 %v1804, 127
    %v1856 = vpop.permute.xlu0 %1855
    %1857 = vrot.lane.b32.xlu0 %v1805, 127
    %v1858 = vpop.permute.xlu0 %1857
    %1859 = vrot.lane.b32.xlu0 %v1806, 127
    %v1860 = vpop.permute.xlu0 %1859
    %1861 = vrot.lane.b32.xlu0 %v1807, 127
    %v1862 = vpop.permute.xlu0 %1861
    %1863 = vrot.lane.b32.xlu0 %v1808, 127
    %v1864 = vpop.permute.xlu0 %1863
    %1865 = vrot.lane.b32.xlu0 %v1809, 127
    %v1866 = vpop.permute.xlu0 %1865
    %1867 = vrot.lane.b32.xlu0 %v1810, 127
    %v1868 = vpop.permute.xlu0 %1867
    %1869 = vrot.lane.b32.xlu0 %v1811, 127
    %v1870 = vpop.permute.xlu0 %1869
    %1871 = vrot.lane.b32.xlu0 %v1812, 127
    %v1872 = vpop.permute.xlu0 %1871
    %1873 = vrot.lane.b32.xlu0 %v1813, 127
    %v1874 = vpop.permute.xlu0 %1873
    %1875 = vrot.lane.b32.xlu0 %v1814, 127
    %v1876 = vpop.permute.xlu0 %1875
    %1877 = vrot.lane.b32.xlu0 %v1815, 127
    %v1878 = vpop.permute.xlu0 %1877
    %1879 = vrot.lane.b32.xlu0 %v1816, 127
    %v1880 = vpop.permute.xlu0 %1879
    %1881 = vrot.lane.b32.xlu0 %v1817, 127
    %v1882 = vpop.permute.xlu0 %1881
    %1883 = vrot.lane.b32.xlu0 %v1818, 127
    %v1884 = vpop.permute.xlu0 %1883
    %1885 = vrot.lane.b32.xlu0 %v1819, 127
    %v1886 = vpop.permute.xlu0 %1885
    %1887 = vrot.lane.b32.xlu0 %v1820, 127
    %v1888 = vpop.permute.xlu0 %1887
    %1889 = vrot.lane.b32.xlu0 %v1821, 127
    %v1890 = vpop.permute.xlu0 %1889
    %v1891 = vsel %vm1426, %v1846, %v1848
    %v1892 = vsel %vm1426, %v1848, %v1850
    %v1893 = vsel %vm1426, %v1850, %v1852
    %v1894 = vsel %vm1426, %v1852, %v1854
    %v1895 = vsel %vm1426, %v1854, %v1856
    %v1896 = vsel %vm1426, %v1856, %v1858
    %v1897 = vsel %vm1426, %v1858, %v1860
    %v1898 = vsel %vm1426, %v1860, %v1862
    %v1899 = vsel %vm1426, %v1862, %v1864
    %v1900 = vsel %vm1426, %v1864, %v1866
    %v1901 = vsel %vm1426, %v1866, %v1868
    %v1902 = vsel %vm1426, %v1868, %v1870
    %v1903 = vsel %vm1426, %v1870, %v1872
    %v1904 = vsel %vm1426, %v1872, %v1874
    %v1905 = vsel %vm1426, %v1874, %v1876
    %v1906 = vsel %vm1426, %v1876, %v1878
    %v1907 = vsel %vm1426, %v1878, %v1880
    %v1908 = vsel %vm1426, %v1880, %v1882
    %v1909 = vsel %vm1426, %v1882, %v1884
    %v1910 = vsel %vm1426, %v1884, %v1886
    %v1911 = vsel %vm1426, %v1886, %v1888
    %v1912 = vsel %vm1426, %v1888, %v1890
    %1936 = vst [vmem:[#allocation3 + $0x398] sm:$0xff] %v1891
    %1937 = vst [vmem:[#allocation3 + $0x3a0] sm:$0xff] %v1892
    %1938 = vst [vmem:[#allocation3 + $0x3a8] sm:$0xff] %v1893
    %1939 = vst [vmem:[#allocation3 + $0x3b0] sm:$0xff] %v1894
    %1940 = vst [vmem:[#allocation3 + $0x3b8] sm:$0xff] %v1895
    %1941 = vst [vmem:[#allocation3 + $0x3c0] sm:$0xff] %v1896
    %1942 = vst [vmem:[#allocation3 + $0x3c8] sm:$0xff] %v1897
    %1943 = vst [vmem:[#allocation3 + $0x3d0] sm:$0xff] %v1898
    %1944 = vst [vmem:[#allocation3 + $0x3d8] sm:$0xff] %v1899
    %1945 = vst [vmem:[#allocation3 + $0x3e0] sm:$0xff] %v1900
    %1946 = vst [vmem:[#allocation3 + $0x3e8] sm:$0xff] %v1901
    %1947 = vst [vmem:[#allocation3 + $0x3f0] sm:$0xff] %v1902
    %1948 = vst [vmem:[#allocation3 + $0x3f8] sm:$0xff] %v1903
    %1949 = vst [vmem:[#allocation3 + $0x400] sm:$0xff] %v1904
    %1950 = vst [vmem:[#allocation3 + $0x408] sm:$0xff] %v1905
    %1951 = vst [vmem:[#allocation3 + $0x410] sm:$0xff] %v1906
    %1952 = vst [vmem:[#allocation3 + $0x418] sm:$0xff] %v1907
    %1953 = vst [vmem:[#allocation3 + $0x420] sm:$0xff] %v1908
    %1954 = vst [vmem:[#allocation3 + $0x428] sm:$0xff] %v1909
    %1955 = vst [vmem:[#allocation3 + $0x430] sm:$0xff] %v1910
    %1956 = vst [vmem:[#allocation3 + $0x438] sm:$0xff] %v1911
    %1957 = vst [vmem:[#allocation3 + $0x440] sm:$0xff] %v1912
    %1958 = vst.msk [vmem:[#allocation3 + $0x448] sm:$0xff] %vm50, %v1890
    %v1959 = vld [vmem:[#allocation2 + $0x8] sm:$0xff]
    %v1960 = vld [vmem:[#allocation2 + $0x10] sm:$0xff]
    %v1961 = vld [vmem:[#allocation2 + $0x18] sm:$0xff]
    %v1962 = vld [vmem:[#allocation2 + $0x20] sm:$0xff]
    %v1963 = vld [vmem:[#allocation2 + $0x28] sm:$0xff]
    %v1964 = vld [vmem:[#allocation2 + $0x30] sm:$0xff]
    %v1965 = vld [vmem:[#allocation2 + $0x38] sm:$0xff]
    %v1966 = vld [vmem:[#allocation2 + $0x40] sm:$0xff]
    %v1967 = vld [vmem:[#allocation2 + $0x48] sm:$0xff]
    %v1968 = vld [vmem:[#allocation2 + $0x50] sm:$0xff]
    %v1969 = vld [vmem:[#allocation2 + $0x58] sm:$0xff]
    %v1970 = vld [vmem:[#allocation2 + $0x60] sm:$0xff]
    %v1971 = vld [vmem:[#allocation2 + $0x68] sm:$0xff]
    %v1972 = vld [vmem:[#allocation2 + $0x70] sm:$0xff]
    %v1973 = vld [vmem:[#allocation2 + $0x78] sm:$0xff]
    %v1974 = vld [vmem:[#allocation2 + $0x80] sm:$0xff]
    %v1975 = vld [vmem:[#allocation2 + $0x88] sm:$0xff]
    %v1976 = vld [vmem:[#allocation2 + $0x90] sm:$0xff]
    %v1977 = vld [vmem:[#allocation2 + $0x98] sm:$0xff]
    %v1978 = vld [vmem:[#allocation2 + $0xa0] sm:$0xff]
    %v1979 = vld [vmem:[#allocation2 + $0xa8] sm:$0xff]
    %v1980 = vld [vmem:[#allocation2 + $0xb0] sm:$0xff]
    %v1981 = vld [vmem:[#allocation2 + $0xb8] sm:$0xff]
    %v1982 = vld [vmem:[#allocation2 + $0xc0] sm:$0xff]
    %1983 = vrot.lane.b32.xlu0 %v443, 53
    %v1984 = vpop.permute.xlu0 %1983
    %1985 = vrot.lane.b32.xlu0 %v447, 53
    %v1986 = vpop.permute.xlu0 %1985
    %1987 = vrot.lane.b32.xlu0 %v451, 53
    %v1988 = vpop.permute.xlu0 %1987
    %1989 = vrot.lane.b32.xlu0 %v455, 53
    %v1990 = vpop.permute.xlu0 %1989
    %1991 = vrot.lane.b32.xlu0 %v459, 53
    %v1992 = vpop.permute.xlu0 %1991
    %1993 = vrot.lane.b32.xlu0 %v463, 53
    %v1994 = vpop.permute.xlu0 %1993
    %1995 = vrot.lane.b32.xlu0 %v467, 53
    %v1996 = vpop.permute.xlu0 %1995
    %1997 = vrot.lane.b32.xlu0 %v471, 53
    %v1998 = vpop.permute.xlu0 %1997
    %1999 = vrot.lane.b32.xlu0 %v475, 53
    %v2000 = vpop.permute.xlu0 %1999
    %2001 = vrot.lane.b32.xlu0 %v479, 53
    %v2002 = vpop.permute.xlu0 %2001
    %2003 = vrot.lane.b32.xlu0 %v483, 53
    %v2004 = vpop.permute.xlu0 %2003
    %2005 = vrot.lane.b32.xlu0 %v487, 53
    %v2006 = vpop.permute.xlu0 %2005
    %2007 = vrot.lane.b32.xlu0 %v491, 53
    %v2008 = vpop.permute.xlu0 %2007
    %2009 = vrot.lane.b32.xlu0 %v495, 53
    %v2010 = vpop.permute.xlu0 %2009
    %2011 = vrot.lane.b32.xlu0 %v499, 53
    %v2012 = vpop.permute.xlu0 %2011
    %2013 = vrot.lane.b32.xlu0 %v503, 53
    %v2014 = vpop.permute.xlu0 %2013
    %2015 = vrot.lane.b32.xlu0 %v507, 53
    %v2016 = vpop.permute.xlu0 %2015
    %2017 = vrot.lane.b32.xlu0 %v511, 53
    %v2018 = vpop.permute.xlu0 %2017
    %2019 = vrot.lane.b32.xlu0 %v515, 53
    %v2020 = vpop.permute.xlu0 %2019
    %2021 = vrot.lane.b32.xlu0 %v519, 53
    %v2022 = vpop.permute.xlu0 %2021
    %2023 = vrot.lane.b32.xlu0 %v523, 53
    %v2024 = vpop.permute.xlu0 %2023
    %2025 = vrot.lane.b32.xlu0 %v527, 53
    %v2026 = vpop.permute.xlu0 %2025
    %2027 = vrot.lane.b32.xlu0 %v531, 53
    %v2028 = vpop.permute.xlu0 %2027
    %v2029 = vsel %vm1286, %v1984, %v1986
    %v2030 = vsel %vm1286, %v1986, %v1988
    %v2031 = vsel %vm1286, %v1988, %v1990
    %v2032 = vsel %vm1286, %v1990, %v1992
    %v2033 = vsel %vm1286, %v1992, %v1994
    %v2034 = vsel %vm1286, %v1994, %v1996
    %v2035 = vsel %vm1286, %v1996, %v1998
    %v2036 = vsel %vm1286, %v1998, %v2000
    %v2037 = vsel %vm1286, %v2000, %v2002
    %v2038 = vsel %vm1286, %v2002, %v2004
    %v2039 = vsel %vm1286, %v2004, %v2006
    %v2040 = vsel %vm1286, %v2006, %v2008
    %v2041 = vsel %vm1286, %v2008, %v2010
    %v2042 = vsel %vm1286, %v2010, %v2012
    %v2043 = vsel %vm1286, %v2012, %v2014
    %v2044 = vsel %vm1286, %v2014, %v2016
    %v2045 = vsel %vm1286, %v2016, %v2018
    %v2046 = vsel %vm1286, %v2018, %v2020
    %v2047 = vsel %vm1286, %v2020, %v2022
    %v2048 = vsel %vm1286, %v2022, %v2024
    %v2049 = vsel %vm1286, %v2024, %v2026
    %v2050 = vsel %vm1286, %v2026, %v2028
    %vm2051 = vcmp.ne.s16.totalorder %v1984, 0
    %vm2052 = vcmp.ne.s16.totalorder %v2029, 0
    %vm2053 = vcmp.ne.s16.totalorder %v2030, 0
    %vm2054 = vcmp.ne.s16.totalorder %v2031, 0
    %vm2055 = vcmp.ne.s16.totalorder %v2032, 0
    %vm2056 = vcmp.ne.s16.totalorder %v2033, 0
    %vm2057 = vcmp.ne.s16.totalorder %v2034, 0
    %vm2058 = vcmp.ne.s16.totalorder %v2035, 0
    %vm2059 = vcmp.ne.s16.totalorder %v2036, 0
    %vm2060 = vcmp.ne.s16.totalorder %v2037, 0
    %vm2061 = vcmp.ne.s16.totalorder %v2038, 0
    %vm2062 = vcmp.ne.s16.totalorder %v2039, 0
    %vm2063 = vcmp.ne.s16.totalorder %v2040, 0
    %vm2064 = vcmp.ne.s16.totalorder %v2041, 0
    %vm2065 = vcmp.ne.s16.totalorder %v2042, 0
    %vm2066 = vcmp.ne.s16.totalorder %v2043, 0
    %vm2067 = vcmp.ne.s16.totalorder %v2044, 0
    %vm2068 = vcmp.ne.s16.totalorder %v2045, 0
    %vm2069 = vcmp.ne.s16.totalorder %v2046, 0
    %vm2070 = vcmp.ne.s16.totalorder %v2047, 0
    %vm2071 = vcmp.ne.s16.totalorder %v2048, 0
    %vm2072 = vcmp.ne.s16.totalorder %v2049, 0
    %vm2073 = vcmp.ne.s16.totalorder %v2050, 0
    %vm2074 = vcmp.ne.s16.totalorder %v2028, 0
    %v2075 = vsel %vm2051, %v1959, 0
    %v2076 = vsel %vm2052, %v1960, 0
    %v2077 = vsel %vm2053, %v1961, 0
    %v2078 = vsel %vm2054, %v1962, 0
    %v2079 = vsel %vm2055, %v1963, 0
    %v2080 = vsel %vm2056, %v1964, 0
    %v2081 = vsel %vm2057, %v1965, 0
    %v2082 = vsel %vm2058, %v1966, 0
    %v2083 = vsel %vm2059, %v1967, 0
    %v2084 = vsel %vm2060, %v1968, 0
    %v2085 = vsel %vm2061, %v1969, 0
    %v2086 = vsel %vm2062, %v1970, 0
    %v2087 = vsel %vm2063, %v1971, 0
    %v2088 = vsel %vm2064, %v1972, 0
    %v2089 = vsel %vm2065, %v1973, 0
    %v2090 = vsel %vm2066, %v1974, 0
    %v2091 = vsel %vm2067, %v1975, 0
    %v2092 = vsel %vm2068, %v1976, 0
    %v2093 = vsel %vm2069, %v1977, 0
    %v2094 = vsel %vm2070, %v1978, 0
    %v2095 = vsel %vm2071, %v1979, 0
    %v2096 = vsel %vm2072, %v1980, 0
    %v2097 = vsel %vm2073, %v1981, 0
    %v2098 = vsel %vm2074, %v1982, 0
    %2123 = vrot.lane.b32.xlu0 %v2075, 75
    %v2124 = vpop.permute.xlu0 %2123
    %2125 = vrot.lane.b32.xlu0 %v2076, 75
    %v2126 = vpop.permute.xlu0 %2125
    %2127 = vrot.lane.b32.xlu0 %v2077, 75
    %v2128 = vpop.permute.xlu0 %2127
    %2129 = vrot.lane.b32.xlu0 %v2078, 75
    %v2130 = vpop.permute.xlu0 %2129
    %2131 = vrot.lane.b32.xlu0 %v2079, 75
    %v2132 = vpop.permute.xlu0 %2131
    %2133 = vrot.lane.b32.xlu0 %v2080, 75
    %v2134 = vpop.permute.xlu0 %2133
    %2135 = vrot.lane.b32.xlu0 %v2081, 75
    %v2136 = vpop.permute.xlu0 %2135
    %2137 = vrot.lane.b32.xlu0 %v2082, 75
    %v2138 = vpop.permute.xlu0 %2137
    %2139 = vrot.lane.b32.xlu0 %v2083, 75
    %v2140 = vpop.permute.xlu0 %2139
    %2141 = vrot.lane.b32.xlu0 %v2084, 75
    %v2142 = vpop.permute.xlu0 %2141
    %2143 = vrot.lane.b32.xlu0 %v2085, 75
    %v2144 = vpop.permute.xlu0 %2143
    %2145 = vrot.lane.b32.xlu0 %v2086, 75
    %v2146 = vpop.permute.xlu0 %2145
    %2147 = vrot.lane.b32.xlu0 %v2087, 75
    %v2148 = vpop.permute.xlu0 %2147
    %2149 = vrot.lane.b32.xlu0 %v2088, 75
    %v2150 = vpop.permute.xlu0 %2149
    %2151 = vrot.lane.b32.xlu0 %v2089, 75
    %v2152 = vpop.permute.xlu0 %2151
    %2153 = vrot.lane.b32.xlu0 %v2090, 75
    %v2154 = vpop.permute.xlu0 %2153
    %2155 = vrot.lane.b32.xlu0 %v2091, 75
    %v2156 = vpop.permute.xlu0 %2155
    %2157 = vrot.lane.b32.xlu0 %v2092, 75
    %v2158 = vpop.permute.xlu0 %2157
    %2159 = vrot.lane.b32.xlu0 %v2093, 75
    %v2160 = vpop.permute.xlu0 %2159
    %2161 = vrot.lane.b32.xlu0 %v2094, 75
    %v2162 = vpop.permute.xlu0 %2161
    %2163 = vrot.lane.b32.xlu0 %v2095, 75
    %v2164 = vpop.permute.xlu0 %2163
    %2165 = vrot.lane.b32.xlu0 %v2096, 75
    %v2166 = vpop.permute.xlu0 %2165
    %2167 = vrot.lane.b32.xlu0 %v2097, 75
    %v2168 = vpop.permute.xlu0 %2167
    %2169 = vrot.lane.b32.xlu0 %v2098, 75
    %v2170 = vpop.permute.xlu0 %2169
    %v2171 = vsel %vm1143, %v2124, %v2126
    %v2172 = vsel %vm1143, %v2126, %v2128
    %v2173 = vsel %vm1143, %v2128, %v2130
    %v2174 = vsel %vm1143, %v2130, %v2132
    %v2175 = vsel %vm1143, %v2132, %v2134
    %v2176 = vsel %vm1143, %v2134, %v2136
    %v2177 = vsel %vm1143, %v2136, %v2138
    %v2178 = vsel %vm1143, %v2138, %v2140
    %v2179 = vsel %vm1143, %v2140, %v2142
    %v2180 = vsel %vm1143, %v2142, %v2144
    %v2181 = vsel %vm1143, %v2144, %v2146
    %v2182 = vsel %vm1143, %v2146, %v2148
    %v2183 = vsel %vm1143, %v2148, %v2150
    %v2184 = vsel %vm1143, %v2150, %v2152
    %v2185 = vsel %vm1143, %v2152, %v2154
    %v2186 = vsel %vm1143, %v2154, %v2156
    %v2187 = vsel %vm1143, %v2156, %v2158
    %v2188 = vsel %vm1143, %v2158, %v2160
    %v2189 = vsel %vm1143, %v2160, %v2162
    %v2190 = vsel %vm1143, %v2162, %v2164
    %v2191 = vsel %vm1143, %v2164, %v2166
    %v2192 = vsel %vm1143, %v2166, %v2168
    %v2193 = vsel %vm1143, %v2168, %v2170
    %2217 = vst [vmem:[#allocation3 + $0x450] sm:$0xff] %v2171
    %2218 = vst [vmem:[#allocation3 + $0x458] sm:$0xff] %v2172
    %2219 = vst [vmem:[#allocation3 + $0x460] sm:$0xff] %v2173
    %2220 = vst [vmem:[#allocation3 + $0x468] sm:$0xff] %v2174
    %2221 = vst [vmem:[#allocation3 + $0x470] sm:$0xff] %v2175
    %2222 = vst [vmem:[#allocation3 + $0x478] sm:$0xff] %v2176
    %2223 = vst [vmem:[#allocation3 + $0x480] sm:$0xff] %v2177
    %2224 = vst [vmem:[#allocation3 + $0x488] sm:$0xff] %v2178
    %2225 = vst [vmem:[#allocation3 + $0x490] sm:$0xff] %v2179
    %2226 = vst [vmem:[#allocation3 + $0x498] sm:$0xff] %v2180
    %2227 = vst [vmem:[#allocation3 + $0x4a0] sm:$0xff] %v2181
    %2228 = vst [vmem:[#allocation3 + $0x4a8] sm:$0xff] %v2182
    %2229 = vst [vmem:[#allocation3 + $0x4b0] sm:$0xff] %v2183
    %2230 = vst [vmem:[#allocation3 + $0x4b8] sm:$0xff] %v2184
    %2231 = vst [vmem:[#allocation3 + $0x4c0] sm:$0xff] %v2185
    %2232 = vst [vmem:[#allocation3 + $0x4c8] sm:$0xff] %v2186
    %2233 = vst [vmem:[#allocation3 + $0x4d0] sm:$0xff] %v2187
    %2234 = vst [vmem:[#allocation3 + $0x4d8] sm:$0xff] %v2188
    %2235 = vst [vmem:[#allocation3 + $0x4e0] sm:$0xff] %v2189
    %2236 = vst [vmem:[#allocation3 + $0x4e8] sm:$0xff] %v2190
    %2237 = vst [vmem:[#allocation3 + $0x4f0] sm:$0xff] %v2191
    %2238 = vst [vmem:[#allocation3 + $0x4f8] sm:$0xff] %v2192
    %2239 = vst.msk [vmem:[#allocation3 + $0x500] sm:$0xff] %vm50, %v2193
    %v2240 = vld [vmem:[#allocation2 + $0x8] sm:$0xff]
    %v2241 = vld [vmem:[#allocation2 + $0x10] sm:$0xff]
    %v2242 = vld [vmem:[#allocation2 + $0x18] sm:$0xff]
    %v2243 = vld [vmem:[#allocation2 + $0x20] sm:$0xff]
    %v2244 = vld [vmem:[#allocation2 + $0x28] sm:$0xff]
    %v2245 = vld [vmem:[#allocation2 + $0x30] sm:$0xff]
    %v2246 = vld [vmem:[#allocation2 + $0x38] sm:$0xff]
    %v2247 = vld [vmem:[#allocation2 + $0x40] sm:$0xff]
    %v2248 = vld [vmem:[#allocation2 + $0x48] sm:$0xff]
    %v2249 = vld [vmem:[#allocation2 + $0x50] sm:$0xff]
    %v2250 = vld [vmem:[#allocation2 + $0x58] sm:$0xff]
    %v2251 = vld [vmem:[#allocation2 + $0x60] sm:$0xff]
    %v2252 = vld [vmem:[#allocation2 + $0x68] sm:$0xff]
    %v2253 = vld [vmem:[#allocation2 + $0x70] sm:$0xff]
    %v2254 = vld [vmem:[#allocation2 + $0x78] sm:$0xff]
    %v2255 = vld [vmem:[#allocation2 + $0x80] sm:$0xff]
    %v2256 = vld [vmem:[#allocation2 + $0x88] sm:$0xff]
    %v2257 = vld [vmem:[#allocation2 + $0x90] sm:$0xff]
    %v2258 = vld [vmem:[#allocation2 + $0x98] sm:$0xff]
    %v2259 = vld [vmem:[#allocation2 + $0xa0] sm:$0xff]
    %v2260 = vld [vmem:[#allocation2 + $0xa8] sm:$0xff]
    %v2261 = vld [vmem:[#allocation2 + $0xb0] sm:$0xff]
    %v2262 = vld [vmem:[#allocation2 + $0xb8] sm:$0xff]
    %v2263 = vld [vmem:[#allocation2 + $0xc0] sm:$0xff]
    %2288 = vrot.lane.b32.xlu0 %v2240, 74
    %v2289 = vpop.permute.xlu0 %2288
    %2290 = vrot.lane.b32.xlu0 %v2241, 74
    %v2291 = vpop.permute.xlu0 %2290
    %2292 = vrot.lane.b32.xlu0 %v2242, 74
    %v2293 = vpop.permute.xlu0 %2292
    %2294 = vrot.lane.b32.xlu0 %v2243, 74
    %v2295 = vpop.permute.xlu0 %2294
    %2296 = vrot.lane.b32.xlu0 %v2244, 74
    %v2297 = vpop.permute.xlu0 %2296
    %2298 = vrot.lane.b32.xlu0 %v2245, 74
    %v2299 = vpop.permute.xlu0 %2298
    %2300 = vrot.lane.b32.xlu0 %v2246, 74
    %v2301 = vpop.permute.xlu0 %2300
    %2302 = vrot.lane.b32.xlu0 %v2247, 74
    %v2303 = vpop.permute.xlu0 %2302
    %2304 = vrot.lane.b32.xlu0 %v2248, 74
    %v2305 = vpop.permute.xlu0 %2304
    %2306 = vrot.lane.b32.xlu0 %v2249, 74
    %v2307 = vpop.permute.xlu0 %2306
    %2308 = vrot.lane.b32.xlu0 %v2250, 74
    %v2309 = vpop.permute.xlu0 %2308
    %2310 = vrot.lane.b32.xlu0 %v2251, 74
    %v2311 = vpop.permute.xlu0 %2310
    %2312 = vrot.lane.b32.xlu0 %v2252, 74
    %v2313 = vpop.permute.xlu0 %2312
    %2314 = vrot.lane.b32.xlu0 %v2253, 74
    %v2315 = vpop.permute.xlu0 %2314
    %2316 = vrot.lane.b32.xlu0 %v2254, 74
    %v2317 = vpop.permute.xlu0 %2316
    %2318 = vrot.lane.b32.xlu0 %v2255, 74
    %v2319 = vpop.permute.xlu0 %2318
    %2320 = vrot.lane.b32.xlu0 %v2256, 74
    %v2321 = vpop.permute.xlu0 %2320
    %2322 = vrot.lane.b32.xlu0 %v2257, 74
    %v2323 = vpop.permute.xlu0 %2322
    %2324 = vrot.lane.b32.xlu0 %v2258, 74
    %v2325 = vpop.permute.xlu0 %2324
    %2326 = vrot.lane.b32.xlu0 %v2259, 74
    %v2327 = vpop.permute.xlu0 %2326
    %2328 = vrot.lane.b32.xlu0 %v2260, 74
    %v2329 = vpop.permute.xlu0 %2328
    %2330 = vrot.lane.b32.xlu0 %v2261, 74
    %v2331 = vpop.permute.xlu0 %2330
    %2332 = vrot.lane.b32.xlu0 %v2262, 74
    %v2333 = vpop.permute.xlu0 %2332
    %2334 = vrot.lane.b32.xlu0 %v2263, 74
    %v2335 = vpop.permute.xlu0 %2334
    %vm2336 = vcmask 605184
    %v2337 = vsel %vm2336, %v2289, %v2291
    %v2338 = vsel %vm2336, %v2291, %v2293
    %v2339 = vsel %vm2336, %v2293, %v2295
    %v2340 = vsel %vm2336, %v2295, %v2297
    %v2341 = vsel %vm2336, %v2297, %v2299
    %v2342 = vsel %vm2336, %v2299, %v2301
    %v2343 = vsel %vm2336, %v2301, %v2303
    %v2344 = vsel %vm2336, %v2303, %v2305
    %v2345 = vsel %vm2336, %v2305, %v2307
    %v2346 = vsel %vm2336, %v2307, %v2309
    %v2347 = vsel %vm2336, %v2309, %v2311
    %v2348 = vsel %vm2336, %v2311, %v2313
    %v2349 = vsel %vm2336, %v2313, %v2315
    %v2350 = vsel %vm2336, %v2315, %v2317
    %v2351 = vsel %vm2336, %v2317, %v2319
    %v2352 = vsel %vm2336, %v2319, %v2321
    %v2353 = vsel %vm2336, %v2321, %v2323
    %v2354 = vsel %vm2336, %v2323, %v2325
    %v2355 = vsel %vm2336, %v2325, %v2327
    %v2356 = vsel %vm2336, %v2327, %v2329
    %v2357 = vsel %vm2336, %v2329, %v2331
    %v2358 = vsel %vm2336, %v2331, %v2333
    %v2359 = vsel %vm2336, %v2333, %v2335
    %2383 = vst [vmem:[#allocation3 + $0x508] sm:$0xff] %v2337
    %2384 = vst [vmem:[#allocation3 + $0x510] sm:$0xff] %v2338
    %2385 = vst [vmem:[#allocation3 + $0x518] sm:$0xff] %v2339
    %2386 = vst [vmem:[#allocation3 + $0x520] sm:$0xff] %v2340
    %2387 = vst [vmem:[#allocation3 + $0x528] sm:$0xff] %v2341
    %2388 = vst [vmem:[#allocation3 + $0x530] sm:$0xff] %v2342
    %2389 = vst [vmem:[#allocation3 + $0x538] sm:$0xff] %v2343
    %2390 = vst [vmem:[#allocation3 + $0x540] sm:$0xff] %v2344
    %2391 = vst [vmem:[#allocation3 + $0x548] sm:$0xff] %v2345
    %2392 = vst [vmem:[#allocation3 + $0x550] sm:$0xff] %v2346
    %2393 = vst [vmem:[#allocation3 + $0x558] sm:$0xff] %v2347
    %2394 = vst [vmem:[#allocation3 + $0x560] sm:$0xff] %v2348
    %2395 = vst [vmem:[#allocation3 + $0x568] sm:$0xff] %v2349
    %2396 = vst [vmem:[#allocation3 + $0x570] sm:$0xff] %v2350
    %2397 = vst [vmem:[#allocation3 + $0x578] sm:$0xff] %v2351
    %2398 = vst [vmem:[#allocation3 + $0x580] sm:$0xff] %v2352
    %2399 = vst [vmem:[#allocation3 + $0x588] sm:$0xff] %v2353
    %2400 = vst [vmem:[#allocation3 + $0x590] sm:$0xff] %v2354
    %2401 = vst [vmem:[#allocation3 + $0x598] sm:$0xff] %v2355
    %2402 = vst [vmem:[#allocation3 + $0x5a0] sm:$0xff] %v2356
    %2403 = vst [vmem:[#allocation3 + $0x5a8] sm:$0xff] %v2357
    %2404 = vst [vmem:[#allocation3 + $0x5b0] sm:$0xff] %v2358
    %2405 = vst.msk [vmem:[#allocation3 + $0x5b8] sm:$0xff] %vm50, %v2359
    %v2406 = vld [vmem:[#allocation2 + $0x8] sm:$0xff]
    %v2407 = vld [vmem:[#allocation2 + $0x10] sm:$0xff]
    %v2408 = vld [vmem:[#allocation2 + $0x18] sm:$0xff]
    %v2409 = vld [vmem:[#allocation2 + $0x20] sm:$0xff]
    %v2410 = vld [vmem:[#allocation2 + $0x28] sm:$0xff]
    %v2411 = vld [vmem:[#allocation2 + $0x30] sm:$0xff]
    %v2412 = vld [vmem:[#allocation2 + $0x38] sm:$0xff]
    %v2413 = vld [vmem:[#allocation2 + $0x40] sm:$0xff]
    %v2414 = vld [vmem:[#allocation2 + $0x48] sm:$0xff]
    %v2415 = vld [vmem:[#allocation2 + $0x50] sm:$0xff]
    %v2416 = vld [vmem:[#allocation2 + $0x58] sm:$0xff]
    %v2417 = vld [vmem:[#allocation2 + $0x60] sm:$0xff]
    %v2418 = vld [vmem:[#allocation2 + $0x68] sm:$0xff]
    %v2419 = vld [vmem:[#allocation2 + $0x70] sm:$0xff]
    %v2420 = vld [vmem:[#allocation2 + $0x78] sm:$0xff]
    %v2421 = vld [vmem:[#allocation2 + $0x80] sm:$0xff]
    %v2422 = vld [vmem:[#allocation2 + $0x88] sm:$0xff]
    %v2423 = vld [vmem:[#allocation2 + $0x90] sm:$0xff]
    %v2424 = vld [vmem:[#allocation2 + $0x98] sm:$0xff]
    %v2425 = vld [vmem:[#allocation2 + $0xa0] sm:$0xff]
    %v2426 = vld [vmem:[#allocation2 + $0xa8] sm:$0xff]
    %v2427 = vld [vmem:[#allocation2 + $0xb0] sm:$0xff]
    %v2428 = vld [vmem:[#allocation2 + $0xb8] sm:$0xff]
    %v2429 = vld [vmem:[#allocation2 + $0xc0] sm:$0xff]
    %2430 = vrot.lane.b32.xlu0 %v1008, 55
    %v2431 = vpop.permute.xlu0 %2430
    %2432 = vrot.lane.b32.xlu0 %v1012, 55
    %v2433 = vpop.permute.xlu0 %2432
    %2434 = vrot.lane.b32.xlu0 %v1016, 55
    %v2435 = vpop.permute.xlu0 %2434
    %2436 = vrot.lane.b32.xlu0 %v1020, 55
    %v2437 = vpop.permute.xlu0 %2436
    %2438 = vrot.lane.b32.xlu0 %v1024, 55
    %v2439 = vpop.permute.xlu0 %2438
    %2440 = vrot.lane.b32.xlu0 %v1028, 55
    %v2441 = vpop.permute.xlu0 %2440
    %2442 = vrot.lane.b32.xlu0 %v1032, 55
    %v2443 = vpop.permute.xlu0 %2442
    %2444 = vrot.lane.b32.xlu0 %v1036, 55
    %v2445 = vpop.permute.xlu0 %2444
    %2446 = vrot.lane.b32.xlu0 %v1040, 55
    %v2447 = vpop.permute.xlu0 %2446
    %2448 = vrot.lane.b32.xlu0 %v1044, 55
    %v2449 = vpop.permute.xlu0 %2448
    %2450 = vrot.lane.b32.xlu0 %v1048, 55
    %v2451 = vpop.permute.xlu0 %2450
    %2452 = vrot.lane.b32.xlu0 %v1052, 55
    %v2453 = vpop.permute.xlu0 %2452
    %2454 = vrot.lane.b32.xlu0 %v1056, 55
    %v2455 = vpop.permute.xlu0 %2454
    %2456 = vrot.lane.b32.xlu0 %v1060, 55
    %v2457 = vpop.permute.xlu0 %2456
    %2458 = vrot.lane.b32.xlu0 %v1064, 55
    %v2459 = vpop.permute.xlu0 %2458
    %2460 = vrot.lane.b32.xlu0 %v1068, 55
    %v2461 = vpop.permute.xlu0 %2460
    %2462 = vrot.lane.b32.xlu0 %v1072, 55
    %v2463 = vpop.permute.xlu0 %2462
    %2464 = vrot.lane.b32.xlu0 %v1076, 55
    %v2465 = vpop.permute.xlu0 %2464
    %2466 = vrot.lane.b32.xlu0 %v1080, 55
    %v2467 = vpop.permute.xlu0 %2466
    %2468 = vrot.lane.b32.xlu0 %v1084, 55
    %v2469 = vpop.permute.xlu0 %2468
    %2470 = vrot.lane.b32.xlu0 %v1088, 55
    %v2471 = vpop.permute.xlu0 %2470
    %2472 = vrot.lane.b32.xlu0 %v1092, 55
    %v2473 = vpop.permute.xlu0 %2472
    %2474 = vrot.lane.b32.xlu0 %v1096, 55
    %v2475 = vpop.permute.xlu0 %2474
    %v2476 = vsel %vm721, %v2431, %v2433
    %v2477 = vsel %vm721, %v2433, %v2435
    %v2478 = vsel %vm721, %v2435, %v2437
    %v2479 = vsel %vm721, %v2437, %v2439
    %v2480 = vsel %vm721, %v2439, %v2441
    %v2481 = vsel %vm721, %v2441, %v2443
    %v2482 = vsel %vm721, %v2443, %v2445
    %v2483 = vsel %vm721, %v2445, %v2447
    %v2484 = vsel %vm721, %v2447, %v2449
    %v2485 = vsel %vm721, %v2449, %v2451
    %v2486 = vsel %vm721, %v2451, %v2453
    %v2487 = vsel %vm721, %v2453, %v2455
    %v2488 = vsel %vm721, %v2455, %v2457
    %v2489 = vsel %vm721, %v2457, %v2459
    %v2490 = vsel %vm721, %v2459, %v2461
    %v2491 = vsel %vm721, %v2461, %v2463
    %v2492 = vsel %vm721, %v2463, %v2465
    %v2493 = vsel %vm721, %v2465, %v2467
    %v2494 = vsel %vm721, %v2467, %v2469
    %v2495 = vsel %vm721, %v2469, %v2471
    %v2496 = vsel %vm721, %v2471, %v2473
    %v2497 = vsel %vm721, %v2473, %v2475
    %vm2498 = vcmp.ne.s16.totalorder %v2431, 0
    %vm2499 = vcmp.ne.s16.totalorder %v2476, 0
    %vm2500 = vcmp.ne.s16.totalorder %v2477, 0
    %vm2501 = vcmp.ne.s16.totalorder %v2478, 0
    %vm2502 = vcmp.ne.s16.totalorder %v2479, 0
    %vm2503 = vcmp.ne.s16.totalorder %v2480, 0
    %vm2504 = vcmp.ne.s16.totalorder %v2481, 0
    %vm2505 = vcmp.ne.s16.totalorder %v2482, 0
    %vm2506 = vcmp.ne.s16.totalorder %v2483, 0
    %vm2507 = vcmp.ne.s16.totalorder %v2484, 0
    %vm2508 = vcmp.ne.s16.totalorder %v2485, 0
    %vm2509 = vcmp.ne.s16.totalorder %v2486, 0
    %vm2510 = vcmp.ne.s16.totalorder %v2487, 0
    %vm2511 = vcmp.ne.s16.totalorder %v2488, 0
    %vm2512 = vcmp.ne.s16.totalorder %v2489, 0
    %vm2513 = vcmp.ne.s16.totalorder %v2490, 0
    %vm2514 = vcmp.ne.s16.totalorder %v2491, 0
    %vm2515 = vcmp.ne.s16.totalorder %v2492, 0
    %vm2516 = vcmp.ne.s16.totalorder %v2493, 0
    %vm2517 = vcmp.ne.s16.totalorder %v2494, 0
    %vm2518 = vcmp.ne.s16.totalorder %v2495, 0
    %vm2519 = vcmp.ne.s16.totalorder %v2496, 0
    %vm2520 = vcmp.ne.s16.totalorder %v2497, 0
    %vm2521 = vcmp.ne.s16.totalorder %v2475, 0
    %v2522 = vsel %vm2498, %v2406, 0
    %v2523 = vsel %vm2499, %v2407, 0
    %v2524 = vsel %vm2500, %v2408, 0
    %v2525 = vsel %vm2501, %v2409, 0
    %v2526 = vsel %vm2502, %v2410, 0
    %v2527 = vsel %vm2503, %v2411, 0
    %v2528 = vsel %vm2504, %v2412, 0
    %v2529 = vsel %vm2505, %v2413, 0
    %v2530 = vsel %vm2506, %v2414, 0
    %v2531 = vsel %vm2507, %v2415, 0
    %v2532 = vsel %vm2508, %v2416, 0
    %v2533 = vsel %vm2509, %v2417, 0
    %v2534 = vsel %vm2510, %v2418, 0
    %v2535 = vsel %vm2511, %v2419, 0
    %v2536 = vsel %vm2512, %v2420, 0
    %v2537 = vsel %vm2513, %v2421, 0
    %v2538 = vsel %vm2514, %v2422, 0
    %v2539 = vsel %vm2515, %v2423, 0
    %v2540 = vsel %vm2516, %v2424, 0
    %v2541 = vsel %vm2517, %v2425, 0
    %v2542 = vsel %vm2518, %v2426, 0
    %v2543 = vsel %vm2519, %v2427, 0
    %v2544 = vsel %vm2520, %v2428, 0
    %v2545 = vsel %vm2521, %v2429, 0
    %2570 = vrot.lane.b32.xlu0 %v2522, 73
    %v2571 = vpop.permute.xlu0 %2570
    %2572 = vrot.lane.b32.xlu0 %v2523, 73
    %v2573 = vpop.permute.xlu0 %2572
    %2574 = vrot.lane.b32.xlu0 %v2524, 73
    %v2575 = vpop.permute.xlu0 %2574
    %2576 = vrot.lane.b32.xlu0 %v2525, 73
    %v2577 = vpop.permute.xlu0 %2576
    %2578 = vrot.lane.b32.xlu0 %v2526, 73
    %v2579 = vpop.permute.xlu0 %2578
    %2580 = vrot.lane.b32.xlu0 %v2527, 73
    %v2581 = vpop.permute.xlu0 %2580
    %2582 = vrot.lane.b32.xlu0 %v2528, 73
    %v2583 = vpop.permute.xlu0 %2582
    %2584 = vrot.lane.b32.xlu0 %v2529, 73
    %v2585 = vpop.permute.xlu0 %2584
    %2586 = vrot.lane.b32.xlu0 %v2530, 73
    %v2587 = vpop.permute.xlu0 %2586
    %2588 = vrot.lane.b32.xlu0 %v2531, 73
    %v2589 = vpop.permute.xlu0 %2588
    %2590 = vrot.lane.b32.xlu0 %v2532, 73
    %v2591 = vpop.permute.xlu0 %2590
    %2592 = vrot.lane.b32.xlu0 %v2533, 73
    %v2593 = vpop.permute.xlu0 %2592
    %2594 = vrot.lane.b32.xlu0 %v2534, 73
    %v2595 = vpop.permute.xlu0 %2594
    %2596 = vrot.lane.b32.xlu0 %v2535, 73
    %v2597 = vpop.permute.xlu0 %2596
    %2598 = vrot.lane.b32.xlu0 %v2536, 73
    %v2599 = vpop.permute.xlu0 %2598
    %2600 = vrot.lane.b32.xlu0 %v2537, 73
    %v2601 = vpop.permute.xlu0 %2600
    %2602 = vrot.lane.b32.xlu0 %v2538, 73
    %v2603 = vpop.permute.xlu0 %2602
    %2604 = vrot.lane.b32.xlu0 %v2539, 73
    %v2605 = vpop.permute.xlu0 %2604
    %2606 = vrot.lane.b32.xlu0 %v2540, 73
    %v2607 = vpop.permute.xlu0 %2606
    %2608 = vrot.lane.b32.xlu0 %v2541, 73
    %v2609 = vpop.permute.xlu0 %2608
    %2610 = vrot.lane.b32.xlu0 %v2542, 73
    %v2611 = vpop.permute.xlu0 %2610
    %2612 = vrot.lane.b32.xlu0 %v2543, 73
    %v2613 = vpop.permute.xlu0 %2612
    %2614 = vrot.lane.b32.xlu0 %v2544, 73
    %v2615 = vpop.permute.xlu0 %2614
    %2616 = vrot.lane.b32.xlu0 %v2545, 73
    %v2617 = vpop.permute.xlu0 %2616
    %v2618 = vsel %vm578, %v2571, %v2573
    %v2619 = vsel %vm578, %v2573, %v2575
    %v2620 = vsel %vm578, %v2575, %v2577
    %v2621 = vsel %vm578, %v2577, %v2579
    %v2622 = vsel %vm578, %v2579, %v2581
    %v2623 = vsel %vm578, %v2581, %v2583
    %v2624 = vsel %vm578, %v2583, %v2585
    %v2625 = vsel %vm578, %v2585, %v2587
    %v2626 = vsel %vm578, %v2587, %v2589
    %v2627 = vsel %vm578, %v2589, %v2591
    %v2628 = vsel %vm578, %v2591, %v2593
    %v2629 = vsel %vm578, %v2593, %v2595
    %v2630 = vsel %vm578, %v2595, %v2597
    %v2631 = vsel %vm578, %v2597, %v2599
    %v2632 = vsel %vm578, %v2599, %v2601
    %v2633 = vsel %vm578, %v2601, %v2603
    %v2634 = vsel %vm578, %v2603, %v2605
    %v2635 = vsel %vm578, %v2605, %v2607
    %v2636 = vsel %vm578, %v2607, %v2609
    %v2637 = vsel %vm578, %v2609, %v2611
    %v2638 = vsel %vm578, %v2611, %v2613
    %v2639 = vsel %vm578, %v2613, %v2615
    %v2640 = vsel %vm578, %v2615, %v2617
    %2664 = vst [vmem:[#allocation3 + $0x5c0] sm:$0xff] %v2618
    %2665 = vst [vmem:[#allocation3 + $0x5c8] sm:$0xff] %v2619
    %2666 = vst [vmem:[#allocation3 + $0x5d0] sm:$0xff] %v2620
    %2667 = vst [vmem:[#allocation3 + $0x5d8] sm:$0xff] %v2621
    %2668 = vst [vmem:[#allocation3 + $0x5e0] sm:$0xff] %v2622
    %2669 = vst [vmem:[#allocation3 + $0x5e8] sm:$0xff] %v2623
    %2670 = vst [vmem:[#allocation3 + $0x5f0] sm:$0xff] %v2624
    %2671 = vst [vmem:[#allocation3 + $0x5f8] sm:$0xff] %v2625
    %2672 = vst [vmem:[#allocation3 + $0x600] sm:$0xff] %v2626
    %2673 = vst [vmem:[#allocation3 + $0x608] sm:$0xff] %v2627
    %2674 = vst [vmem:[#allocation3 + $0x610] sm:$0xff] %v2628
    %2675 = vst [vmem:[#allocation3 + $0x618] sm:$0xff] %v2629
    %2676 = vst [vmem:[#allocation3 + $0x620] sm:$0xff] %v2630
    %2677 = vst [vmem:[#allocation3 + $0x628] sm:$0xff] %v2631
    %2678 = vst [vmem:[#allocation3 + $0x630] sm:$0xff] %v2632
    %2679 = vst [vmem:[#allocation3 + $0x638] sm:$0xff] %v2633
    %2680 = vst [vmem:[#allocation3 + $0x640] sm:$0xff] %v2634
    %2681 = vst [vmem:[#allocation3 + $0x648] sm:$0xff] %v2635
    %2682 = vst [vmem:[#allocation3 + $0x650] sm:$0xff] %v2636
    %2683 = vst [vmem:[#allocation3 + $0x658] sm:$0xff] %v2637
    %2684 = vst [vmem:[#allocation3 + $0x660] sm:$0xff] %v2638
    %2685 = vst [vmem:[#allocation3 + $0x668] sm:$0xff] %v2639
    %2686 = vst.msk [vmem:[#allocation3 + $0x670] sm:$0xff] %vm50, %v2640
    %v2687 = vld [vmem:[%s1] sm:$0xff]
    %v2688 = vld [vmem:[%s1 + $0x8] sm:$0xff]
    %v2689 = vld [vmem:[%s1 + $0x10] sm:$0xff]
    %v2690 = vld [vmem:[%s1 + $0x18] sm:$0xff]
    %v2691 = vld [vmem:[%s1 + $0x20] sm:$0xff]
    %v2692 = vld [vmem:[%s1 + $0x28] sm:$0xff]
    %v2693 = vld [vmem:[%s1 + $0x30] sm:$0xff]
    %v2694 = vld [vmem:[%s1 + $0x38] sm:$0xff]
    %v2695 = vld [vmem:[#allocation3] sm:$0xff]
    %v2696 = vld [vmem:[#allocation3 + $0x8] sm:$0xff]
    %v2697 = vld [vmem:[#allocation3 + $0x10] sm:$0xff]
    %v2698 = vld [vmem:[#allocation3 + $0x18] sm:$0xff]
    %v2699 = vld [vmem:[#allocation3 + $0x20] sm:$0xff]
    %v2700 = vld [vmem:[#allocation3 + $0x28] sm:$0xff]
    %v2701 = vld [vmem:[#allocation3 + $0x30] sm:$0xff]
    %v2702 = vld [vmem:[#allocation3 + $0x38] sm:$0xff]
    %v2703 = vld [vmem:[#allocation3 + $0x40] sm:$0xff]
    %v2704 = vld [vmem:[#allocation3 + $0x48] sm:$0xff]
    %v2705 = vld [vmem:[#allocation3 + $0x50] sm:$0xff]
    %v2706 = vld [vmem:[#allocation3 + $0x58] sm:$0xff]
    %v2707 = vld [vmem:[#allocation3 + $0x60] sm:$0xff]
    %v2708 = vld [vmem:[#allocation3 + $0x68] sm:$0xff]
    %v2709 = vld [vmem:[#allocation3 + $0x70] sm:$0xff]
    %v2710 = vld [vmem:[#allocation3 + $0x78] sm:$0xff]
    %v2711 = vld [vmem:[#allocation3 + $0x80] sm:$0xff]
    %v2712 = vld [vmem:[#allocation3 + $0x88] sm:$0xff]
    %v2713 = vld [vmem:[#allocation3 + $0x90] sm:$0xff]
    %v2714 = vld [vmem:[#allocation3 + $0x98] sm:$0xff]
    %v2715 = vld [vmem:[#allocation3 + $0xa0] sm:$0xff]
    %v2716 = vld [vmem:[#allocation3 + $0xa8] sm:$0xff]
    %v2717 = vld [vmem:[#allocation3 + $0xb0] sm:$0xff]
    %v2718 = vld [vmem:[#allocation3 + $0xb8] sm:$0xff]
    %v2719 = vld [vmem:[#allocation3 + $0xc0] sm:$0xff]
    %v2720 = vld [vmem:[#allocation3 + $0xc8] sm:$0xff]
    %v2721 = vld [vmem:[#allocation3 + $0xd0] sm:$0xff]
    %v2722 = vld [vmem:[#allocation3 + $0xd8] sm:$0xff]
    %v2723 = vld [vmem:[#allocation3 + $0xe0] sm:$0xff]
    %v2724 = vld [vmem:[#allocation3 + $0xe8] sm:$0xff]
    %v2725 = vld [vmem:[#allocation3 + $0xf0] sm:$0xff]
    %v2726 = vld [vmem:[#allocation3 + $0xf8] sm:$0xff]
    %v2727 = vld [vmem:[#allocation3 + $0x100] sm:$0xff]
    %v2728 = vld [vmem:[#allocation3 + $0x108] sm:$0xff]
    %v2729 = vld [vmem:[#allocation3 + $0x110] sm:$0xff]
    %v2730 = vld [vmem:[#allocation3 + $0x118] sm:$0xff]
    %v2731 = vld [vmem:[#allocation3 + $0x120] sm:$0xff]
    %v2732 = vld [vmem:[#allocation3 + $0x128] sm:$0xff]
    %v2733 = vld [vmem:[#allocation3 + $0x130] sm:$0xff]
    %v2734 = vld [vmem:[#allocation3 + $0x138] sm:$0xff]
    %v2735 = vld [vmem:[#allocation3 + $0x140] sm:$0xff]
    %v2736 = vld [vmem:[#allocation3 + $0x148] sm:$0xff]
    %v2737 = vld [vmem:[#allocation3 + $0x150] sm:$0xff]
    %v2738 = vld [vmem:[#allocation3 + $0x158] sm:$0xff]
    %v2739 = vld [vmem:[#allocation3 + $0x160] sm:$0xff]
    %v2740 = vld [vmem:[#allocation3 + $0x168] sm:$0xff]
    %v2741 = vld [vmem:[#allocation3 + $0x170] sm:$0xff]
    %v2742 = vld [vmem:[#allocation3 + $0x178] sm:$0xff]
    %v2743 = vld [vmem:[#allocation3 + $0x180] sm:$0xff]
    %v2744 = vld [vmem:[#allocation3 + $0x188] sm:$0xff]
    %v2745 = vld [vmem:[#allocation3 + $0x190] sm:$0xff]
    %v2746 = vld [vmem:[#allocation3 + $0x198] sm:$0xff]
    %v2747 = vld [vmem:[#allocation3 + $0x1a0] sm:$0xff]
    %v2748 = vld [vmem:[#allocation3 + $0x1a8] sm:$0xff]
    %v2749 = vld [vmem:[#allocation3 + $0x1b0] sm:$0xff]
    %v2750 = vld [vmem:[#allocation3 + $0x1b8] sm:$0xff]
    %v2751 = vld [vmem:[#allocation3 + $0x1c0] sm:$0xff]
    %v2752 = vld [vmem:[#allocation3 + $0x1c8] sm:$0xff]
    %v2753 = vld [vmem:[#allocation3 + $0x1d0] sm:$0xff]
    %v2754 = vld [vmem:[#allocation3 + $0x1d8] sm:$0xff]
    %v2755 = vld [vmem:[#allocation3 + $0x1e0] sm:$0xff]
    %v2756 = vld [vmem:[#allocation3 + $0x1e8] sm:$0xff]
    %v2757 = vld [vmem:[#allocation3 + $0x1f0] sm:$0xff]
    %v2758 = vld [vmem:[#allocation3 + $0x1f8] sm:$0xff]
    %v2759 = vld [vmem:[#allocation3 + $0x200] sm:$0xff]
    %v2760 = vld [vmem:[#allocation3 + $0x208] sm:$0xff]
    %v2761 = vld [vmem:[#allocation3 + $0x210] sm:$0xff]
    %v2762 = vld [vmem:[#allocation3 + $0x218] sm:$0xff]
    %v2763 = vld [vmem:[#allocation3 + $0x220] sm:$0xff]
    %v2764 = vld [vmem:[#allocation3 + $0x228] sm:$0xff]
    %v2765 = vld [vmem:[#allocation3 + $0x230] sm:$0xff]
    %v2766 = vld [vmem:[#allocation3 + $0x238] sm:$0xff]
    %v2767 = vld [vmem:[#allocation3 + $0x240] sm:$0xff]
    %v2768 = vld [vmem:[#allocation3 + $0x248] sm:$0xff]
    %v2769 = vld [vmem:[#allocation3 + $0x250] sm:$0xff]
    %v2770 = vld [vmem:[#allocation3 + $0x258] sm:$0xff]
    %v2771 = vld [vmem:[#allocation3 + $0x260] sm:$0xff]
    %v2772 = vld [vmem:[#allocation3 + $0x268] sm:$0xff]
    %v2773 = vld [vmem:[#allocation3 + $0x270] sm:$0xff]
    %v2774 = vld [vmem:[#allocation3 + $0x278] sm:$0xff]
    %v2775 = vld [vmem:[#allocation3 + $0x280] sm:$0xff]
    %v2776 = vld [vmem:[#allocation3 + $0x288] sm:$0xff]
    %v2777 = vld [vmem:[#allocation3 + $0x290] sm:$0xff]
    %v2778 = vld [vmem:[#allocation3 + $0x298] sm:$0xff]
    %v2779 = vld [vmem:[#allocation3 + $0x2a0] sm:$0xff]
    %v2780 = vld [vmem:[#allocation3 + $0x2a8] sm:$0xff]
    %v2781 = vld [vmem:[#allocation3 + $0x2b0] sm:$0xff]
    %v2782 = vld [vmem:[#allocation3 + $0x2b8] sm:$0xff]
    %v2783 = vld [vmem:[#allocation3 + $0x2c0] sm:$0xff]
    %v2784 = vld [vmem:[#allocation3 + $0x2c8] sm:$0xff]
    %v2785 = vld [vmem:[#allocation3 + $0x2d0] sm:$0xff]
    %v2786 = vld [vmem:[#allocation3 + $0x2d8] sm:$0xff]
    %v2787 = vld [vmem:[#allocation3 + $0x2e0] sm:$0xff]
    %v2788 = vld [vmem:[#allocation3 + $0x2e8] sm:$0xff]
    %v2789 = vld [vmem:[#allocation3 + $0x2f0] sm:$0xff]
    %v2790 = vld [vmem:[#allocation3 + $0x2f8] sm:$0xff]
    %v2791 = vld [vmem:[#allocation3 + $0x300] sm:$0xff]
    %v2792 = vld [vmem:[#allocation3 + $0x308] sm:$0xff]
    %v2793 = vld [vmem:[#allocation3 + $0x310] sm:$0xff]
    %v2794 = vld [vmem:[#allocation3 + $0x318] sm:$0xff]
    %v2795 = vld [vmem:[#allocation3 + $0x320] sm:$0xff]
    %v2796 = vld [vmem:[#allocation3 + $0x328] sm:$0xff]
    %v2797 = vld [vmem:[#allocation3 + $0x330] sm:$0xff]
    %v2798 = vld [vmem:[#allocation3 + $0x338] sm:$0xff]
    %v2799 = vld [vmem:[#allocation3 + $0x340] sm:$0xff]
    %v2800 = vld [vmem:[#allocation3 + $0x348] sm:$0xff]
    %v2801 = vld [vmem:[#allocation3 + $0x350] sm:$0xff]
    %v2802 = vld [vmem:[#allocation3 + $0x358] sm:$0xff]
    %v2803 = vld [vmem:[#allocation3 + $0x360] sm:$0xff]
    %v2804 = vld [vmem:[#allocation3 + $0x368] sm:$0xff]
    %v2805 = vld [vmem:[#allocation3 + $0x370] sm:$0xff]
    %v2806 = vld [vmem:[#allocation3 + $0x378] sm:$0xff]
    %v2807 = vld [vmem:[#allocation3 + $0x380] sm:$0xff]
    %v2808 = vld [vmem:[#allocation3 + $0x388] sm:$0xff]
    %v2809 = vld [vmem:[#allocation3 + $0x390] sm:$0xff]
    %v2810 = vld [vmem:[#allocation3 + $0x398] sm:$0xff]
    %v2811 = vld [vmem:[#allocation3 + $0x3a0] sm:$0xff]
    %v2812 = vld [vmem:[#allocation3 + $0x3a8] sm:$0xff]
    %v2813 = vld [vmem:[#allocation3 + $0x3b0] sm:$0xff]
    %v2814 = vld [vmem:[#allocation3 + $0x3b8] sm:$0xff]
    %v2815 = vld [vmem:[#allocation3 + $0x3c0] sm:$0xff]
    %v2816 = vld [vmem:[#allocation3 + $0x3c8] sm:$0xff]
    %v2817 = vld [vmem:[#allocation3 + $0x3d0] sm:$0xff]
    %v2818 = vld [vmem:[#allocation3 + $0x3d8] sm:$0xff]
    %v2819 = vld [vmem:[#allocation3 + $0x3e0] sm:$0xff]
    %v2820 = vld [vmem:[#allocation3 + $0x3e8] sm:$0xff]
    %v2821 = vld [vmem:[#allocation3 + $0x3f0] sm:$0xff]
    %v2822 = vld [vmem:[#allocation3 + $0x3f8] sm:$0xff]
    %v2823 = vld [vmem:[#allocation3 + $0x400] sm:$0xff]
    %v2824 = vld [vmem:[#allocation3 + $0x408] sm:$0xff]
    %v2825 = vld [vmem:[#allocation3 + $0x410] sm:$0xff]
    %v2826 = vld [vmem:[#allocation3 + $0x418] sm:$0xff]
    %v2827 = vld [vmem:[#allocation3 + $0x420] sm:$0xff]
    %v2828 = vld [vmem:[#allocation3 + $0x428] sm:$0xff]
    %v2829 = vld [vmem:[#allocation3 + $0x430] sm:$0xff]
    %v2830 = vld [vmem:[#allocation3 + $0x438] sm:$0xff]
    %v2831 = vld [vmem:[#allocation3 + $0x440] sm:$0xff]
    %v2832 = vld [vmem:[#allocation3 + $0x448] sm:$0xff]
    %v2833 = vld [vmem:[#allocation3 + $0x450] sm:$0xff]
    %v2834 = vld [vmem:[#allocation3 + $0x458] sm:$0xff]
    %v2835 = vld [vmem:[#allocation3 + $0x460] sm:$0xff]
    %v2836 = vld [vmem:[#allocation3 + $0x468] sm:$0xff]
    %v2837 = vld [vmem:[#allocation3 + $0x470] sm:$0xff]
    %v2838 = vld [vmem:[#allocation3 + $0x478] sm:$0xff]
    %v2839 = vld [vmem:[#allocation3 + $0x480] sm:$0xff]
    %v2840 = vld [vmem:[#allocation3 + $0x488] sm:$0xff]
    %v2841 = vld [vmem:[#allocation3 + $0x490] sm:$0xff]
    %v2842 = vld [vmem:[#allocation3 + $0x498] sm:$0xff]
    %v2843 = vld [vmem:[#allocation3 + $0x4a0] sm:$0xff]
    %v2844 = vld [vmem:[#allocation3 + $0x4a8] sm:$0xff]
    %v2845 = vld [vmem:[#allocation3 + $0x4b0] sm:$0xff]
    %v2846 = vld [vmem:[#allocation3 + $0x4b8] sm:$0xff]
    %v2847 = vld [vmem:[#allocation3 + $0x4c0] sm:$0xff]
    %v2848 = vld [vmem:[#allocation3 + $0x4c8] sm:$0xff]
    %v2849 = vld [vmem:[#allocation3 + $0x4d0] sm:$0xff]
    %v2850 = vld [vmem:[#allocation3 + $0x4d8] sm:$0xff]
    %v2851 = vld [vmem:[#allocation3 + $0x4e0] sm:$0xff]
    %v2852 = vld [vmem:[#allocation3 + $0x4e8] sm:$0xff]
    %v2853 = vld [vmem:[#allocation3 + $0x4f0] sm:$0xff]
    %v2854 = vld [vmem:[#allocation3 + $0x4f8] sm:$0xff]
    %v2855 = vld [vmem:[#allocation3 + $0x500] sm:$0xff]
    %v2856 = vld [vmem:[#allocation3 + $0x508] sm:$0xff]
    %v2857 = vld [vmem:[#allocation3 + $0x510] sm:$0xff]
    %v2858 = vld [vmem:[#allocation3 + $0x518] sm:$0xff]
    %v2859 = vld [vmem:[#allocation3 + $0x520] sm:$0xff]
    %v2860 = vld [vmem:[#allocation3 + $0x528] sm:$0xff]
    %v2861 = vld [vmem:[#allocation3 + $0x530] sm:$0xff]
    %v2862 = vld [vmem:[#allocation3 + $0x538] sm:$0xff]
    %v2863 = vld [vmem:[#allocation3 + $0x540] sm:$0xff]
    %v2864 = vld [vmem:[#allocation3 + $0x548] sm:$0xff]
    %v2865 = vld [vmem:[#allocation3 + $0x550] sm:$0xff]
    %v2866 = vld [vmem:[#allocation3 + $0x558] sm:$0xff]
    %v2867 = vld [vmem:[#allocation3 + $0x560] sm:$0xff]
    %v2868 = vld [vmem:[#allocation3 + $0x568] sm:$0xff]
    %v2869 = vld [vmem:[#allocation3 + $0x570] sm:$0xff]
    %v2870 = vld [vmem:[#allocation3 + $0x578] sm:$0xff]
    %v2871 = vld [vmem:[#allocation3 + $0x580] sm:$0xff]
    %v2872 = vld [vmem:[#allocation3 + $0x588] sm:$0xff]
    %v2873 = vld [vmem:[#allocation3 + $0x590] sm:$0xff]
    %v2874 = vld [vmem:[#allocation3 + $0x598] sm:$0xff]
    %v2875 = vld [vmem:[#allocation3 + $0x5a0] sm:$0xff]
    %v2876 = vld [vmem:[#allocation3 + $0x5a8] sm:$0xff]
    %v2877 = vld [vmem:[#allocation3 + $0x5b0] sm:$0xff]
    %v2878 = vld [vmem:[#allocation3 + $0x5b8] sm:$0xff]
    %v2879 = vld [vmem:[#allocation3 + $0x5c0] sm:$0xff]
    %v2880 = vld [vmem:[#allocation3 + $0x5c8] sm:$0xff]
    %v2881 = vld [vmem:[#allocation3 + $0x5d0] sm:$0xff]
    %v2882 = vld [vmem:[#allocation3 + $0x5d8] sm:$0xff]
    %v2883 = vld [vmem:[#allocation3 + $0x5e0] sm:$0xff]
    %v2884 = vld [vmem:[#allocation3 + $0x5e8] sm:$0xff]
    %v2885 = vld [vmem:[#allocation3 + $0x5f0] sm:$0xff]
    %v2886 = vld [vmem:[#allocation3 + $0x5f8] sm:$0xff]
    %v2887 = vld [vmem:[#allocation3 + $0x600] sm:$0xff]
    %v2888 = vld [vmem:[#allocation3 + $0x608] sm:$0xff]
    %v2889 = vld [vmem:[#allocation3 + $0x610] sm:$0xff]
    %v2890 = vld [vmem:[#allocation3 + $0x618] sm:$0xff]
    %v2891 = vld [vmem:[#allocation3 + $0x620] sm:$0xff]
    %v2892 = vld [vmem:[#allocation3 + $0x628] sm:$0xff]
    %v2893 = vld [vmem:[#allocation3 + $0x630] sm:$0xff]
    %v2894 = vld [vmem:[#allocation3 + $0x638] sm:$0xff]
    %v2895 = vld [vmem:[#allocation3 + $0x640] sm:$0xff]
    %v2896 = vld [vmem:[#allocation3 + $0x648] sm:$0xff]
    %v2897 = vld [vmem:[#allocation3 + $0x650] sm:$0xff]
    %v2898 = vld [vmem:[#allocation3 + $0x658] sm:$0xff]
    %v2899 = vld [vmem:[#allocation3 + $0x660] sm:$0xff]
    %v2900 = vld [vmem:[#allocation3 + $0x668] sm:$0xff]
    %v2901 = vld [vmem:[#allocation3 + $0x670] sm:$0xff]
    %v2902 = vld [vmem:[%s2] sm:$0xff]
    %v2903 = vld [vmem:[%s2 + $0x8] sm:$0xff]
    %v2904 = vld [vmem:[%s2 + $0x10] sm:$0xff]
    %v2905 = vld [vmem:[%s2 + $0x18] sm:$0xff]
    %v2906 = vld [vmem:[%s2 + $0x20] sm:$0xff]
    %v2907 = vld [vmem:[%s2 + $0x28] sm:$0xff]
    %v2908 = vld [vmem:[%s2 + $0x30] sm:$0xff]
    %v2909 = vld [vmem:[%s2 + $0x38] sm:$0xff]
    %2911 = vset.pattern.permute.xlu0 0
    %2912 = vperm.xlu0 %2911, %v2902
    %v2913 = vpop.permute.xlu0 %2912
    %2916 = vset.pattern.permute.xlu0 0
    %2917 = vperm.xlu0 %2916, %v2903
    %v2918 = vpop.permute.xlu0 %2917
    %2921 = vset.pattern.permute.xlu0 0
    %2922 = vperm.xlu0 %2921, %v2904
    %v2923 = vpop.permute.xlu0 %2922
    %2926 = vset.pattern.permute.xlu0 0
    %2927 = vperm.xlu0 %2926, %v2905
    %v2928 = vpop.permute.xlu0 %2927
    %2931 = vset.pattern.permute.xlu0 0
    %2932 = vperm.xlu0 %2931, %v2906
    %v2933 = vpop.permute.xlu0 %2932
    %2936 = vset.pattern.permute.xlu0 0
    %2937 = vperm.xlu0 %2936, %v2907
    %v2938 = vpop.permute.xlu0 %2937
    %2941 = vset.pattern.permute.xlu0 0
    %2942 = vperm.xlu0 %2941, %v2908
    %v2943 = vpop.permute.xlu0 %2942
    %2946 = vset.pattern.permute.xlu0 0
    %2947 = vperm.xlu0 %2946, %v2909
    %v2948 = vpop.permute.xlu0 %2947
    %v2958 = vunpack.c.l.b16 %v2687
    %v2959 = vunpack.c.h.b16 %v2687
    %v2960 = vunpack.c.l.b16 %v2688
    %v2961 = vunpack.c.h.b16 %v2688
    %v2962 = vunpack.c.l.b16 %v2689
    %v2963 = vunpack.c.h.b16 %v2689
    %v2964 = vunpack.c.l.b16 %v2690
    %v2965 = vunpack.c.h.b16 %v2690
    %v2966 = vunpack.c.l.b16 %v2691
    %v2967 = vunpack.c.h.b16 %v2691
    %v2968 = vunpack.c.l.b16 %v2692
    %v2969 = vunpack.c.h.b16 %v2692
    %v2970 = vunpack.c.l.b16 %v2693
    %v2971 = vunpack.c.h.b16 %v2693
    %v2972 = vunpack.c.l.b16 %v2694
    %v2973 = vunpack.c.h.b16 %v2694
    %v2974 = vpack.c.b16 %v2960, %v2958
    %v2975 = vpack.c.b16 %v2961, %v2959
    %v2976 = vpack.c.b16 %v2964, %v2962
    %v2977 = vpack.c.b16 %v2965, %v2963
    %v2978 = vpack.c.b16 %v2968, %v2966
    %v2979 = vpack.c.b16 %v2969, %v2967
    %v2980 = vpack.c.b16 %v2972, %v2970
    %v2981 = vpack.c.b16 %v2973, %v2971
    %vm2986 = vcmask 130048
    %v2988 = vsel %vm2986, %v2975, 0
    %v2991 = vsel %vm2986, %v2977, 0
    %v2994 = vsel %vm2986, %v2979, 0
    %v2997 = vsel %vm2986, %v2981, 0
    %2999 = vmatprep.subr.bf16.mxu0 %v2696
    %3000 = vmatpush1.bf16.msra.mxu0 %v2695
    %3001 = vmatprep.subr.bf16.mxu0 %v2719
    %3002 = vmatpush1.bf16.msra.mxu0 %v2718
    %3003 = vmatprep.subr.bf16.mxu0 %v2742
    %3004 = vmatpush1.bf16.msra.mxu0 %v2741
    %3005 = vmatprep.subr.bf16.mxu0 %v2765
    %3006 = vmatpush1.bf16.msra.mxu0 %v2764
    %3007 = vmatprep.subr.bf16.mxu0 %v2788
    %3008 = vmatpush1.bf16.msra.mxu0 %v2787
    %3009 = vmatprep.subr.bf16.mxu0 %v2811
    %3010 = vmatpush1.bf16.msra.mxu0 %v2810
    %3011 = vmatprep.subr.bf16.mxu0 %v2834
    %3012 = vmatpush1.bf16.msra.mxu0 %v2833
    %3013 = vmatprep.subr.bf16.mxu0 %v2857
    %3014 = vmatpush1.bf16.msra.mxu0 %v2856
    %3015 = vmatprep.subr.bf16.mxu0 %v2880
    %3016 = vmatpush1.bf16.msra.mxu0 %v2879
    %3017 = vmatprep.subr.bf16.mxu0 0
    %3018 = vmatpush1.bf16.msra.mxu0 0
    %3019 = vmatprep.subr.bf16.mxu0 0
    %3020 = vmatpush1.bf16.msra.mxu0 0
    %3021 = vmatprep.subr.bf16.mxu0 0
    %3022 = vmatpush1.bf16.msra.mxu0 0
    %3023 = vmatprep.subr.bf16.mxu0 0
    %3024 = vmatpush1.bf16.msra.mxu0 0
    %3025 = vmatprep.subr.bf16.mxu0 0
    %3026 = vmatpush1.bf16.msra.mxu0 0
    %3027 = vmatprep.subr.bf16.mxu0 0
    %3028 = vmatpush1.bf16.msra.mxu0 0
    %3029 = vmatprep.subr.bf16.mxu0 0
    %3030 = vmatpush1.bf16.msra.mxu0 0
    %3031 = vmatprep.mubr.bf16.mxu0 %v2988
    %3032 = vmatmul.mubr.bf16.gmra.mrb[0].mxu0 %v2974
    %v3033 = vpop.f32.mrb[0].mxu0
    %v3034 = vadd.f32 %v2913, %v3033
    %v3035 = vpop.f32.mrb[0].mxu0
    %v3036 = vadd.f32 %v2913, %v3035
    %v3037 = vpop.f32.mrb[0].mxu0
    %v3038 = vadd.f32 %v2918, %v3037
    %v3039 = vpop.f32.mrb[0].mxu0
    %v3040 = vadd.f32 %v2918, %v3039
    %3041 = vmatprep.mubr.bf16.mxu0 %v2991
    %3042 = vmatmul.mubr.bf16.gmra.mrb[0].mxu0 %v2976
    %v3043 = vpop.f32.mrb[0].mxu0
    %v3044 = vadd.f32 %v2923, %v3043
    %v3045 = vpop.f32.mrb[0].mxu0
    %v3046 = vadd.f32 %v2923, %v3045
    %v3047 = vpop.f32.mrb[0].mxu0
    %v3048 = vadd.f32 %v2928, %v3047
    %v3049 = vpop.f32.mrb[0].mxu0
    %v3050 = vadd.f32 %v2928, %v3049
    %3051 = vmatprep.mubr.bf16.mxu0 %v2994
    %3052 = vmatmul.mubr.bf16.gmra.mrb[0].mxu0 %v2978
    %v3053 = vpop.f32.mrb[0].mxu0
    %v3054 = vadd.f32 %v2933, %v3053
    %v3055 = vpop.f32.mrb[0].mxu0
    %v3056 = vadd.f32 %v2933, %v3055
    %v3057 = vpop.f32.mrb[0].mxu0
    %v3058 = vadd.f32 %v2938, %v3057
    %v3059 = vpop.f32.mrb[0].mxu0
    %v3060 = vadd.f32 %v2938, %v3059
    %3061 = vmatprep.mubr.bf16.mxu0 %v2997
    %3062 = vmatmul.mubr.bf16.gmra.mrb[0].mxu0 %v2980
    %v3063 = vpop.f32.mrb[0].mxu0
    %v3064 = vadd.f32 %v2943, %v3063
    %v3065 = vpop.f32.mrb[0].mxu0
    %v3066 = vadd.f32 %v2943, %v3065
    %v3067 = vpop.f32.mrb[0].mxu0
    %v3068 = vadd.f32 %v2948, %v3067
    %v3069 = vpop.f32.mrb[0].mxu0
    %v3070 = vadd.f32 %v2948, %v3069
    %3071 = vdwg.mxu0
    %3072 = vmatprep.subr.bf16.mxu0 %v2698
    %3073 = vmatpush1.bf16.msra.mxu0 %v2697
    %3074 = vmatprep.subr.bf16.mxu0 %v2721
    %3075 = vmatpush1.bf16.msra.mxu0 %v2720
    %3076 = vmatprep.subr.bf16.mxu0 %v2744
    %3077 = vmatpush1.bf16.msra.mxu0 %v2743
    %3078 = vmatprep.subr.bf16.mxu0 %v2767
    %3079 = vmatpush1.bf16.msra.mxu0 %v2766
    %3080 = vmatprep.subr.bf16.mxu0 %v2790
    %3081 = vmatpush1.bf16.msra.mxu0 %v2789
    %3082 = vmatprep.subr.bf16.mxu0 %v2813
    %3083 = vmatpush1.bf16.msra.mxu0 %v2812
    %3084 = vmatprep.subr.bf16.mxu0 %v2836
    %3085 = vmatpush1.bf16.msra.mxu0 %v2835
    %3086 = vmatprep.subr.bf16.mxu0 %v2859
    %3087 = vmatpush1.bf16.msra.mxu0 %v2858
    %3088 = vmatprep.subr.bf16.mxu0 %v2882
    %3089 = vmatpush1.bf16.msra.mxu0 %v2881
    %3090 = vmatprep.subr.bf16.mxu0 0
    %3091 = vmatpush1.bf16.msra.mxu0 0
    %3092 = vmatprep.subr.bf16.mxu0 0
    %3093 = vmatpush1.bf16.msra.mxu0 0
    %3094 = vmatprep.subr.bf16.mxu0 0
    %3095 = vmatpush1.bf16.msra.mxu0 0
    %3096 = vmatprep.subr.bf16.mxu0 0
    %3097 = vmatpush1.bf16.msra.mxu0 0
    %3098 = vmatprep.subr.bf16.mxu0 0
    %3099 = vmatpush1.bf16.msra.mxu0 0
    %3100 = vmatprep.subr.bf16.mxu0 0
    %3101 = vmatpush1.bf16.msra.mxu0 0
    %3102 = vmatprep.subr.bf16.mxu0 0
    %3103 = vmatpush1.bf16.msra.mxu0 0
    %3104 = vmatprep.mubr.bf16.mxu0 %v2988
    %3105 = vmatmul.mubr.bf16.gmra.mrb[0].mxu0 %v2974
    %v3106 = vpop.f32.mrb[0].mxu0
    %v3107 = vadd.f32 %v2913, %v3106
    %v3108 = vpop.f32.mrb[0].mxu0
    %v3109 = vadd.f32 %v2913, %v3108
    %v3110 = vpop.f32.mrb[0].mxu0
    %v3111 = vadd.f32 %v2918, %v3110
    %v3112 = vpop.f32.mrb[0].mxu0
    %v3113 = vadd.f32 %v2918, %v3112
    %3114 = vmatprep.mubr.bf16.mxu0 %v2991
    %3115 = vmatmul.mubr.bf16.gmra.mrb[0].mxu0 %v2976
    %v3116 = vpop.f32.mrb[0].mxu0
    %v3117 = vadd.f32 %v2923, %v3116
    %v3118 = vpop.f32.mrb[0].mxu0
    %v3119 = vadd.f32 %v2923, %v3118
    %v3120 = vpop.f32.mrb[0].mxu0
    %v3121 = vadd.f32 %v2928, %v3120
    %v3122 = vpop.f32.mrb[0].mxu0
    %v3123 = vadd.f32 %v2928, %v3122
    %3124 = vmatprep.mubr.bf16.mxu0 %v2994
    %3125 = vmatmul.mubr.bf16.gmra.mrb[0].mxu0 %v2978
    %v3126 = vpop.f32.mrb[0].mxu0
    %v3127 = vadd.f32 %v2933, %v3126
    %v3128 = vpop.f32.mrb[0].mxu0
    %v3129 = vadd.f32 %v2933, %v3128
    %v3130 = vpop.f32.mrb[0].mxu0
    %v3131 = vadd.f32 %v2938, %v3130
    %v3132 = vpop.f32.mrb[0].mxu0
    %v3133 = vadd.f32 %v2938, %v3132
    %3134 = vmatprep.mubr.bf16.mxu0 %v2997
    %3135 = vmatmul.mubr.bf16.gmra.mrb[0].mxu0 %v2980
    %v3136 = vpop.f32.mrb[0].mxu0
    %v3137 = vadd.f32 %v2943, %v3136
    %v3138 = vpop.f32.mrb[0].mxu0
    %v3139 = vadd.f32 %v2943, %v3138
    %v3140 = vpop.f32.mrb[0].mxu0
    %v3141 = vadd.f32 %v2948, %v3140
    %v3142 = vpop.f32.mrb[0].mxu0
    %v3143 = vadd.f32 %v2948, %v3142
    %3144 = vdwg.mxu0
    %3145 = vmatprep.subr.bf16.mxu0 %v2700
    %3146 = vmatpush1.bf16.msra.mxu0 %v2699
    %3147 = vmatprep.subr.bf16.mxu0 %v2723
    %3148 = vmatpush1.bf16.msra.mxu0 %v2722
    %3149 = vmatprep.subr.bf16.mxu0 %v2746
    %3150 = vmatpush1.bf16.msra.mxu0 %v2745
    %3151 = vmatprep.subr.bf16.mxu0 %v2769
    %3152 = vmatpush1.bf16.msra.mxu0 %v2768
    %3153 = vmatprep.subr.bf16.mxu0 %v2792
    %3154 = vmatpush1.bf16.msra.mxu0 %v2791
    %3155 = vmatprep.subr.bf16.mxu0 %v2815
    %3156 = vmatpush1.bf16.msra.mxu0 %v2814
    %3157 = vmatprep.subr.bf16.mxu0 %v2838
    %3158 = vmatpush1.bf16.msra.mxu0 %v2837
    %3159 = vmatprep.subr.bf16.mxu0 %v2861
    %3160 = vmatpush1.bf16.msra.mxu0 %v2860
    %3161 = vmatprep.subr.bf16.mxu0 %v2884
    %3162 = vmatpush1.bf16.msra.mxu0 %v2883
    %3163 = vmatprep.subr.bf16.mxu0 0
    %3164 = vmatpush1.bf16.msra.mxu0 0
    %3165 = vmatprep.subr.bf16.mxu0 0
    %3166 = vmatpush1.bf16.msra.mxu0 0
    %3167 = vmatprep.subr.bf16.mxu0 0
    %3168 = vmatpush1.bf16.msra.mxu0 0
    %3169 = vmatprep.subr.bf16.mxu0 0
    %3170 = vmatpush1.bf16.msra.mxu0 0
    %3171 = vmatprep.subr.bf16.mxu0 0
    %3172 = vmatpush1.bf16.msra.mxu0 0
    %3173 = vmatprep.subr.bf16.mxu0 0
    %3174 = vmatpush1.bf16.msra.mxu0 0
    %3175 = vmatprep.subr.bf16.mxu0 0
    %3176 = vmatpush1.bf16.msra.mxu0 0
    %3177 = vmatprep.mubr.bf16.mxu0 %v2988
    %3178 = vmatmul.mubr.bf16.gmra.mrb[0].mxu0 %v2974
    %v3179 = vpop.f32.mrb[0].mxu0
    %v3180 = vadd.f32 %v2913, %v3179
    %v3181 = vpop.f32.mrb[0].mxu0
    %v3182 = vadd.f32 %v2913, %v3181
    %v3183 = vpop.f32.mrb[0].mxu0
    %v3184 = vadd.f32 %v2918, %v3183
    %v3185 = vpop.f32.mrb[0].mxu0
    %v3186 = vadd.f32 %v2918, %v3185
    %3187 = vmatprep.mubr.bf16.mxu0 %v2991
    %3188 = vmatmul.mubr.bf16.gmra.mrb[0].mxu0 %v2976
    %v3189 = vpop.f32.mrb[0].mxu0
    %v3190 = vadd.f32 %v2923, %v3189
    %v3191 = vpop.f32.mrb[0].mxu0
    %v3192 = vadd.f32 %v2923, %v3191
    %v3193 = vpop.f32.mrb[0].mxu0
    %v3194 = vadd.f32 %v2928, %v3193
    %v3195 = vpop.f32.mrb[0].mxu0
    %v3196 = vadd.f32 %v2928, %v3195
    %3197 = vmatprep.mubr.bf16.mxu0 %v2994
    %3198 = vmatmul.mubr.bf16.gmra.mrb[0].mxu0 %v2978
    %v3199 = vpop.f32.mrb[0].mxu0
    %v3200 = vadd.f32 %v2933, %v3199
    %v3201 = vpop.f32.mrb[0].mxu0
    %v3202 = vadd.f32 %v2933, %v3201
    %v3203 = vpop.f32.mrb[0].mxu0
    %v3204 = vadd.f32 %v2938, %v3203
    %v3205 = vpop.f32.mrb[0].mxu0
    %v3206 = vadd.f32 %v2938, %v3205
    %3207 = vmatprep.mubr.bf16.mxu0 %v2997
    %3208 = vmatmul.mubr.bf16.gmra.mrb[0].mxu0 %v2980
    %v3209 = vpop.f32.mrb[0].mxu0
    %v3210 = vadd.f32 %v2943, %v3209
    %v3211 = vpop.f32.mrb[0].mxu0
    %v3212 = vadd.f32 %v2943, %v3211
    %v3213 = vpop.f32.mrb[0].mxu0
    %v3214 = vadd.f32 %v2948, %v3213
    %v3215 = vpop.f32.mrb[0].mxu0
    %v3216 = vadd.f32 %v2948, %v3215
    %3217 = vdwg.mxu0
    %3218 = vmatprep.subr.bf16.mxu0 %v2702
    %3219 = vmatpush1.bf16.msra.mxu0 %v2701
    %3220 = vmatprep.subr.bf16.mxu0 %v2725
    %3221 = vmatpush1.bf16.msra.mxu0 %v2724
    %3222 = vmatprep.subr.bf16.mxu0 %v2748
    %3223 = vmatpush1.bf16.msra.mxu0 %v2747
    %3224 = vmatprep.subr.bf16.mxu0 %v2771
    %3225 = vmatpush1.bf16.msra.mxu0 %v2770
    %3226 = vmatprep.subr.bf16.mxu0 %v2794
    %3227 = vmatpush1.bf16.msra.mxu0 %v2793
    %3228 = vmatprep.subr.bf16.mxu0 %v2817
    %3229 = vmatpush1.bf16.msra.mxu0 %v2816
    %3230 = vmatprep.subr.bf16.mxu0 %v2840
    %3231 = vmatpush1.bf16.msra.mxu0 %v2839
    %3232 = vmatprep.subr.bf16.mxu0 %v2863
    %3233 = vmatpush1.bf16.msra.mxu0 %v2862
    %3234 = vmatprep.subr.bf16.mxu0 %v2886
    %3235 = vmatpush1.bf16.msra.mxu0 %v2885
    %3236 = vmatprep.subr.bf16.mxu0 0
    %3237 = vmatpush1.bf16.msra.mxu0 0
    %3238 = vmatprep.subr.bf16.mxu0 0
    %3239 = vmatpush1.bf16.msra.mxu0 0
    %3240 = vmatprep.subr.bf16.mxu0 0
    %3241 = vmatpush1.bf16.msra.mxu0 0
    %3242 = vmatprep.subr.bf16.mxu0 0
    %3243 = vmatpush1.bf16.msra.mxu0 0
    %3244 = vmatprep.subr.bf16.mxu0 0
    %3245 = vmatpush1.bf16.msra.mxu0 0
    %3246 = vmatprep.subr.bf16.mxu0 0
    %3247 = vmatpush1.bf16.msra.mxu0 0
    %3248 = vmatprep.subr.bf16.mxu0 0
    %3249 = vmatpush1.bf16.msra.mxu0 0
    %3250 = vmatprep.mubr.bf16.mxu0 %v2988
    %3251 = vmatmul.mubr.bf16.gmra.mrb[0].mxu0 %v2974
    %v3252 = vpop.f32.mrb[0].mxu0
    %v3253 = vadd.f32 %v2913, %v3252
    %v3254 = vpop.f32.mrb[0].mxu0
    %v3255 = vadd.f32 %v2913, %v3254
    %v3256 = vpop.f32.mrb[0].mxu0
    %v3257 = vadd.f32 %v2918, %v3256
    %v3258 = vpop.f32.mrb[0].mxu0
    %v3259 = vadd.f32 %v2918, %v3258
    %3260 = vmatprep.mubr.bf16.mxu0 %v2991
    %3261 = vmatmul.mubr.bf16.gmra.mrb[0].mxu0 %v2976
    %v3262 = vpop.f32.mrb[0].mxu0
    %v3263 = vadd.f32 %v2923, %v3262
    %v3264 = vpop.f32.mrb[0].mxu0
    %v3265 = vadd.f32 %v2923, %v3264
    %v3266 = vpop.f32.mrb[0].mxu0
    %v3267 = vadd.f32 %v2928, %v3266
    %v3268 = vpop.f32.mrb[0].mxu0
    %v3269 = vadd.f32 %v2928, %v3268
    %3270 = vmatprep.mubr.bf16.mxu0 %v2994
    %3271 = vmatmul.mubr.bf16.gmra.mrb[0].mxu0 %v2978
    %v3272 = vpop.f32.mrb[0].mxu0
    %v3273 = vadd.f32 %v2933, %v3272
    %v3274 = vpop.f32.mrb[0].mxu0
    %v3275 = vadd.f32 %v2933, %v3274
    %v3276 = vpop.f32.mrb[0].mxu0
    %v3277 = vadd.f32 %v2938, %v3276
    %v3278 = vpop.f32.mrb[0].mxu0
    %v3279 = vadd.f32 %v2938, %v3278
    %3280 = vmatprep.mubr.bf16.mxu0 %v2997
    %3281 = vmatmul.mubr.bf16.gmra.mrb[0].mxu0 %v2980
    %v3282 = vpop.f32.mrb[0].mxu0
    %v3283 = vadd.f32 %v2943, %v3282
    %v3284 = vpop.f32.mrb[0].mxu0
    %v3285 = vadd.f32 %v2943, %v3284
    %v3286 = vpop.f32.mrb[0].mxu0
    %v3287 = vadd.f32 %v2948, %v3286
    %v3288 = vpop.f32.mrb[0].mxu0
    %v3289 = vadd.f32 %v2948, %v3288
    %3290 = vdwg.mxu0
    %3291 = vmatprep.subr.bf16.mxu0 %v2704
    %3292 = vmatpush1.bf16.msra.mxu0 %v2703
    %3293 = vmatprep.subr.bf16.mxu0 %v2727
    %3294 = vmatpush1.bf16.msra.mxu0 %v2726
    %3295 = vmatprep.subr.bf16.mxu0 %v2750
    %3296 = vmatpush1.bf16.msra.mxu0 %v2749
    %3297 = vmatprep.subr.bf16.mxu0 %v2773
    %3298 = vmatpush1.bf16.msra.mxu0 %v2772
    %3299 = vmatprep.subr.bf16.mxu0 %v2796
    %3300 = vmatpush1.bf16.msra.mxu0 %v2795
    %3301 = vmatprep.subr.bf16.mxu0 %v2819
    %3302 = vmatpush1.bf16.msra.mxu0 %v2818
    %3303 = vmatprep.subr.bf16.mxu0 %v2842
    %3304 = vmatpush1.bf16.msra.mxu0 %v2841
    %3305 = vmatprep.subr.bf16.mxu0 %v2865
    %3306 = vmatpush1.bf16.msra.mxu0 %v2864
    %3307 = vmatprep.subr.bf16.mxu0 %v2888
    %3308 = vmatpush1.bf16.msra.mxu0 %v2887
    %3309 = vmatprep.subr.bf16.mxu0 0
    %3310 = vmatpush1.bf16.msra.mxu0 0
    %3311 = vmatprep.subr.bf16.mxu0 0
    %3312 = vmatpush1.bf16.msra.mxu0 0
    %3313 = vmatprep.subr.bf16.mxu0 0
    %3314 = vmatpush1.bf16.msra.mxu0 0
    %3315 = vmatprep.subr.bf16.mxu0 0
    %3316 = vmatpush1.bf16.msra.mxu0 0
    %3317 = vmatprep.subr.bf16.mxu0 0
    %3318 = vmatpush1.bf16.msra.mxu0 0
    %3319 = vmatprep.subr.bf16.mxu0 0
    %3320 = vmatpush1.bf16.msra.mxu0 0
    %3321 = vmatprep.subr.bf16.mxu0 0
    %3322 = vmatpush1.bf16.msra.mxu0 0
    %3323 = vmatprep.mubr.bf16.mxu0 %v2988
    %3324 = vmatmul.mubr.bf16.gmra.mrb[0].mxu0 %v2974
    %v3325 = vpop.f32.mrb[0].mxu0
    %v3326 = vadd.f32 %v2913, %v3325
    %v3327 = vpop.f32.mrb[0].mxu0
    %v3328 = vadd.f32 %v2913, %v3327
    %v3329 = vpop.f32.mrb[0].mxu0
    %v3330 = vadd.f32 %v2918, %v3329
    %v3331 = vpop.f32.mrb[0].mxu0
    %v3332 = vadd.f32 %v2918, %v3331
    %3333 = vmatprep.mubr.bf16.mxu0 %v2991
    %3334 = vmatmul.mubr.bf16.gmra.mrb[0].mxu0 %v2976
    %v3335 = vpop.f32.mrb[0].mxu0
    %v3336 = vadd.f32 %v2923, %v3335
    %v3337 = vpop.f32.mrb[0].mxu0
    %v3338 = vadd.f32 %v2923, %v3337
    %v3339 = vpop.f32.mrb[0].mxu0
    %v3340 = vadd.f32 %v2928, %v3339
    %v3341 = vpop.f32.mrb[0].mxu0
    %v3342 = vadd.f32 %v2928, %v3341
    %3343 = vmatprep.mubr.bf16.mxu0 %v2994
    %3344 = vmatmul.mubr.bf16.gmra.mrb[0].mxu0 %v2978
    %v3345 = vpop.f32.mrb[0].mxu0
    %v3346 = vadd.f32 %v2933, %v3345
    %v3347 = vpop.f32.mrb[0].mxu0
    %v3348 = vadd.f32 %v2933, %v3347
    %v3349 = vpop.f32.mrb[0].mxu0
    %v3350 = vadd.f32 %v2938, %v3349
    %v3351 = vpop.f32.mrb[0].mxu0
    %v3352 = vadd.f32 %v2938, %v3351
    %3353 = vmatprep.mubr.bf16.mxu0 %v2997
    %3354 = vmatmul.mubr.bf16.gmra.mrb[0].mxu0 %v2980
    %v3355 = vpop.f32.mrb[0].mxu0
    %v3356 = vadd.f32 %v2943, %v3355
    %v3357 = vpop.f32.mrb[0].mxu0
    %v3358 = vadd.f32 %v2943, %v3357
    %v3359 = vpop.f32.mrb[0].mxu0
    %v3360 = vadd.f32 %v2948, %v3359
    %v3361 = vpop.f32.mrb[0].mxu0
    %v3362 = vadd.f32 %v2948, %v3361
    %3363 = vdwg.mxu0
    %3364 = vmatprep.subr.bf16.mxu0 %v2706
    %3365 = vmatpush1.bf16.msra.mxu0 %v2705
    %3366 = vmatprep.subr.bf16.mxu0 %v2729
    %3367 = vmatpush1.bf16.msra.mxu0 %v2728
    %3368 = vmatprep.subr.bf16.mxu0 %v2752
    %3369 = vmatpush1.bf16.msra.mxu0 %v2751
    %3370 = vmatprep.subr.bf16.mxu0 %v2775
    %3371 = vmatpush1.bf16.msra.mxu0 %v2774
    %3372 = vmatprep.subr.bf16.mxu0 %v2798
    %3373 = vmatpush1.bf16.msra.mxu0 %v2797
    %3374 = vmatprep.subr.bf16.mxu0 %v2821
    %3375 = vmatpush1.bf16.msra.mxu0 %v2820
    %3376 = vmatprep.subr.bf16.mxu0 %v2844
    %3377 = vmatpush1.bf16.msra.mxu0 %v2843
    %3378 = vmatprep.subr.bf16.mxu0 %v2867
    %3379 = vmatpush1.bf16.msra.mxu0 %v2866
    %3380 = vmatprep.subr.bf16.mxu0 %v2890
    %3381 = vmatpush1.bf16.msra.mxu0 %v2889
    %3382 = vmatprep.subr.bf16.mxu0 0
    %3383 = vmatpush1.bf16.msra.mxu0 0
    %3384 = vmatprep.subr.bf16.mxu0 0
    %3385 = vmatpush1.bf16.msra.mxu0 0
    %3386 = vmatprep.subr.bf16.mxu0 0
    %3387 = vmatpush1.bf16.msra.mxu0 0
    %3388 = vmatprep.subr.bf16.mxu0 0
    %3389 = vmatpush1.bf16.msra.mxu0 0
    %3390 = vmatprep.subr.bf16.mxu0 0
    %3391 = vmatpush1.bf16.msra.mxu0 0
    %3392 = vmatprep.subr.bf16.mxu0 0
    %3393 = vmatpush1.bf16.msra.mxu0 0
    %3394 = vmatprep.subr.bf16.mxu0 0
    %3395 = vmatpush1.bf16.msra.mxu0 0
    %3396 = vmatprep.mubr.bf16.mxu0 %v2988
    %3397 = vmatmul.mubr.bf16.gmra.mrb[0].mxu0 %v2974
    %v3398 = vpop.f32.mrb[0].mxu0
    %v3399 = vadd.f32 %v2913, %v3398
    %v3400 = vpop.f32.mrb[0].mxu0
    %v3401 = vadd.f32 %v2913, %v3400
    %v3402 = vpop.f32.mrb[0].mxu0
    %v3403 = vadd.f32 %v2918, %v3402
    %v3404 = vpop.f32.mrb[0].mxu0
    %v3405 = vadd.f32 %v2918, %v3404
    %3406 = vmatprep.mubr.bf16.mxu0 %v2991
    %3407 = vmatmul.mubr.bf16.gmra.mrb[0].mxu0 %v2976
    %v3408 = vpop.f32.mrb[0].mxu0
    %v3409 = vadd.f32 %v2923, %v3408
    %v3410 = vpop.f32.mrb[0].mxu0
    %v3411 = vadd.f32 %v2923, %v3410
    %v3412 = vpop.f32.mrb[0].mxu0
    %v3413 = vadd.f32 %v2928, %v3412
    %v3414 = vpop.f32.mrb[0].mxu0
    %v3415 = vadd.f32 %v2928, %v3414
    %3416 = vmatprep.mubr.bf16.mxu0 %v2994
    %3417 = vmatmul.mubr.bf16.gmra.mrb[0].mxu0 %v2978
    %v3418 = vpop.f32.mrb[0].mxu0
    %v3419 = vadd.f32 %v2933, %v3418
    %v3420 = vpop.f32.mrb[0].mxu0
    %v3421 = vadd.f32 %v2933, %v3420
    %v3422 = vpop.f32.mrb[0].mxu0
    %v3423 = vadd.f32 %v2938, %v3422
    %v3424 = vpop.f32.mrb[0].mxu0
    %v3425 = vadd.f32 %v2938, %v3424
    %3426 = vmatprep.mubr.bf16.mxu0 %v2997
    %3427 = vmatmul.mubr.bf16.gmra.mrb[0].mxu0 %v2980
    %v3428 = vpop.f32.mrb[0].mxu0
    %v3429 = vadd.f32 %v2943, %v3428
    %v3430 = vpop.f32.mrb[0].mxu0
    %v3431 = vadd.f32 %v2943, %v3430
    %v3432 = vpop.f32.mrb[0].mxu0
    %v3433 = vadd.f32 %v2948, %v3432
    %v3434 = vpop.f32.mrb[0].mxu0
    %v3435 = vadd.f32 %v2948, %v3434
    %3436 = vdwg.mxu0
    %3437 = vmatprep.subr.bf16.mxu0 %v2708
    %3438 = vmatpush1.bf16.msra.mxu0 %v2707
    %3439 = vmatprep.subr.bf16.mxu0 %v2731
    %3440 = vmatpush1.bf16.msra.mxu0 %v2730
    %3441 = vmatprep.subr.bf16.mxu0 %v2754
    %3442 = vmatpush1.bf16.msra.mxu0 %v2753
    %3443 = vmatprep.subr.bf16.mxu0 %v2777
    %3444 = vmatpush1.bf16.msra.mxu0 %v2776
    %3445 = vmatprep.subr.bf16.mxu0 %v2800
    %3446 = vmatpush1.bf16.msra.mxu0 %v2799
    %3447 = vmatprep.subr.bf16.mxu0 %v2823
    %3448 = vmatpush1.bf16.msra.mxu0 %v2822
    %3449 = vmatprep.subr.bf16.mxu0 %v2846
    %3450 = vmatpush1.bf16.msra.mxu0 %v2845
    %3451 = vmatprep.subr.bf16.mxu0 %v2869
    %3452 = vmatpush1.bf16.msra.mxu0 %v2868
    %3453 = vmatprep.subr.bf16.mxu0 %v2892
    %3454 = vmatpush1.bf16.msra.mxu0 %v2891
    %3455 = vmatprep.subr.bf16.mxu0 0
    %3456 = vmatpush1.bf16.msra.mxu0 0
    %3457 = vmatprep.subr.bf16.mxu0 0
    %3458 = vmatpush1.bf16.msra.mxu0 0
    %3459 = vmatprep.subr.bf16.mxu0 0
    %3460 = vmatpush1.bf16.msra.mxu0 0
    %3461 = vmatprep.subr.bf16.mxu0 0
    %3462 = vmatpush1.bf16.msra.mxu0 0
    %3463 = vmatprep.subr.bf16.mxu0 0
    %3464 = vmatpush1.bf16.msra.mxu0 0
    %3465 = vmatprep.subr.bf16.mxu0 0
    %3466 = vmatpush1.bf16.msra.mxu0 0
    %3467 = vmatprep.subr.bf16.mxu0 0
    %3468 = vmatpush1.bf16.msra.mxu0 0
    %3469 = vmatprep.mubr.bf16.mxu0 %v2988
    %3470 = vmatmul.mubr.bf16.gmra.mrb[0].mxu0 %v2974
    %v3471 = vpop.f32.mrb[0].mxu0
    %v3472 = vadd.f32 %v2913, %v3471
    %v3473 = vpop.f32.mrb[0].mxu0
    %v3474 = vadd.f32 %v2913, %v3473
    %v3475 = vpop.f32.mrb[0].mxu0
    %v3476 = vadd.f32 %v2918, %v3475
    %v3477 = vpop.f32.mrb[0].mxu0
    %v3478 = vadd.f32 %v2918, %v3477
    %3479 = vmatprep.mubr.bf16.mxu0 %v2991
    %3480 = vmatmul.mubr.bf16.gmra.mrb[0].mxu0 %v2976
    %v3481 = vpop.f32.mrb[0].mxu0
    %v3482 = vadd.f32 %v2923, %v3481
    %v3483 = vpop.f32.mrb[0].mxu0
    %v3484 = vadd.f32 %v2923, %v3483
    %v3485 = vpop.f32.mrb[0].mxu0
    %v3486 = vadd.f32 %v2928, %v3485
    %v3487 = vpop.f32.mrb[0].mxu0
    %v3488 = vadd.f32 %v2928, %v3487
    %3489 = vmatprep.mubr.bf16.mxu0 %v2994
    %3490 = vmatmul.mubr.bf16.gmra.mrb[0].mxu0 %v2978
    %v3491 = vpop.f32.mrb[0].mxu0
    %v3492 = vadd.f32 %v2933, %v3491
    %v3493 = vpop.f32.mrb[0].mxu0
    %v3494 = vadd.f32 %v2933, %v3493
    %v3495 = vpop.f32.mrb[0].mxu0
    %v3496 = vadd.f32 %v2938, %v3495
    %v3497 = vpop.f32.mrb[0].mxu0
    %v3498 = vadd.f32 %v2938, %v3497
    %3499 = vmatprep.mubr.bf16.mxu0 %v2997
    %3500 = vmatmul.mubr.bf16.gmra.mrb[0].mxu0 %v2980
    %v3501 = vpop.f32.mrb[0].mxu0
    %v3502 = vadd.f32 %v2943, %v3501
    %v3503 = vpop.f32.mrb[0].mxu0
    %v3504 = vadd.f32 %v2943, %v3503
    %v3505 = vpop.f32.mrb[0].mxu0
    %v3506 = vadd.f32 %v2948, %v3505
    %v3507 = vpop.f32.mrb[0].mxu0
    %v3508 = vadd.f32 %v2948, %v3507
    %3509 = vdwg.mxu0
    %3510 = vmatprep.subr.bf16.mxu0 %v2710
    %3511 = vmatpush1.bf16.msra.mxu0 %v2709
    %3512 = vmatprep.subr.bf16.mxu0 %v2733
    %3513 = vmatpush1.bf16.msra.mxu0 %v2732
    %3514 = vmatprep.subr.bf16.mxu0 %v2756
    %3515 = vmatpush1.bf16.msra.mxu0 %v2755
    %3516 = vmatprep.subr.bf16.mxu0 %v2779
    %3517 = vmatpush1.bf16.msra.mxu0 %v2778
    %3518 = vmatprep.subr.bf16.mxu0 %v2802
    %3519 = vmatpush1.bf16.msra.mxu0 %v2801
    %3520 = vmatprep.subr.bf16.mxu0 %v2825
    %3521 = vmatpush1.bf16.msra.mxu0 %v2824
    %3522 = vmatprep.subr.bf16.mxu0 %v2848
    %3523 = vmatpush1.bf16.msra.mxu0 %v2847
    %3524 = vmatprep.subr.bf16.mxu0 %v2871
    %3525 = vmatpush1.bf16.msra.mxu0 %v2870
    %3526 = vmatprep.subr.bf16.mxu0 %v2894
    %3527 = vmatpush1.bf16.msra.mxu0 %v2893
    %3528 = vmatprep.subr.bf16.mxu0 0
    %3529 = vmatpush1.bf16.msra.mxu0 0
    %3530 = vmatprep.subr.bf16.mxu0 0
    %3531 = vmatpush1.bf16.msra.mxu0 0
    %3532 = vmatprep.subr.bf16.mxu0 0
    %3533 = vmatpush1.bf16.msra.mxu0 0
    %3534 = vmatprep.subr.bf16.mxu0 0
    %3535 = vmatpush1.bf16.msra.mxu0 0
    %3536 = vmatprep.subr.bf16.mxu0 0
    %3537 = vmatpush1.bf16.msra.mxu0 0
    %3538 = vmatprep.subr.bf16.mxu0 0
    %3539 = vmatpush1.bf16.msra.mxu0 0
    %3540 = vmatprep.subr.bf16.mxu0 0
    %3541 = vmatpush1.bf16.msra.mxu0 0
    %3542 = vmatprep.mubr.bf16.mxu0 %v2988
    %3543 = vmatmul.mubr.bf16.gmra.mrb[0].mxu0 %v2974
    %v3544 = vpop.f32.mrb[0].mxu0
    %v3545 = vadd.f32 %v2913, %v3544
    %v3546 = vpop.f32.mrb[0].mxu0
    %v3547 = vadd.f32 %v2913, %v3546
    %v3548 = vpop.f32.mrb[0].mxu0
    %v3549 = vadd.f32 %v2918, %v3548
    %v3550 = vpop.f32.mrb[0].mxu0
    %v3551 = vadd.f32 %v2918, %v3550
    %3552 = vmatprep.mubr.bf16.mxu0 %v2991
    %3553 = vmatmul.mubr.bf16.gmra.mrb[0].mxu0 %v2976
    %v3554 = vpop.f32.mrb[0].mxu0
    %v3555 = vadd.f32 %v2923, %v3554
    %v3556 = vpop.f32.mrb[0].mxu0
    %v3557 = vadd.f32 %v2923, %v3556
    %v3558 = vpop.f32.mrb[0].mxu0
    %v3559 = vadd.f32 %v2928, %v3558
    %v3560 = vpop.f32.mrb[0].mxu0
    %v3561 = vadd.f32 %v2928, %v3560
    %3562 = vmatprep.mubr.bf16.mxu0 %v2994
    %3563 = vmatmul.mubr.bf16.gmra.mrb[0].mxu0 %v2978
    %v3564 = vpop.f32.mrb[0].mxu0
    %v3565 = vadd.f32 %v2933, %v3564
    %v3566 = vpop.f32.mrb[0].mxu0
    %v3567 = vadd.f32 %v2933, %v3566
    %v3568 = vpop.f32.mrb[0].mxu0
    %v3569 = vadd.f32 %v2938, %v3568
    %v3570 = vpop.f32.mrb[0].mxu0
    %v3571 = vadd.f32 %v2938, %v3570
    %3572 = vmatprep.mubr.bf16.mxu0 %v2997
    %3573 = vmatmul.mubr.bf16.gmra.mrb[0].mxu0 %v2980
    %v3574 = vpop.f32.mrb[0].mxu0
    %v3575 = vadd.f32 %v2943, %v3574
    %v3576 = vpop.f32.mrb[0].mxu0
    %v3577 = vadd.f32 %v2943, %v3576
    %v3578 = vpop.f32.mrb[0].mxu0
    %v3579 = vadd.f32 %v2948, %v3578
    %v3580 = vpop.f32.mrb[0].mxu0
    %v3581 = vadd.f32 %v2948, %v3580
    %3582 = vdwg.mxu0
    %3583 = vmatprep.subr.bf16.mxu0 %v2712
    %3584 = vmatpush1.bf16.msra.mxu0 %v2711
    %3585 = vmatprep.subr.bf16.mxu0 %v2735
    %3586 = vmatpush1.bf16.msra.mxu0 %v2734
    %3587 = vmatprep.subr.bf16.mxu0 %v2758
    %3588 = vmatpush1.bf16.msra.mxu0 %v2757
    %3589 = vmatprep.subr.bf16.mxu0 %v2781
    %3590 = vmatpush1.bf16.msra.mxu0 %v2780
    %3591 = vmatprep.subr.bf16.mxu0 %v2804
    %3592 = vmatpush1.bf16.msra.mxu0 %v2803
    %3593 = vmatprep.subr.bf16.mxu0 %v2827
    %3594 = vmatpush1.bf16.msra.mxu0 %v2826
    %3595 = vmatprep.subr.bf16.mxu0 %v2850
    %3596 = vmatpush1.bf16.msra.mxu0 %v2849
    %3597 = vmatprep.subr.bf16.mxu0 %v2873
    %3598 = vmatpush1.bf16.msra.mxu0 %v2872
    %3599 = vmatprep.subr.bf16.mxu0 %v2896
    %3600 = vmatpush1.bf16.msra.mxu0 %v2895
    %3601 = vmatprep.subr.bf16.mxu0 0
    %3602 = vmatpush1.bf16.msra.mxu0 0
    %3603 = vmatprep.subr.bf16.mxu0 0
    %3604 = vmatpush1.bf16.msra.mxu0 0
    %3605 = vmatprep.subr.bf16.mxu0 0
    %3606 = vmatpush1.bf16.msra.mxu0 0
    %3607 = vmatprep.subr.bf16.mxu0 0
    %3608 = vmatpush1.bf16.msra.mxu0 0
    %3609 = vmatprep.subr.bf16.mxu0 0
    %3610 = vmatpush1.bf16.msra.mxu0 0
    %3611 = vmatprep.subr.bf16.mxu0 0
    %3612 = vmatpush1.bf16.msra.mxu0 0
    %3613 = vmatprep.subr.bf16.mxu0 0
    %3614 = vmatpush1.bf16.msra.mxu0 0
    %3615 = vmatprep.mubr.bf16.mxu0 %v2988
    %3616 = vmatmul.mubr.bf16.gmra.mrb[0].mxu0 %v2974
    %v3617 = vpop.f32.mrb[0].mxu0
    %v3618 = vadd.f32 %v2913, %v3617
    %v3619 = vpop.f32.mrb[0].mxu0
    %v3620 = vadd.f32 %v2913, %v3619
    %v3621 = vpop.f32.mrb[0].mxu0
    %v3622 = vadd.f32 %v2918, %v3621
    %v3623 = vpop.f32.mrb[0].mxu0
    %v3624 = vadd.f32 %v2918, %v3623
    %3625 = vmatprep.mubr.bf16.mxu0 %v2991
    %3626 = vmatmul.mubr.bf16.gmra.mrb[0].mxu0 %v2976
    %v3627 = vpop.f32.mrb[0].mxu0
    %v3628 = vadd.f32 %v2923, %v3627
    %v3629 = vpop.f32.mrb[0].mxu0
    %v3630 = vadd.f32 %v2923, %v3629
    %v3631 = vpop.f32.mrb[0].mxu0
    %v3632 = vadd.f32 %v2928, %v3631
    %v3633 = vpop.f32.mrb[0].mxu0
    %v3634 = vadd.f32 %v2928, %v3633
    %3635 = vmatprep.mubr.bf16.mxu0 %v2994
    %3636 = vmatmul.mubr.bf16.gmra.mrb[0].mxu0 %v2978
    %v3637 = vpop.f32.mrb[0].mxu0
    %v3638 = vadd.f32 %v2933, %v3637
    %v3639 = vpop.f32.mrb[0].mxu0
    %v3640 = vadd.f32 %v2933, %v3639
    %v3641 = vpop.f32.mrb[0].mxu0
    %v3642 = vadd.f32 %v2938, %v3641
    %v3643 = vpop.f32.mrb[0].mxu0
    %v3644 = vadd.f32 %v2938, %v3643
    %3645 = vmatprep.mubr.bf16.mxu0 %v2997
    %3646 = vmatmul.mubr.bf16.gmra.mrb[0].mxu0 %v2980
    %v3647 = vpop.f32.mrb[0].mxu0
    %v3648 = vadd.f32 %v2943, %v3647
    %v3649 = vpop.f32.mrb[0].mxu0
    %v3650 = vadd.f32 %v2943, %v3649
    %v3651 = vpop.f32.mrb[0].mxu0
    %v3652 = vadd.f32 %v2948, %v3651
    %v3653 = vpop.f32.mrb[0].mxu0
    %v3654 = vadd.f32 %v2948, %v3653
    %3655 = vdwg.mxu0
    %3656 = vmatprep.subr.bf16.mxu0 %v2714
    %3657 = vmatpush1.bf16.msra.mxu0 %v2713
    %3658 = vmatprep.subr.bf16.mxu0 %v2737
    %3659 = vmatpush1.bf16.msra.mxu0 %v2736
    %3660 = vmatprep.subr.bf16.mxu0 %v2760
    %3661 = vmatpush1.bf16.msra.mxu0 %v2759
    %3662 = vmatprep.subr.bf16.mxu0 %v2783
    %3663 = vmatpush1.bf16.msra.mxu0 %v2782
    %3664 = vmatprep.subr.bf16.mxu0 %v2806
    %3665 = vmatpush1.bf16.msra.mxu0 %v2805
    %3666 = vmatprep.subr.bf16.mxu0 %v2829
    %3667 = vmatpush1.bf16.msra.mxu0 %v2828
    %3668 = vmatprep.subr.bf16.mxu0 %v2852
    %3669 = vmatpush1.bf16.msra.mxu0 %v2851
    %3670 = vmatprep.subr.bf16.mxu0 %v2875
    %3671 = vmatpush1.bf16.msra.mxu0 %v2874
    %3672 = vmatprep.subr.bf16.mxu0 %v2898
    %3673 = vmatpush1.bf16.msra.mxu0 %v2897
    %3674 = vmatprep.subr.bf16.mxu0 0
    %3675 = vmatpush1.bf16.msra.mxu0 0
    %3676 = vmatprep.subr.bf16.mxu0 0
    %3677 = vmatpush1.bf16.msra.mxu0 0
    %3678 = vmatprep.subr.bf16.mxu0 0
    %3679 = vmatpush1.bf16.msra.mxu0 0
    %3680 = vmatprep.subr.bf16.mxu0 0
    %3681 = vmatpush1.bf16.msra.mxu0 0
    %3682 = vmatprep.subr.bf16.mxu0 0
    %3683 = vmatpush1.bf16.msra.mxu0 0
    %3684 = vmatprep.subr.bf16.mxu0 0
    %3685 = vmatpush1.bf16.msra.mxu0 0
    %3686 = vmatprep.subr.bf16.mxu0 0
    %3687 = vmatpush1.bf16.msra.mxu0 0
    %3688 = vmatprep.mubr.bf16.mxu0 %v2988
    %3689 = vmatmul.mubr.bf16.gmra.mrb[0].mxu0 %v2974
    %v3690 = vpop.f32.mrb[0].mxu0
    %v3691 = vadd.f32 %v2913, %v3690
    %v3692 = vpop.f32.mrb[0].mxu0
    %v3693 = vadd.f32 %v2913, %v3692
    %v3694 = vpop.f32.mrb[0].mxu0
    %v3695 = vadd.f32 %v2918, %v3694
    %v3696 = vpop.f32.mrb[0].mxu0
    %v3697 = vadd.f32 %v2918, %v3696
    %3698 = vmatprep.mubr.bf16.mxu0 %v2991
    %3699 = vmatmul.mubr.bf16.gmra.mrb[0].mxu0 %v2976
    %v3700 = vpop.f32.mrb[0].mxu0
    %v3701 = vadd.f32 %v2923, %v3700
    %v3702 = vpop.f32.mrb[0].mxu0
    %v3703 = vadd.f32 %v2923, %v3702
    %v3704 = vpop.f32.mrb[0].mxu0
    %v3705 = vadd.f32 %v2928, %v3704
    %v3706 = vpop.f32.mrb[0].mxu0
    %v3707 = vadd.f32 %v2928, %v3706
    %3708 = vmatprep.mubr.bf16.mxu0 %v2994
    %3709 = vmatmul.mubr.bf16.gmra.mrb[0].mxu0 %v2978
    %v3710 = vpop.f32.mrb[0].mxu0
    %v3711 = vadd.f32 %v2933, %v3710
    %v3712 = vpop.f32.mrb[0].mxu0
    %v3713 = vadd.f32 %v2933, %v3712
    %v3714 = vpop.f32.mrb[0].mxu0
    %v3715 = vadd.f32 %v2938, %v3714
    %v3716 = vpop.f32.mrb[0].mxu0
    %v3717 = vadd.f32 %v2938, %v3716
    %3718 = vmatprep.mubr.bf16.mxu0 %v2997
    %3719 = vmatmul.mubr.bf16.gmra.mrb[0].mxu0 %v2980
    %v3720 = vpop.f32.mrb[0].mxu0
    %v3721 = vadd.f32 %v2943, %v3720
    %v3722 = vpop.f32.mrb[0].mxu0
    %v3723 = vadd.f32 %v2943, %v3722
    %v3724 = vpop.f32.mrb[0].mxu0
    %v3725 = vadd.f32 %v2948, %v3724
    %v3726 = vpop.f32.mrb[0].mxu0
    %v3727 = vadd.f32 %v2948, %v3726
    %3728 = vdwg.mxu0
    %3729 = vmatprep.subr.bf16.mxu0 %v2716
    %3730 = vmatpush1.bf16.msra.mxu0 %v2715
    %3731 = vmatprep.subr.bf16.mxu0 %v2739
    %3732 = vmatpush1.bf16.msra.mxu0 %v2738
    %3733 = vmatprep.subr.bf16.mxu0 %v2762
    %3734 = vmatpush1.bf16.msra.mxu0 %v2761
    %3735 = vmatprep.subr.bf16.mxu0 %v2785
    %3736 = vmatpush1.bf16.msra.mxu0 %v2784
    %3737 = vmatprep.subr.bf16.mxu0 %v2808
    %3738 = vmatpush1.bf16.msra.mxu0 %v2807
    %3739 = vmatprep.subr.bf16.mxu0 %v2831
    %3740 = vmatpush1.bf16.msra.mxu0 %v2830
    %3741 = vmatprep.subr.bf16.mxu0 %v2854
    %3742 = vmatpush1.bf16.msra.mxu0 %v2853
    %3743 = vmatprep.subr.bf16.mxu0 %v2877
    %3744 = vmatpush1.bf16.msra.mxu0 %v2876
    %3745 = vmatprep.subr.bf16.mxu0 %v2900
    %3746 = vmatpush1.bf16.msra.mxu0 %v2899
    %3747 = vmatprep.subr.bf16.mxu0 0
    %3748 = vmatpush1.bf16.msra.mxu0 0
    %3749 = vmatprep.subr.bf16.mxu0 0
    %3750 = vmatpush1.bf16.msra.mxu0 0
    %3751 = vmatprep.subr.bf16.mxu0 0
    %3752 = vmatpush1.bf16.msra.mxu0 0
    %3753 = vmatprep.subr.bf16.mxu0 0
    %3754 = vmatpush1.bf16.msra.mxu0 0
    %3755 = vmatprep.subr.bf16.mxu0 0
    %3756 = vmatpush1.bf16.msra.mxu0 0
    %3757 = vmatprep.subr.bf16.mxu0 0
    %3758 = vmatpush1.bf16.msra.mxu0 0
    %3759 = vmatprep.subr.bf16.mxu0 0
    %3760 = vmatpush1.bf16.msra.mxu0 0
    %3761 = vmatprep.mubr.bf16.mxu0 %v2988
    %3762 = vmatmul.mubr.bf16.gmra.mrb[0].mxu0 %v2974
    %v3763 = vpop.f32.mrb[0].mxu0
    %v3764 = vadd.f32 %v2913, %v3763
    %v3765 = vpop.f32.mrb[0].mxu0
    %v3766 = vadd.f32 %v2913, %v3765
    %v3767 = vpop.f32.mrb[0].mxu0
    %v3768 = vadd.f32 %v2918, %v3767
    %v3769 = vpop.f32.mrb[0].mxu0
    %v3770 = vadd.f32 %v2918, %v3769
    %3771 = vmatprep.mubr.bf16.mxu0 %v2991
    %3772 = vmatmul.mubr.bf16.gmra.mrb[0].mxu0 %v2976
    %v3773 = vpop.f32.mrb[0].mxu0
    %v3774 = vadd.f32 %v2923, %v3773
    %v3775 = vpop.f32.mrb[0].mxu0
    %v3776 = vadd.f32 %v2923, %v3775
    %v3777 = vpop.f32.mrb[0].mxu0
    %v3778 = vadd.f32 %v2928, %v3777
    %v3779 = vpop.f32.mrb[0].mxu0
    %v3780 = vadd.f32 %v2928, %v3779
    %3781 = vmatprep.mubr.bf16.mxu0 %v2994
    %3782 = vmatmul.mubr.bf16.gmra.mrb[0].mxu0 %v2978
    %v3783 = vpop.f32.mrb[0].mxu0
    %v3784 = vadd.f32 %v2933, %v3783
    %v3785 = vpop.f32.mrb[0].mxu0
    %v3786 = vadd.f32 %v2933, %v3785
    %v3787 = vpop.f32.mrb[0].mxu0
    %v3788 = vadd.f32 %v2938, %v3787
    %v3789 = vpop.f32.mrb[0].mxu0
    %v3790 = vadd.f32 %v2938, %v3789
    %3791 = vmatprep.mubr.bf16.mxu0 %v2997
    %3792 = vmatmul.mubr.bf16.gmra.mrb[0].mxu0 %v2980
    %v3793 = vpop.f32.mrb[0].mxu0
    %v3794 = vadd.f32 %v2943, %v3793
    %v3795 = vpop.f32.mrb[0].mxu0
    %v3796 = vadd.f32 %v2943, %v3795
    %v3797 = vpop.f32.mrb[0].mxu0
    %v3798 = vadd.f32 %v2948, %v3797
    %v3799 = vpop.f32.mrb[0].mxu0
    %v3800 = vadd.f32 %v2948, %v3799
    %3801 = vdwg.mxu0
    %3802 = vmatprep.subr.bf16.mxu0 0
    %3803 = vmatpush1.bf16.msra.mxu0 %v2717
    %3804 = vmatprep.subr.bf16.mxu0 0
    %3805 = vmatpush1.bf16.msra.mxu0 %v2740
    %3806 = vmatprep.subr.bf16.mxu0 0
    %3807 = vmatpush1.bf16.msra.mxu0 %v2763
    %3808 = vmatprep.subr.bf16.mxu0 0
    %3809 = vmatpush1.bf16.msra.mxu0 %v2786
    %3810 = vmatprep.subr.bf16.mxu0 0
    %3811 = vmatpush1.bf16.msra.mxu0 %v2809
    %3812 = vmatprep.subr.bf16.mxu0 0
    %3813 = vmatpush1.bf16.msra.mxu0 %v2832
    %3814 = vmatprep.subr.bf16.mxu0 0
    %3815 = vmatpush1.bf16.msra.mxu0 %v2855
    %3816 = vmatprep.subr.bf16.mxu0 0
    %3817 = vmatpush1.bf16.msra.mxu0 %v2878
    %3818 = vmatprep.subr.bf16.mxu0 0
    %3819 = vmatpush1.bf16.msra.mxu0 %v2901
    %3820 = vmatprep.subr.bf16.mxu0 0
    %3821 = vmatpush1.bf16.msra.mxu0 0
    %3822 = vmatprep.subr.bf16.mxu0 0
    %3823 = vmatpush1.bf16.msra.mxu0 0
    %3824 = vmatprep.subr.bf16.mxu0 0
    %3825 = vmatpush1.bf16.msra.mxu0 0
    %3826 = vmatprep.subr.bf16.mxu0 0
    %3827 = vmatpush1.bf16.msra.mxu0 0
    %3828 = vmatprep.subr.bf16.mxu0 0
    %3829 = vmatpush1.bf16.msra.mxu0 0
    %3830 = vmatprep.subr.bf16.mxu0 0
    %3831 = vmatpush1.bf16.msra.mxu0 0
    %3832 = vmatprep.subr.bf16.mxu0 0
    %3833 = vmatpush1.bf16.msra.mxu0 0
    %3834 = vmatprep.mubr.bf16.mxu0 %v2988
    %3835 = vmatmul.mubr.bf16.gmra.mrb[0].mxu0 %v2974
    %v3836 = vpop.f32.mrb[0].mxu0
    %v3837 = vadd.f32 %v2913, %v3836
    %v3838 = vpop.f32.mrb[0].mxu0
    %v3839 = vpop.f32.mrb[0].mxu0
    %v3840 = vadd.f32 %v2918, %v3839
    %v3841 = vpop.f32.mrb[0].mxu0
    %3842 = vmatprep.mubr.bf16.mxu0 %v2991
    %3843 = vmatmul.mubr.bf16.gmra.mrb[0].mxu0 %v2976
    %v3844 = vpop.f32.mrb[0].mxu0
    %v3845 = vadd.f32 %v2923, %v3844
    %v3846 = vpop.f32.mrb[0].mxu0
    %v3847 = vpop.f32.mrb[0].mxu0
    %v3848 = vadd.f32 %v2928, %v3847
    %v3849 = vpop.f32.mrb[0].mxu0
    %3850 = vmatprep.mubr.bf16.mxu0 %v2994
    %3851 = vmatmul.mubr.bf16.gmra.mrb[0].mxu0 %v2978
    %v3852 = vpop.f32.mrb[0].mxu0
    %v3853 = vadd.f32 %v2933, %v3852
    %v3854 = vpop.f32.mrb[0].mxu0
    %v3855 = vpop.f32.mrb[0].mxu0
    %v3856 = vadd.f32 %v2938, %v3855
    %v3857 = vpop.f32.mrb[0].mxu0
    %3858 = vmatprep.mubr.bf16.mxu0 %v2997
    %3859 = vmatmul.mubr.bf16.gmra.mrb[0].mxu0 %v2980
    %v3860 = vpop.f32.mrb[0].mxu0
    %v3861 = vadd.f32 %v2943, %v3860
    %v3862 = vpop.f32.mrb[0].mxu0
    %v3863 = vpop.f32.mrb[0].mxu0
    %v3864 = vadd.f32 %v2948, %v3863
    %v3865 = vpop.f32.mrb[0].mxu0
    %3866 = vdwg.mxu0
    %v3867 = vmax.f32 %v3034, 0.0
    %v3868 = vmax.f32 %v3036, 0.0
    %v3869 = vmax.f32 %v3107, 0.0
    %v3870 = vmax.f32 %v3109, 0.0
    %v3871 = vmax.f32 %v3180, 0.0
    %v3872 = vmax.f32 %v3182, 0.0
    %v3873 = vmax.f32 %v3253, 0.0
    %v3874 = vmax.f32 %v3255, 0.0
    %v3875 = vmax.f32 %v3326, 0.0
    %v3876 = vmax.f32 %v3328, 0.0
    %v3877 = vmax.f32 %v3399, 0.0
    %v3878 = vmax.f32 %v3401, 0.0
    %v3879 = vmax.f32 %v3472, 0.0
    %v3880 = vmax.f32 %v3474, 0.0
    %v3881 = vmax.f32 %v3545, 0.0
    %v3882 = vmax.f32 %v3547, 0.0
    %v3883 = vmax.f32 %v3618, 0.0
    %v3884 = vmax.f32 %v3620, 0.0
    %v3885 = vmax.f32 %v3691, 0.0
    %v3886 = vmax.f32 %v3693, 0.0
    %v3887 = vmax.f32 %v3764, 0.0
    %v3888 = vmax.f32 %v3766, 0.0
    %v3889 = vmax.f32 %v3837, 0.0
    %v3890 = vmax.f32 %v3038, 0.0
    %v3891 = vmax.f32 %v3040, 0.0
    %v3892 = vmax.f32 %v3111, 0.0
    %v3893 = vmax.f32 %v3113, 0.0
    %v3894 = vmax.f32 %v3184, 0.0
    %v3895 = vmax.f32 %v3186, 0.0
    %v3896 = vmax.f32 %v3257, 0.0
    %v3897 = vmax.f32 %v3259, 0.0
    %v3898 = vmax.f32 %v3330, 0.0
    %v3899 = vmax.f32 %v3332, 0.0
    %v3900 = vmax.f32 %v3403, 0.0
    %v3901 = vmax.f32 %v3405, 0.0
    %v3902 = vmax.f32 %v3476, 0.0
    %v3903 = vmax.f32 %v3478, 0.0
    %v3904 = vmax.f32 %v3549, 0.0
    %v3905 = vmax.f32 %v3551, 0.0
    %v3906 = vmax.f32 %v3622, 0.0
    %v3907 = vmax.f32 %v3624, 0.0
    %v3908 = vmax.f32 %v3695, 0.0
    %v3909 = vmax.f32 %v3697, 0.0
    %v3910 = vmax.f32 %v3768, 0.0
    %v3911 = vmax.f32 %v3770, 0.0
    %v3912 = vmax.f32 %v3840, 0.0
    %v3913 = vmax.f32 %v3044, 0.0
    %v3914 = vmax.f32 %v3046, 0.0
    %v3915 = vmax.f32 %v3117, 0.0
    %v3916 = vmax.f32 %v3119, 0.0
    %v3917 = vmax.f32 %v3190, 0.0
    %v3918 = vmax.f32 %v3192, 0.0
    %v3919 = vmax.f32 %v3263, 0.0
    %v3920 = vmax.f32 %v3265, 0.0
    %v3921 = vmax.f32 %v3336, 0.0
    %v3922 = vmax.f32 %v3338, 0.0
    %v3923 = vmax.f32 %v3409, 0.0
    %v3924 = vmax.f32 %v3411, 0.0
    %v3925 = vmax.f32 %v3482, 0.0
    %v3926 = vmax.f32 %v3484, 0.0
    %v3927 = vmax.f32 %v3555, 0.0
    %v3928 = vmax.f32 %v3557, 0.0
    %v3929 = vmax.f32 %v3628, 0.0
    %v3930 = vmax.f32 %v3630, 0.0
    %v3931 = vmax.f32 %v3701, 0.0
    %v3932 = vmax.f32 %v3703, 0.0
    %v3933 = vmax.f32 %v3774, 0.0
    %v3934 = vmax.f32 %v3776, 0.0
    %v3935 = vmax.f32 %v3845, 0.0
    %v3936 = vmax.f32 %v3048, 0.0
    %v3937 = vmax.f32 %v3050, 0.0
    %v3938 = vmax.f32 %v3121, 0.0
    %v3939 = vmax.f32 %v3123, 0.0
    %v3940 = vmax.f32 %v3194, 0.0
    %v3941 = vmax.f32 %v3196, 0.0
    %v3942 = vmax.f32 %v3267, 0.0
    %v3943 = vmax.f32 %v3269, 0.0
    %v3944 = vmax.f32 %v3340, 0.0
    %v3945 = vmax.f32 %v3342, 0.0
    %v3946 = vmax.f32 %v3413, 0.0
    %v3947 = vmax.f32 %v3415, 0.0
    %v3948 = vmax.f32 %v3486, 0.0
    %v3949 = vmax.f32 %v3488, 0.0
    %v3950 = vmax.f32 %v3559, 0.0
    %v3951 = vmax.f32 %v3561, 0.0
    %v3952 = vmax.f32 %v3632, 0.0
    %v3953 = vmax.f32 %v3634, 0.0
    %v3954 = vmax.f32 %v3705, 0.0
    %v3955 = vmax.f32 %v3707, 0.0
    %v3956 = vmax.f32 %v3778, 0.0
    %v3957 = vmax.f32 %v3780, 0.0
    %v3958 = vmax.f32 %v3848, 0.0
    %v3959 = vmax.f32 %v3054, 0.0
    %v3960 = vmax.f32 %v3056, 0.0
    %v3961 = vmax.f32 %v3127, 0.0
    %v3962 = vmax.f32 %v3129, 0.0
    %v3963 = vmax.f32 %v3200, 0.0
    %v3964 = vmax.f32 %v3202, 0.0
    %v3965 = vmax.f32 %v3273, 0.0
    %v3966 = vmax.f32 %v3275, 0.0
    %v3967 = vmax.f32 %v3346, 0.0
    %v3968 = vmax.f32 %v3348, 0.0
    %v3969 = vmax.f32 %v3419, 0.0
    %v3970 = vmax.f32 %v3421, 0.0
    %v3971 = vmax.f32 %v3492, 0.0
    %v3972 = vmax.f32 %v3494, 0.0
    %v3973 = vmax.f32 %v3565, 0.0
    %v3974 = vmax.f32 %v3567, 0.0
    %v3975 = vmax.f32 %v3638, 0.0
    %v3976 = vmax.f32 %v3640, 0.0
    %v3977 = vmax.f32 %v3711, 0.0
    %v3978 = vmax.f32 %v3713, 0.0
    %v3979 = vmax.f32 %v3784, 0.0
    %v3980 = vmax.f32 %v3786, 0.0
    %v3981 = vmax.f32 %v3853, 0.0
    %v3982 = vmax.f32 %v3058, 0.0
    %v3983 = vmax.f32 %v3060, 0.0
    %v3984 = vmax.f32 %v3131, 0.0
    %v3985 = vmax.f32 %v3133, 0.0
    %v3986 = vmax.f32 %v3204, 0.0
    %v3987 = vmax.f32 %v3206, 0.0
    %v3988 = vmax.f32 %v3277, 0.0
    %v3989 = vmax.f32 %v3279, 0.0
    %v3990 = vmax.f32 %v3350, 0.0
    %v3991 = vmax.f32 %v3352, 0.0
    %v3992 = vmax.f32 %v3423, 0.0
    %v3993 = vmax.f32 %v3425, 0.0
    %v3994 = vmax.f32 %v3496, 0.0
    %v3995 = vmax.f32 %v3498, 0.0
    %v3996 = vmax.f32 %v3569, 0.0
    %v3997 = vmax.f32 %v3571, 0.0
    %v3998 = vmax.f32 %v3642, 0.0
    %v3999 = vmax.f32 %v3644, 0.0
    %v4000 = vmax.f32 %v3715, 0.0
    %v4001 = vmax.f32 %v3717, 0.0
    %v4002 = vmax.f32 %v3788, 0.0
    %v4003 = vmax.f32 %v3790, 0.0
    %v4004 = vmax.f32 %v3856, 0.0
    %v4005 = vmax.f32 %v3064, 0.0
    %v4006 = vmax.f32 %v3066, 0.0
    %v4007 = vmax.f32 %v3137, 0.0
    %v4008 = vmax.f32 %v3139, 0.0
    %v4009 = vmax.f32 %v3210, 0.0
    %v4010 = vmax.f32 %v3212, 0.0
    %v4011 = vmax.f32 %v3283, 0.0
    %v4012 = vmax.f32 %v3285, 0.0
    %v4013 = vmax.f32 %v3356, 0.0
    %v4014 = vmax.f32 %v3358, 0.0
    %v4015 = vmax.f32 %v3429, 0.0
    %v4016 = vmax.f32 %v3431, 0.0
    %v4017 = vmax.f32 %v3502, 0.0
    %v4018 = vmax.f32 %v3504, 0.0
    %v4019 = vmax.f32 %v3575, 0.0
    %v4020 = vmax.f32 %v3577, 0.0
    %v4021 = vmax.f32 %v3648, 0.0
    %v4022 = vmax.f32 %v3650, 0.0
    %v4023 = vmax.f32 %v3721, 0.0
    %v4024 = vmax.f32 %v3723, 0.0
    %v4025 = vmax.f32 %v3794, 0.0
    %v4026 = vmax.f32 %v3796, 0.0
    %v4027 = vmax.f32 %v3861, 0.0
    %v4028 = vmax.f32 %v3068, 0.0
    %v4029 = vmax.f32 %v3070, 0.0
    %v4030 = vmax.f32 %v3141, 0.0
    %v4031 = vmax.f32 %v3143, 0.0
    %v4032 = vmax.f32 %v3214, 0.0
    %v4033 = vmax.f32 %v3216, 0.0
    %v4034 = vmax.f32 %v3287, 0.0
    %v4035 = vmax.f32 %v3289, 0.0
    %v4036 = vmax.f32 %v3360, 0.0
    %v4037 = vmax.f32 %v3362, 0.0
    %v4038 = vmax.f32 %v3433, 0.0
    %v4039 = vmax.f32 %v3435, 0.0
    %v4040 = vmax.f32 %v3506, 0.0
    %v4041 = vmax.f32 %v3508, 0.0
    %v4042 = vmax.f32 %v3579, 0.0
    %v4043 = vmax.f32 %v3581, 0.0
    %v4044 = vmax.f32 %v3652, 0.0
    %v4045 = vmax.f32 %v3654, 0.0
    %v4046 = vmax.f32 %v3725, 0.0
    %v4047 = vmax.f32 %v3727, 0.0
    %v4048 = vmax.f32 %v3798, 0.0
    %v4049 = vmax.f32 %v3800, 0.0
    %v4050 = vmax.f32 %v3864, 0.0
    %4051 = vst [vmem:[%s5] sm:$0xff] %v3867
    %4052 = vst [vmem:[%s5 + $0x8] sm:$0xff] %v3868
    %4053 = vst [vmem:[%s5 + $0x10] sm:$0xff] %v3869
    %4054 = vst [vmem:[%s5 + $0x18] sm:$0xff] %v3870
    %4055 = vst [vmem:[%s5 + $0x20] sm:$0xff] %v3871
    %4056 = vst [vmem:[%s5 + $0x28] sm:$0xff] %v3872
    %4057 = vst [vmem:[%s5 + $0x30] sm:$0xff] %v3873
    %4058 = vst [vmem:[%s5 + $0x38] sm:$0xff] %v3874
    %4059 = vst [vmem:[%s5 + $0x40] sm:$0xff] %v3875
    %4060 = vst [vmem:[%s5 + $0x48] sm:$0xff] %v3876
    %4061 = vst [vmem:[%s5 + $0x50] sm:$0xff] %v3877
    %4062 = vst [vmem:[%s5 + $0x58] sm:$0xff] %v3878
    %4063 = vst [vmem:[%s5 + $0x60] sm:$0xff] %v3879
    %4064 = vst [vmem:[%s5 + $0x68] sm:$0xff] %v3880
    %4065 = vst [vmem:[%s5 + $0x70] sm:$0xff] %v3881
    %4066 = vst [vmem:[%s5 + $0x78] sm:$0xff] %v3882
    %4067 = vst [vmem:[%s5 + $0x80] sm:$0xff] %v3883
    %4068 = vst [vmem:[%s5 + $0x88] sm:$0xff] %v3884
    %4069 = vst [vmem:[%s5 + $0x90] sm:$0xff] %v3885
    %4070 = vst [vmem:[%s5 + $0x98] sm:$0xff] %v3886
    %4071 = vst [vmem:[%s5 + $0xa0] sm:$0xff] %v3887
    %4072 = vst [vmem:[%s5 + $0xa8] sm:$0xff] %v3888
    %4073 = vst.msk [vmem:[%s5 + $0xb0] sm:$0xff] %vm50, %v3889
    %4074 = vst [vmem:[%s5 + $0xb8] sm:$0xff] %v3890
    %4075 = vst [vmem:[%s5 + $0xc0] sm:$0xff] %v3891
    %4076 = vst [vmem:[%s5 + $0xc8] sm:$0xff] %v3892
    %4077 = vst [vmem:[%s5 + $0xd0] sm:$0xff] %v3893
    %4078 = vst [vmem:[%s5 + $0xd8] sm:$0xff] %v3894
    %4079 = vst [vmem:[%s5 + $0xe0] sm:$0xff] %v3895
    %4080 = vst [vmem:[%s5 + $0xe8] sm:$0xff] %v3896
    %4081 = vst [vmem:[%s5 + $0xf0] sm:$0xff] %v3897
    %4082 = vst [vmem:[%s5 + $0xf8] sm:$0xff] %v3898
    %4083 = vst [vmem:[%s5 + $0x100] sm:$0xff] %v3899
    %4084 = vst [vmem:[%s5 + $0x108] sm:$0xff] %v3900
    %4085 = vst [vmem:[%s5 + $0x110] sm:$0xff] %v3901
    %4086 = vst [vmem:[%s5 + $0x118] sm:$0xff] %v3902
    %4087 = vst [vmem:[%s5 + $0x120] sm:$0xff] %v3903
    %4088 = vst [vmem:[%s5 + $0x128] sm:$0xff] %v3904
    %4089 = vst [vmem:[%s5 + $0x130] sm:$0xff] %v3905
    %4090 = vst [vmem:[%s5 + $0x138] sm:$0xff] %v3906
    %4091 = vst [vmem:[%s5 + $0x140] sm:$0xff] %v3907
    %4092 = vst [vmem:[%s5 + $0x148] sm:$0xff] %v3908
    %4093 = vst [vmem:[%s5 + $0x150] sm:$0xff] %v3909
    %4094 = vst [vmem:[%s5 + $0x158] sm:$0xff] %v3910
    %4095 = vst [vmem:[%s5 + $0x160] sm:$0xff] %v3911
    %4096 = vst.msk [vmem:[%s5 + $0x168] sm:$0xff] %vm50, %v3912
    %4097 = vst [vmem:[%s5 + $0x170] sm:$0xff] %v3913
    %4098 = vst [vmem:[%s5 + $0x178] sm:$0xff] %v3914
    %4099 = vst [vmem:[%s5 + $0x180] sm:$0xff] %v3915
    %4100 = vst [vmem:[%s5 + $0x188] sm:$0xff] %v3916
    %4101 = vst [vmem:[%s5 + $0x190] sm:$0xff] %v3917
    %4102 = vst [vmem:[%s5 + $0x198] sm:$0xff] %v3918
    %4103 = vst [vmem:[%s5 + $0x1a0] sm:$0xff] %v3919
    %4104 = vst [vmem:[%s5 + $0x1a8] sm:$0xff] %v3920
    %4105 = vst [vmem:[%s5 + $0x1b0] sm:$0xff] %v3921
    %4106 = vst [vmem:[%s5 + $0x1b8] sm:$0xff] %v3922
    %4107 = vst [vmem:[%s5 + $0x1c0] sm:$0xff] %v3923
    %4108 = vst [vmem:[%s5 + $0x1c8] sm:$0xff] %v3924
    %4109 = vst [vmem:[%s5 + $0x1d0] sm:$0xff] %v3925
    %4110 = vst [vmem:[%s5 + $0x1d8] sm:$0xff] %v3926
    %4111 = vst [vmem:[%s5 + $0x1e0] sm:$0xff] %v3927
    %4112 = vst [vmem:[%s5 + $0x1e8] sm:$0xff] %v3928
    %4113 = vst [vmem:[%s5 + $0x1f0] sm:$0xff] %v3929
    %4114 = vst [vmem:[%s5 + $0x1f8] sm:$0xff] %v3930
    %4115 = vst [vmem:[%s5 + $0x200] sm:$0xff] %v3931
    %4116 = vst [vmem:[%s5 + $0x208] sm:$0xff] %v3932
    %4117 = vst [vmem:[%s5 + $0x210] sm:$0xff] %v3933
    %4118 = vst [vmem:[%s5 + $0x218] sm:$0xff] %v3934
    %4119 = vst.msk [vmem:[%s5 + $0x220] sm:$0xff] %vm50, %v3935
    %4120 = vst [vmem:[%s5 + $0x228] sm:$0xff] %v3936
    %4121 = vst [vmem:[%s5 + $0x230] sm:$0xff] %v3937
    %4122 = vst [vmem:[%s5 + $0x238] sm:$0xff] %v3938
    %4123 = vst [vmem:[%s5 + $0x240] sm:$0xff] %v3939
    %4124 = vst [vmem:[%s5 + $0x248] sm:$0xff] %v3940
    %4125 = vst [vmem:[%s5 + $0x250] sm:$0xff] %v3941
    %4126 = vst [vmem:[%s5 + $0x258] sm:$0xff] %v3942
    %4127 = vst [vmem:[%s5 + $0x260] sm:$0xff] %v3943
    %4128 = vst [vmem:[%s5 + $0x268] sm:$0xff] %v3944
    %4129 = vst [vmem:[%s5 + $0x270] sm:$0xff] %v3945
    %4130 = vst [vmem:[%s5 + $0x278] sm:$0xff] %v3946
    %4131 = vst [vmem:[%s5 + $0x280] sm:$0xff] %v3947
    %4132 = vst [vmem:[%s5 + $0x288] sm:$0xff] %v3948
    %4133 = vst [vmem:[%s5 + $0x290] sm:$0xff] %v3949
    %4134 = vst [vmem:[%s5 + $0x298] sm:$0xff] %v3950
    %4135 = vst [vmem:[%s5 + $0x2a0] sm:$0xff] %v3951
    %4136 = vst [vmem:[%s5 + $0x2a8] sm:$0xff] %v3952
    %4137 = vst [vmem:[%s5 + $0x2b0] sm:$0xff] %v3953
    %4138 = vst [vmem:[%s5 + $0x2b8] sm:$0xff] %v3954
    %4139 = vst [vmem:[%s5 + $0x2c0] sm:$0xff] %v3955
    %4140 = vst [vmem:[%s5 + $0x2c8] sm:$0xff] %v3956
    %4141 = vst [vmem:[%s5 + $0x2d0] sm:$0xff] %v3957
    %4142 = vst.msk [vmem:[%s5 + $0x2d8] sm:$0xff] %vm50, %v3958
    %4143 = vst [vmem:[%s5 + $0x2e0] sm:$0xff] %v3959
    %4144 = vst [vmem:[%s5 + $0x2e8] sm:$0xff] %v3960
    %4145 = vst [vmem:[%s5 + $0x2f0] sm:$0xff] %v3961
    %4146 = vst [vmem:[%s5 + $0x2f8] sm:$0xff] %v3962
    %4147 = vst [vmem:[%s5 + $0x300] sm:$0xff] %v3963
    %4148 = vst [vmem:[%s5 + $0x308] sm:$0xff] %v3964
    %4149 = vst [vmem:[%s5 + $0x310] sm:$0xff] %v3965
    %4150 = vst [vmem:[%s5 + $0x318] sm:$0xff] %v3966
    %4151 = vst [vmem:[%s5 + $0x320] sm:$0xff] %v3967
    %4152 = vst [vmem:[%s5 + $0x328] sm:$0xff] %v3968
    %4153 = vst [vmem:[%s5 + $0x330] sm:$0xff] %v3969
    %4154 = vst [vmem:[%s5 + $0x338] sm:$0xff] %v3970
    %4155 = vst [vmem:[%s5 + $0x340] sm:$0xff] %v3971
    %4156 = vst [vmem:[%s5 + $0x348] sm:$0xff] %v3972
    %4157 = vst [vmem:[%s5 + $0x350] sm:$0xff] %v3973
    %4158 = vst [vmem:[%s5 + $0x358] sm:$0xff] %v3974
    %4159 = vst [vmem:[%s5 + $0x360] sm:$0xff] %v3975
    %4160 = vst [vmem:[%s5 + $0x368] sm:$0xff] %v3976
    %4161 = vst [vmem:[%s5 + $0x370] sm:$0xff] %v3977
    %4162 = vst [vmem:[%s5 + $0x378] sm:$0xff] %v3978
    %4163 = vst [vmem:[%s5 + $0x380] sm:$0xff] %v3979
    %4164 = vst [vmem:[%s5 + $0x388] sm:$0xff] %v3980
    %4165 = vst.msk [vmem:[%s5 + $0x390] sm:$0xff] %vm50, %v3981
    %4166 = vst [vmem:[%s5 + $0x398] sm:$0xff] %v3982
    %4167 = vst [vmem:[%s5 + $0x3a0] sm:$0xff] %v3983
    %4168 = vst [vmem:[%s5 + $0x3a8] sm:$0xff] %v3984
    %4169 = vst [vmem:[%s5 + $0x3b0] sm:$0xff] %v3985
    %4170 = vst [vmem:[%s5 + $0x3b8] sm:$0xff] %v3986
    %4171 = vst [vmem:[%s5 + $0x3c0] sm:$0xff] %v3987
    %4172 = vst [vmem:[%s5 + $0x3c8] sm:$0xff] %v3988
    %4173 = vst [vmem:[%s5 + $0x3d0] sm:$0xff] %v3989
    %4174 = vst [vmem:[%s5 + $0x3d8] sm:$0xff] %v3990
    %4175 = vst [vmem:[%s5 + $0x3e0] sm:$0xff] %v3991
    %4176 = vst [vmem:[%s5 + $0x3e8] sm:$0xff] %v3992
    %4177 = vst [vmem:[%s5 + $0x3f0] sm:$0xff] %v3993
    %4178 = vst [vmem:[%s5 + $0x3f8] sm:$0xff] %v3994
    %4179 = vst [vmem:[%s5 + $0x400] sm:$0xff] %v3995
    %4180 = vst [vmem:[%s5 + $0x408] sm:$0xff] %v3996
    %4181 = vst [vmem:[%s5 + $0x410] sm:$0xff] %v3997
    %4182 = vst [vmem:[%s5 + $0x418] sm:$0xff] %v3998
    %4183 = vst [vmem:[%s5 + $0x420] sm:$0xff] %v3999
    %4184 = vst [vmem:[%s5 + $0x428] sm:$0xff] %v4000
    %4185 = vst [vmem:[%s5 + $0x430] sm:$0xff] %v4001
    %4186 = vst [vmem:[%s5 + $0x438] sm:$0xff] %v4002
    %4187 = vst [vmem:[%s5 + $0x440] sm:$0xff] %v4003
    %4188 = vst.msk [vmem:[%s5 + $0x448] sm:$0xff] %vm50, %v4004
    %4189 = vst [vmem:[%s5 + $0x450] sm:$0xff] %v4005
    %4190 = vst [vmem:[%s5 + $0x458] sm:$0xff] %v4006
    %4191 = vst [vmem:[%s5 + $0x460] sm:$0xff] %v4007
    %4192 = vst [vmem:[%s5 + $0x468] sm:$0xff] %v4008
    %4193 = vst [vmem:[%s5 + $0x470] sm:$0xff] %v4009
    %4194 = vst [vmem:[%s5 + $0x478] sm:$0xff] %v4010
    %4195 = vst [vmem:[%s5 + $0x480] sm:$0xff] %v4011
    %4196 = vst [vmem:[%s5 + $0x488] sm:$0xff] %v4012
    %4197 = vst [vmem:[%s5 + $0x490] sm:$0xff] %v4013
    %4198 = vst [vmem:[%s5 + $0x498] sm:$0xff] %v4014
    %4199 = vst [vmem:[%s5 + $0x4a0] sm:$0xff] %v4015
    %4200 = vst [vmem:[%s5 + $0x4a8] sm:$0xff] %v4016
    %4201 = vst [vmem:[%s5 + $0x4b0] sm:$0xff] %v4017
    %4202 = vst [vmem:[%s5 + $0x4b8] sm:$0xff] %v4018
    %4203 = vst [vmem:[%s5 + $0x4c0] sm:$0xff] %v4019
    %4204 = vst [vmem:[%s5 + $0x4c8] sm:$0xff] %v4020
    %4205 = vst [vmem:[%s5 + $0x4d0] sm:$0xff] %v4021
    %4206 = vst [vmem:[%s5 + $0x4d8] sm:$0xff] %v4022
    %4207 = vst [vmem:[%s5 + $0x4e0] sm:$0xff] %v4023
    %4208 = vst [vmem:[%s5 + $0x4e8] sm:$0xff] %v4024
    %4209 = vst [vmem:[%s5 + $0x4f0] sm:$0xff] %v4025
    %4210 = vst [vmem:[%s5 + $0x4f8] sm:$0xff] %v4026
    %4211 = vst.msk [vmem:[%s5 + $0x500] sm:$0xff] %vm50, %v4027
    %4212 = vst [vmem:[%s5 + $0x508] sm:$0xff] %v4028
    %4213 = vst [vmem:[%s5 + $0x510] sm:$0xff] %v4029
    %4214 = vst [vmem:[%s5 + $0x518] sm:$0xff] %v4030
    %4215 = vst [vmem:[%s5 + $0x520] sm:$0xff] %v4031
    %4216 = vst [vmem:[%s5 + $0x528] sm:$0xff] %v4032
    %4217 = vst [vmem:[%s5 + $0x530] sm:$0xff] %v4033
    %4218 = vst [vmem:[%s5 + $0x538] sm:$0xff] %v4034
    %4219 = vst [vmem:[%s5 + $0x540] sm:$0xff] %v4035
    %4220 = vst [vmem:[%s5 + $0x548] sm:$0xff] %v4036
    %4221 = vst [vmem:[%s5 + $0x550] sm:$0xff] %v4037
    %4222 = vst [vmem:[%s5 + $0x558] sm:$0xff] %v4038
    %4223 = vst [vmem:[%s5 + $0x560] sm:$0xff] %v4039
    %4224 = vst [vmem:[%s5 + $0x568] sm:$0xff] %v4040
    %4225 = vst [vmem:[%s5 + $0x570] sm:$0xff] %v4041
    %4226 = vst [vmem:[%s5 + $0x578] sm:$0xff] %v4042
    %4227 = vst [vmem:[%s5 + $0x580] sm:$0xff] %v4043
    %4228 = vst [vmem:[%s5 + $0x588] sm:$0xff] %v4044
    %4229 = vst [vmem:[%s5 + $0x590] sm:$0xff] %v4045
    %4230 = vst [vmem:[%s5 + $0x598] sm:$0xff] %v4046
    %4231 = vst [vmem:[%s5 + $0x5a0] sm:$0xff] %v4047
    %4232 = vst [vmem:[%s5 + $0x5a8] sm:$0xff] %v4048
    %4233 = vst [vmem:[%s5 + $0x5b0] sm:$0xff] %v4049
    %4234 = vst.msk [vmem:[%s5 + $0x5b8] sm:$0xff] %vm50, %v4050
    // Predicated region
    $region30: #{conv2d_relu.1} parent=1 // pred_check
      _
    $region31: #{conv2d_relu.1} parent=1 // pred_check_branch
      %4236 = sbr.rel (0) target = $region33
    $region32: #{conv2d_relu.1} parent=1 // pred_region
      _
    $region33: #{conv2d_relu.1} parent=1 // pred_fallthru
      _
    // Predicated region
    $region34: #{conv2d_relu.1} parent=1 // pred_check
      _
    $region35: #{conv2d_relu.1} parent=1 // pred_check_branch
      %4238 = sbr.rel (0) target = $region37
    $region36: #{conv2d_relu.1} parent=1 // pred_region
      _
    $region37: #{conv2d_relu.1} parent=1 // pred_fallthru
      _
    %4239 = vsyncpa [#allocation5], 1
    %4240 = vsyncpa [#allocation7], 1

</llo_original>
